<compile_context>
chip_gen: v5e
topology: v5e:2x2
jax: 0.10.0
libtpu: 0.0.40
codegen_flags: <defaults>
</compile_context>

<pallas_src>
import functools
import math

import jax
import jax.numpy as jnp
from jax import lax
from jax.experimental import pallas as pl
from jax.experimental.pallas import tpu as pltpu


def _round_up(x, m):
    return ((x + m - 1) // m) * m


def _pad_gate_axis(w, h, hp):
    """Pad the trailing 4*h gate axis to 4*hp, per gate, keeping i,f,g,o aligned."""
    if hp == h:
        return w
    lead = w.shape[:-1]
    w4 = w.reshape(lead + (4, h))
    pad = [(0, 0)] * (len(lead) + 1) + [(0, hp - h)]
    return jnp.pad(w4, pad).reshape(lead + (4 * hp,))


def _vmem_limit_bytes():
    """Physical per-core VMEM minus 16 MiB headroom (v5e/v6e: 128->112 MiB,
    v7x: 64->48 MiB).  Falls back to a safe 48 MiB if the query fails."""
    try:
        cap = int(pltpu.get_tpu_info().vmem_capacity_bytes)
    except Exception:
        cap = 64 * 1024 * 1024
    return max(cap - 16 * 1024 * 1024, 32 * 1024 * 1024)


# ----------------------------------------------------------------------------
# Kernel 1: LSTM stack over a chunk of TT timesteps.
# grid = (batch_blocks [parallel], time_chunks [arbitrary]).  hn/cn output
# blocks have a constant index along the time axis, so they stay VMEM-resident
# and carry the recurrent state between chunks.
# ----------------------------------------------------------------------------
def _lstm_chunk_kernel(
    lens_ref,       # (Bb, 1)              int32, resident
    emb_ref,        # (TT, Bb, Ep)         bf16, chunk of embeddings
    h0_ref,         # (L, Bb, Hp)          f32
    c0_ref,         # (L, Bb, Hp)          f32
    wih0_ref,       # (Ep, 4Hp)            bf16  layer-0 input weights (W_ih0^T)
    wihh_ref,       # (max(L-1,1), Hp,4Hp) bf16  input weights of layers >= 1
    whh_ref,        # (L, Hp, 4Hp)         bf16  recurrent weights (W_hh^T)
    b_ref,          # (L, 1, 4Hp)          f32   b_ih + b_hh
    out_ref,        # out: (TT, Bb, Hp)    bf16  masked top-layer hidden states
    hn_ref,         # out: (L, Bb, Hp)     f32   state carry / final hidden
    cn_ref,         # out: (L, Bb, Hp)     f32   state carry / final cell
    xproj_ref,      # scratch: (TT*Bb, 4Hp) f32  hoisted layer-0 projection
    *, unroll,
):
    c = pl.program_id(1)
    L, Bb, Hp = hn_ref.shape
    TT, _, Ep = emb_ref.shape

    @pl.when(c == 0)
    def _():
        hn_ref[...] = h0_ref[...]
        cn_ref[...] = c0_ref[...]

    # Hoisted layer-0 input projection: one (TT*Bb, Ep) @ (Ep, 4Hp) MXU matmul
    # per chunk (well-shaped M), bias folded in.  Only the (Bb,Hp)@(Hp,4Hp)
    # recurrent matmul remains per step for layer 0.
    xe = emb_ref[...].reshape(TT * Bb, Ep)
    xproj_ref[...] = (
        jnp.dot(xe, wih0_ref[...], preferred_element_type=jnp.float32) + b_ref[0]
    )

    lens = lens_ref[...]                                     # (Bb, 1) int32
    # Hoist the (1,4Hp)->(Bb,4Hp) bias broadcasts out of the recurrence
    # (JAX does not CSE broadcast_in_dim).
    b_hi = [jnp.broadcast_to(b_ref[l], (Bb, 4 * Hp)) for l in range(1, L)]

    def one_step(j, hs, cs):
        t = c * TT + j
        # One (Bb,Hp) mask broadcast per step, reused by all selects + store.
        m = jnp.broadcast_to(t < lens, (Bb, Hp))
        hs_new, cs_new = [], []
        x = None                                             # bf16 input of layer l
        for l in range(L):                                   # static unroll (layers)
            h_prev, c_prev = hs[l], cs[l]
            hb = h_prev.astype(jnp.bfloat16)
            if l == 0:
                row = pl.multiple_of(j * Bb, Bb)
                gates = xproj_ref[pl.ds(row, Bb), :] + jnp.dot(
                    hb, whh_ref[0], preferred_element_type=jnp.float32)
            else:
                # no concat: two dots accumulated in f32
                gates = (
                    jnp.dot(x, wihh_ref[l - 1], preferred_element_type=jnp.float32)
                    + jnp.dot(hb, whh_ref[l], preferred_element_type=jnp.float32)
                    + b_hi[l - 1])
            i_g = jax.nn.sigmoid(gates[:, 0 * Hp:1 * Hp])    # lane-aligned slices
            f_g = jax.nn.sigmoid(gates[:, 1 * Hp:2 * Hp])
            g_g = jnp.tanh(gates[:, 2 * Hp:3 * Hp])
            o_g = jax.nn.sigmoid(gates[:, 3 * Hp:4 * Hp])
            c_new = f_g * c_prev + i_g * g_g
            h_new = o_g * jnp.tanh(c_new)
            h_l = jnp.where(m, h_new, h_prev)                # freeze past seq end
            c_l = jnp.where(m, c_new, c_prev)
            hs_new.append(h_l)
            cs_new.append(c_l)
            x = h_l.astype(jnp.bfloat16)                     # input to next layer
        # pad_packed_sequence pads outputs with zeros
        out_ref[j] = jnp.where(m, hs_new[-1], 0.0).astype(out_ref.dtype)
        return tuple(hs_new), tuple(cs_new)

    def outer_body(jo, carry):                               # two-level loop:
        hs, cs = carry                                       #   rolled outer,
        for ji in range(unroll):                             #   unrolled inner.
            hs, cs = one_step(jo * unroll + ji, hs, cs)
        return hs, cs

    hs0 = tuple(hn_ref[l] for l in range(L))
    cs0 = tuple(cn_ref[l] for l in range(L))
    hs, cs = lax.fori_loop(0, TT // unroll, outer_body, (hs0, cs0), unroll=False)
    for l in range(L):
        hn_ref[l] = hs[l]
        cn_ref[l] = cs[l]


# ----------------------------------------------------------------------------
# Kernel 2: decoder projection — one batched (M, H) @ (H, V) matmul, tiled.
# ----------------------------------------------------------------------------
def _decoder_kernel(x_ref, w_ref, b_ref, dec_ref):
    dec_ref[...] = (
        jnp.dot(x_ref[...], w_ref[...], preferred_element_type=jnp.float32)
        + b_ref[...]
    ).astype(dec_ref.dtype)


# ----------------------------------------------------------------------------
# One-time weight preparation: PyTorch layout -> padded, bf16 kernel layout.
# ----------------------------------------------------------------------------
def prepare_kernel_params(params):
    emb_w = params["emb_weight"]          # (V, E)
    w_ih0 = params["w_ih0"]               # (4H, E)
    w_hh = params["w_hh"]                 # (L, 4H, H)
    b_ih, b_hh = params["b_ih"], params["b_hh"]          # (L, 4H)
    w_dec, b_dec = params["w_dec"], params["b_dec"]      # (V, H), (V,)

    V, E = emb_w.shape
    L, _, H = w_hh.shape
    Ep, Hp = _round_up(E, 128), _round_up(H, 128)
    tn = min(1024, _round_up(V, 128))
    Vp = _round_up(V, tn)

    emb_p = jnp.pad(emb_w, ((0, 0), (0, Ep - E))).astype(jnp.float32)

    wih0_t = _pad_gate_axis(w_ih0.T, H, Hp)                       # (E, 4Hp)
    wih0_t = jnp.pad(wih0_t, ((0, Ep - E), (0, 0)))               # (Ep, 4Hp)

    if L > 1:
        w_hi = jnp.transpose(params["w_ih_hi"], (0, 2, 1))        # (L-1, H, 4H)
        w_hi = _pad_gate_axis(w_hi, H, Hp)
        w_hi = jnp.pad(w_hi, ((0, 0), (0, Hp - H), (0, 0)))       # (L-1, Hp, 4Hp)
    else:
        w_hi = jnp.zeros((1, Hp, 4 * Hp), jnp.float32)            # unused placeholder

    whh_t = _pad_gate_axis(jnp.transpose(w_hh, (0, 2, 1)), H, Hp)
    whh_t = jnp.pad(whh_t, ((0, 0), (0, Hp - H), (0, 0)))         # (L, Hp, 4Hp)

    b_lstm = _pad_gate_axis(b_ih + b_hh, H, Hp)[:, None, :]       # (L, 1, 4Hp)

    wdec_t = jnp.pad(w_dec.T, ((0, Hp - H), (0, Vp - V)))         # (Hp, Vp)
    bdec = jnp.pad(b_dec, (0, Vp - V))[None, :]                   # (1, Vp)

    return {
        "emb_weight": emb_p,
        "w_ih0_t": wih0_t.astype(jnp.bfloat16),
        "w_ih_hi_t": w_hi.astype(jnp.bfloat16),
        "w_hh_t": whh_t.astype(jnp.bfloat16),
        "b_lstm": b_lstm.astype(jnp.float32),
        "w_dec_t": wdec_t.astype(jnp.bfloat16),
        "b_dec": bdec.astype(jnp.float32),
        "dims": dict(V=V, E=E, H=H, L=L, Ep=Ep, Hp=Hp, Vp=Vp, tn=tn),
    }


# ----------------------------------------------------------------------------
# Wrapper: embedding gather (glue) + padding + the two pallas_calls
# ----------------------------------------------------------------------------
def rnn_padded_forward(x_tokens, x_lengths, h0, c0, kp, *, chunk_t=32, unroll=4):
    d = kp["dims"]
    V, H, L = d["V"], d["H"], d["L"]
    Ep, Hp, Vp, tn = d["Ep"], d["Hp"], d["Vp"], d["tn"]
    T, B = x_tokens.shape

    # ---- batch padding: multiple of 8; split into two blocks when possible so
    #      the leading "parallel" grid axis can use both TensorCores on v7x.
    B_pad = _round_up(B, 8)
    nb = 2 if (B_pad % 16 == 0) else 1
    Bb = B_pad // nb

    # ---- time chunking: TT steps per grid iteration (amortizes grid overhead,
    #      larger DMAs); TT is a multiple of the inner unroll factor.
    u = max(1, int(unroll))
    TT = max(u, min(chunk_t, _round_up(T, u)))
    TT = (TT // u) * u
    T_pad = _round_up(T, TT)
    n_chunks = T_pad // TT

    tok_p = jnp.zeros((T_pad, B_pad), jnp.int32).at[:T, :B].set(x_tokens)
    len_p = jnp.zeros((B_pad,), jnp.int32).at[:B].set(x_lengths)
    h0_p = jnp.zeros((L, B_pad, Hp), jnp.float32).at[:, :B, :H].set(h0)
    c0_p = jnp.zeros((L, B_pad, Hp), jnp.float32).at[:, :B, :H].set(c0)

    # encoder (Embedding) + dropout(eval)=identity : glue; bf16 activations
    emb = kp["emb_weight"][tok_p].astype(jnp.bfloat16)       # (T_pad, B_pad, Ep)
    lens = len_p[:, None]                                    # (B_pad, 1) int32

    vlim = _vmem_limit_bytes()
    Lm1 = max(L - 1, 1)

    out_h, h_n, c_n = pl.pallas_call(
        functools.partial(_lstm_chunk_kernel, unroll=u),
        grid=(nb, n_chunks),
        in_specs=[
            pl.BlockSpec((Bb, 1), lambda p, c: (p, 0)),            # lengths (resident)
            pl.BlockSpec((TT, Bb, Ep), lambda p, c: (c, p, 0)),    # emb chunk
            pl.BlockSpec((L, Bb, Hp), lambda p, c: (0, p, 0)),     # h0
            pl.BlockSpec((L, Bb, Hp), lambda p, c: (0, p, 0)),     # c0
            pl.BlockSpec((Ep, 4 * Hp), lambda p, c: (0, 0)),       # W_ih layer 0
            pl.BlockSpec((Lm1, Hp, 4 * Hp), lambda p, c: (0, 0, 0)),  # W_ih layers>=1
            pl.BlockSpec((L, Hp, 4 * Hp), lambda p, c: (0, 0, 0)),    # W_hh
            pl.BlockSpec((L, 1, 4 * Hp), lambda p, c: (0, 0, 0)),     # bias
        ],
        out_specs=[
            pl.BlockSpec((TT, Bb, Hp), lambda p, c: (c, p, 0)),    # masked top-layer h
            pl.BlockSpec((L, Bb, Hp), lambda p, c: (0, p, 0)),     # h_n (state carry)
            pl.BlockSpec((L, Bb, Hp), lambda p, c: (0, p, 0)),     # c_n (state carry)
        ],
        out_shape=[
            jax.ShapeDtypeStruct((T_pad, B_pad, Hp), jnp.bfloat16),
            jax.ShapeDtypeStruct((L, B_pad, Hp), jnp.float32),
            jax.ShapeDtypeStruct((L, B_pad, Hp), jnp.float32),
        ],
        scratch_shapes=[pltpu.VMEM((TT * Bb, 4 * Hp), jnp.float32)],
        # h0 -> h_n, c0 -> c_n: reuse the state HBM buffers (kernel still
        # initializes the resident output blocks from h0/c0 at chunk 0).
        input_output_aliases={2: 1, 3: 2},
        compiler_params=pltpu.CompilerParams(
            dimension_semantics=("parallel", "arbitrary"),
            vmem_limit_bytes=vlim,
        ),
    )(lens, emb, h0_p, c0_p, kp["w_ih0_t"], kp["w_ih_hi_t"], kp["w_hh_t"],
      kp["b_lstm"])

    # ---- decoder: one big (M, Hp) @ (Hp, Vp) matmul, 128-aligned tiles ------
    M = T_pad * B_pad
    tm = min(512, _round_up(M, 128))
    Mp = _round_up(M, tm)
    out_flat = out_h.reshape(M, Hp)
    if Mp != M:
        out_flat = jnp.pad(out_flat, ((0, Mp - M), (0, 0)))

    cost = pl.CostEstimate(
        flops=2 * Mp * Hp * Vp,
        transcendentals=0,
        bytes_accessed=Mp * Hp * 2 + (Mp // tm) * Hp * Vp * 2 + Mp * Vp * 4,
    )
    dec_flat = pl.pallas_call(
        _decoder_kernel,
        grid=(Mp // tm, Vp // tn),
        in_specs=[
            pl.BlockSpec((tm, Hp), lambda i, j: (i, 0)),
            pl.BlockSpec((Hp, tn), lambda i, j: (0, j)),
            pl.BlockSpec((1, tn), lambda i, j: (0, j)),
        ],
        out_specs=pl.BlockSpec((tm, tn), lambda i, j: (i, j)),
        out_shape=jax.ShapeDtypeStruct((Mp, Vp), jnp.float32),
        cost_estimate=cost,
        compiler_params=pltpu.CompilerParams(
            dimension_semantics=("parallel", "parallel"),
            vmem_limit_bytes=vlim,
        ),
    )(out_flat, kp["w_dec_t"], kp["b_dec"])

    dec = dec_flat[:M].reshape(T_pad, B_pad, Vp)[:T, :B, :V]
    return dec, (h_n[:, :B, :H], c_n[:, :B, :H])


# ----------------------------------------------------------------------------
# Pure-JAX reference (mirrors PyTorch packed-sequence LSTM + Linear, eval mode)
# ----------------------------------------------------------------------------
def _reference(x_tokens, x_lengths, h0, c0, params):
    L, _, H = h0.shape
    emb = params["emb_weight"][x_tokens]                     # (T, B, E) f32
    T, B, _ = emb.shape
    h = [h0[l] for l in range(L)]
    c = [c0[l] for l in range(L)]
    outs = []
    for t in range(T):
        m = (t < x_lengths)[:, None]
        x = emb[t]
        for l in range(L):
            w_ih = params["w_ih0"] if l == 0 else params["w_ih_hi"][l - 1]
            gates = (x @ w_ih.T + h[l] @ params["w_hh"][l].T
                     + params["b_ih"][l] + params["b_hh"][l])
            i_g = jax.nn.sigmoid(gates[:, 0 * H:1 * H])
            f_g = jax.nn.sigmoid(gates[:, 1 * H:2 * H])
            g_g = jnp.tanh(gates[:, 2 * H:3 * H])
            o_g = jax.nn.sigmoid(gates[:, 3 * H:4 * H])
            c_new = f_g * c[l] + i_g * g_g
            h_new = o_g * jnp.tanh(c_new)
            h[l] = jnp.where(m, h_new, h[l])
            c[l] = jnp.where(m, c_new, c[l])
            x = h[l]
        outs.append(jnp.where(m, h[L - 1], 0.0))
    out = jnp.stack(outs)
    dec = out @ params["w_dec"].T + params["b_dec"][None, None, :]
    return dec, (jnp.stack(h), jnp.stack(c))


# ----------------------------------------------------------------------------
# Deterministic parameter construction (matches module __init__ shapes/init)
# ----------------------------------------------------------------------------
def make_params(key, ntokens, emsize, nhid, nlayers):
    ks = jax.random.split(key, 7)
    initrange = 0.1
    stdv = 1.0 / math.sqrt(nhid)
    emb_weight = jax.random.uniform(ks[0], (ntokens, emsize),
                                    minval=-initrange, maxval=initrange)
    w_ih0 = jax.random.uniform(ks[1], (4 * nhid, emsize), minval=-stdv, maxval=stdv)
    w_ih_hi = jax.random.uniform(ks[2], (max(nlayers - 1, 1), 4 * nhid, nhid),
                                 minval=-stdv, maxval=stdv)
    w_hh = jax.random.uniform(ks[3], (nlayers, 4 * nhid, nhid),
                              minval=-stdv, maxval=stdv)
    b_ih = jax.random.uniform(ks[4], (nlayers, 4 * nhid), minval=-stdv, maxval=stdv)
    b_hh = jax.random.uniform(ks[5], (nlayers, 4 * nhid), minval=-stdv, maxval=stdv)
    w_dec = jax.random.uniform(ks[6], (ntokens, nhid),
                               minval=-initrange, maxval=initrange)
    return {
        "emb_weight": emb_weight.astype(jnp.float32),
        "w_ih0": w_ih0.astype(jnp.float32),          # layer-0 input weights (4H, E)
        "w_ih_hi": w_ih_hi.astype(jnp.float32),      # layers >= 1 input weights
        "w_hh": w_hh.astype(jnp.float32),
        "b_ih": b_ih.astype(jnp.float32),
        "b_hh": b_hh.astype(jnp.float32),
        "w_dec": w_dec.astype(jnp.float32),
        "b_dec": jnp.zeros((ntokens,), jnp.float32),  # decoder.bias.zero_()
    }


if __name__ == "__main__":
    # small config consistent with the module: model_type='LSTM'
    ntokens, emsize, nhid, nlayers = 64, 32, 32, 2
    T, B = 8, 4

    key = jax.random.PRNGKey(0)
    k_par, k_tok = jax.random.split(key)
    params = make_params(k_par, ntokens, emsize, nhid, nlayers)
    kparams = prepare_kernel_params(params)

    x = jax.random.randint(k_tok, (T, B), 0, ntokens, dtype=jnp.int32)
    x_lengths = jnp.array([8, 5, 3, 6], dtype=jnp.int32)   # max == T
    h0 = jnp.zeros((nlayers, B, nhid), jnp.float32)        # init_hidden
    c0 = jnp.zeros((nlayers, B, nhid), jnp.float32)

    dec, (h_n, c_n) = rnn_padded_forward(x, x_lengths, h0, c0, kparams,
                                         chunk_t=32, unroll=4)
    jax.block_until_ready((dec, h_n, c_n))

    dec_r, (h_r, c_r) = _reference(x, x_lengths, h0, c0, params)
    assert dec.shape == (T, B, ntokens)
    assert h_n.shape == (nlayers, B, nhid) and c_n.shape == (nlayers, B, nhid)
    assert jnp.allclose(dec, dec_r, atol=3e-2, rtol=3e-2)
    assert jnp.allclose(h_n, h_r, atol=3e-2, rtol=3e-2)
    assert jnp.allclose(c_n, c_r, atol=3e-2, rtol=3e-2)

    print("KERNEL_OK")
</pallas_src>

<mosaic_0001>
module attributes {stable_mosaic.version = 11 : i64} {
  func.func @_lstm_chunk_kernel(%arg0: i32, %arg1: i32, %arg2: memref<8x1xi32, #tpu.memory_space<vmem>>, %arg3: memref<8x8x128xbf16, #tpu.memory_space<vmem>>, %arg4: memref<2x8x128xf32, #tpu.memory_space<vmem>>, %arg5: memref<2x8x128xf32, #tpu.memory_space<vmem>>, %arg6: memref<128x512xbf16, #tpu.memory_space<vmem>>, %arg7: memref<1x128x512xbf16, #tpu.memory_space<vmem>>, %arg8: memref<2x128x512xbf16, #tpu.memory_space<vmem>>, %arg9: memref<2x1x512xf32, #tpu.memory_space<vmem>>, %arg10: memref<8x8x128xbf16, #tpu.memory_space<vmem>>, %arg11: memref<2x8x128xf32, #tpu.memory_space<vmem>>, %arg12: memref<2x8x128xf32, #tpu.memory_space<vmem>>, %arg13: memref<64x512xf32, #tpu.memory_space<vmem>>) attributes {dimension_semantics = [#tpu.dimension_semantics<parallel>, #tpu.dimension_semantics<arbitrary>], iteration_bounds = array<i64: 1, 1>, scalar_prefetch = 0 : i64, scratch_operands = 1 : i64, tpu.core_type = #tpu.core_type<tc>, window_params = [{transform_indices = @transform_0, window_bounds = array<i64: 8, 1>}, {transform_indices = @transform_1, window_bounds = array<i64: 8, 8, 128>}, {transform_indices = @transform_2, window_bounds = array<i64: 2, 8, 128>}, {transform_indices = @transform_3, window_bounds = array<i64: 2, 8, 128>}, {pipeline_mode = #tpu.pipeline_mode<synchronous>, transform_indices = @transform_4, window_bounds = array<i64: 128, 512>}, {pipeline_mode = #tpu.pipeline_mode<synchronous>, transform_indices = @transform_5, window_bounds = array<i64: 1, 128, 512>}, {pipeline_mode = #tpu.pipeline_mode<synchronous>, transform_indices = @transform_6, window_bounds = array<i64: 2, 128, 512>}, {pipeline_mode = #tpu.pipeline_mode<synchronous>, transform_indices = @transform_7, window_bounds = array<i64: 2, 1, 512>}, {transform_indices = @transform_8, window_bounds = array<i64: 8, 8, 128>}, {transform_indices = @transform_9, window_bounds = array<i64: 2, 8, 128>}, {transform_indices = @transform_10, window_bounds = array<i64: 2, 8, 128>}]} {
    %c0_i32 = arith.constant 0 : i32
    %0 = arith.cmpi eq, %arg1, %c0_i32 : i32
    %1 = arith.extui %0 : i1 to i32
    %c0_i32_0 = arith.constant 0 : i32
    %2 = arith.cmpi ne, %1, %c0_i32_0 : i32
    scf.if %2 {
      %c0_40 = arith.constant 0 : index
      %c0_41 = arith.constant 0 : index
      %c0_42 = arith.constant 0 : index
      %39 = vector.load %arg4[%c0_40, %c0_41, %c0_42] : memref<2x8x128xf32, #tpu.memory_space<vmem>>, vector<2x8x128xf32>
      %c0_43 = arith.constant 0 : index
      %c0_44 = arith.constant 0 : index
      %c0_45 = arith.constant 0 : index
      %40 = vector.load %arg11[%c0_43, %c0_44, %c0_45] : memref<2x8x128xf32, #tpu.memory_space<vmem>>, vector<2x8x128xf32>
      tpu.vector_store %arg11[%c0_43, %c0_44, %c0_45], %39 {strides = array<i32>} : memref<2x8x128xf32, #tpu.memory_space<vmem>>, vector<2x8x128xf32>,
      %c0_46 = arith.constant 0 : index
      %c0_47 = arith.constant 0 : index
      %c0_48 = arith.constant 0 : index
      %41 = vector.load %arg5[%c0_46, %c0_47, %c0_48] : memref<2x8x128xf32, #tpu.memory_space<vmem>>, vector<2x8x128xf32>
      %c0_49 = arith.constant 0 : index
      %c0_50 = arith.constant 0 : index
      %c0_51 = arith.constant 0 : index
      %42 = vector.load %arg12[%c0_49, %c0_50, %c0_51] : memref<2x8x128xf32, #tpu.memory_space<vmem>>, vector<2x8x128xf32>
      tpu.vector_store %arg12[%c0_49, %c0_50, %c0_51], %41 {strides = array<i32>} : memref<2x8x128xf32, #tpu.memory_space<vmem>>, vector<2x8x128xf32>,
    } else {
    }
    %c0 = arith.constant 0 : index
    %c0_1 = arith.constant 0 : index
    %c0_2 = arith.constant 0 : index
    %3 = vector.load %arg3[%c0, %c0_1, %c0_2] : memref<8x8x128xbf16, #tpu.memory_space<vmem>>, vector<8x8x128xbf16>
    %4 = vector.shape_cast %3 : vector<8x8x128xbf16> to vector<64x128xbf16>
    %c0_3 = arith.constant 0 : index
    %c0_4 = arith.constant 0 : index
    %5 = vector.load %arg6[%c0_3, %c0_4] : memref<128x512xbf16, #tpu.memory_space<vmem>>, vector<128x512xbf16>
    %cst = arith.constant dense<0.000000e+00> : vector<64x512xf32>
    %6 = tpu.matmul %4, %5, %cst {dimension_numbers = #tpu.dot_dimension_numbers<[1], [0], [0], [1], [0, 0, 1, 1], [], []>} : vector<64x128xbf16>, vector<128x512xbf16>, vector<64x512xf32> -> vector<64x512xf32>
    %c0_5 = arith.constant 0 : index
    %c0_6 = arith.constant 0 : index
    %c0_7 = arith.constant 0 : index
    %7 = vector.load %arg9[%c0_5, %c0_6, %c0_7] : memref<2x1x512xf32, #tpu.memory_space<vmem>>, vector<1x1x512xf32>
    %8 = vector.shape_cast %7 : vector<1x1x512xf32> to vector<1x512xf32>
    %9 = vector.broadcast %8 : vector<1x512xf32> to vector<64x512xf32>
    %10 = arith.addf %6, %9 : vector<64x512xf32>
    %c0_8 = arith.constant 0 : index
    %c0_9 = arith.constant 0 : index
    %11 = vector.load %arg13[%c0_8, %c0_9] : memref<64x512xf32, #tpu.memory_space<vmem>>, vector<64x512xf32>
    tpu.vector_store %arg13[%c0_8, %c0_9], %10 {strides = array<i32>} : memref<64x512xf32, #tpu.memory_space<vmem>>, vector<64x512xf32>,
    %c0_10 = arith.constant 0 : index
    %c0_11 = arith.constant 0 : index
    %12 = vector.load %arg2[%c0_10, %c0_11] : memref<8x1xi32, #tpu.memory_space<vmem>>, vector<8x1xi32>
    %c1 = arith.constant 1 : index
    %c0_12 = arith.constant 0 : index
    %c0_13 = arith.constant 0 : index
    %13 = vector.load %arg9[%c1, %c0_12, %c0_13] : memref<2x1x512xf32, #tpu.memory_space<vmem>>, vector<1x1x512xf32>
    %14 = vector.shape_cast %13 : vector<1x1x512xf32> to vector<1x512xf32>
    %15 = vector.shape_cast %14 : vector<1x512xf32> to vector<1x512xf32>
    %16 = vector.broadcast %15 : vector<1x512xf32> to vector<8x512xf32>
    %c0_14 = arith.constant 0 : index
    %c0_15 = arith.constant 0 : index
    %c0_16 = arith.constant 0 : index
    %17 = vector.load %arg11[%c0_14, %c0_15, %c0_16] : memref<2x8x128xf32, #tpu.memory_space<vmem>>, vector<1x8x128xf32>
    %18 = vector.shape_cast %17 : vector<1x8x128xf32> to vector<8x128xf32>
    %c1_17 = arith.constant 1 : index
    %c0_18 = arith.constant 0 : index
    %c0_19 = arith.constant 0 : index
    %19 = vector.load %arg11[%c1_17, %c0_18, %c0_19] : memref<2x8x128xf32, #tpu.memory_space<vmem>>, vector<1x8x128xf32>
    %20 = vector.shape_cast %19 : vector<1x8x128xf32> to vector<8x128xf32>
    %c0_20 = arith.constant 0 : index
    %c0_21 = arith.constant 0 : index
    %c0_22 = arith.constant 0 : index
    %21 = vector.load %arg12[%c0_20, %c0_21, %c0_22] : memref<2x8x128xf32, #tpu.memory_space<vmem>>, vector<1x8x128xf32>
    %22 = vector.shape_cast %21 : vector<1x8x128xf32> to vector<8x128xf32>
    %c1_23 = arith.constant 1 : index
    %c0_24 = arith.constant 0 : index
    %c0_25 = arith.constant 0 : index
    %23 = vector.load %arg12[%c1_23, %c0_24, %c0_25] : memref<2x8x128xf32, #tpu.memory_space<vmem>>, vector<1x8x128xf32>
    %24 = vector.shape_cast %23 : vector<1x8x128xf32> to vector<8x128xf32>
    %c0_i32_26 = arith.constant 0 : i32
    %c2_i32 = arith.constant 2 : i32
    %25 = arith.addi %c0_i32_26, %c2_i32 : i32
    %c1_i32 = arith.constant 1 : i32
    %26:4 = scf.for %arg14 = %c0_i32_26 to %25 step %c1_i32 iter_args(%arg15 = %18, %arg16 = %20, %arg17 = %22, %arg18 = %24) -> (vector<8x128xf32>, vector<8x128xf32>, vector<8x128xf32>, vector<8x128xf32>)  : i32 {
      %c4_i32 = arith.constant 4 : i32
      %39 = arith.muli %arg14, %c4_i32 : i32
      %c0_i32_40 = arith.constant 0 : i32
      %40 = arith.addi %39, %c0_i32_40 : i32
      %c8_i32 = arith.constant 8 : i32
      %41 = arith.muli %arg1, %c8_i32 : i32
      %42 = arith.addi %41, %40 : i32
      %43 = vector.broadcast %42 : i32 to vector<8x1xi32>
      %44 = arith.cmpi slt, %43, %12 : vector<8x1xi32>
      %45 = vector.shape_cast %44 : vector<8x1xi1> to vector<8x1xi1>
      %46 = vector.broadcast %45 : vector<8x1xi1> to vector<8x128xi1>
      %47 = arith.truncf %arg15 : vector<8x128xf32> to vector<8x128xbf16>
      %c8_i32_41 = arith.constant 8 : i32
      %48 = arith.muli %40, %c8_i32_41 : i32
      %49 = tpu.assume_multiple %48, 8 : i32
      %50 = arith.index_cast %49 : i32 to index
      %c0_42 = arith.constant 0 : index
      %51 = vector.load %arg13[%50, %c0_42] : memref<64x512xf32, #tpu.memory_space<vmem>>, vector<8x512xf32>
      %c0_43 = arith.constant 0 : index
      %c0_44 = arith.constant 0 : index
      %c0_45 = arith.constant 0 : index
      %52 = vector.load %arg8[%c0_43, %c0_44, %c0_45] : memref<2x128x512xbf16, #tpu.memory_space<vmem>>, vector<1x128x512xbf16>
      %53 = vector.shape_cast %52 : vector<1x128x512xbf16> to vector<128x512xbf16>
      %cst_46 = arith.constant dense<0.000000e+00> : vector<8x512xf32>
      %54 = tpu.matmul %47, %53, %cst_46 {dimension_numbers = #tpu.dot_dimension_numbers<[1], [0], [0], [1], [0, 0, 1, 1], [], []>} : vector<8x128xbf16>, vector<128x512xbf16>, vector<8x512xf32> -> vector<8x512xf32>
      %55 = arith.addf %51, %54 : vector<8x512xf32>
      %56 = vector.extract_strided_slice %55 {offsets = [0, 0], sizes = [8, 128], strides = [1, 1]} : vector<8x512xf32> to vector<8x128xf32>
      %57 = arith.negf %56 : vector<8x128xf32>
      %58 = math.exp %57 : vector<8x128xf32>
      %cst_47 = arith.constant 1.000000e+00 : f32
      %59 = vector.broadcast %cst_47 : f32 to vector<8x128xf32>
      %60 = arith.addf %59, %58 : vector<8x128xf32>
      %61 = arith.divf %59, %60 : vector<8x128xf32>
      %62 = vector.extract_strided_slice %55 {offsets = [0, 128], sizes = [8, 128], strides = [1, 1]} : vector<8x512xf32> to vector<8x128xf32>
      %63 = arith.negf %62 : vector<8x128xf32>
      %64 = math.exp %63 : vector<8x128xf32>
      %cst_48 = arith.constant 1.000000e+00 : f32
      %65 = vector.broadcast %cst_48 : f32 to vector<8x128xf32>
      %66 = arith.addf %65, %64 : vector<8x128xf32>
      %67 = arith.divf %65, %66 : vector<8x128xf32>
      %68 = vector.extract_strided_slice %55 {offsets = [0, 256], sizes = [8, 128], strides = [1, 1]} : vector<8x512xf32> to vector<8x128xf32>
      %69 = math.tanh %68 : vector<8x128xf32>
      %70 = vector.extract_strided_slice %55 {offsets = [0, 384], sizes = [8, 128], strides = [1, 1]} : vector<8x512xf32> to vector<8x128xf32>
      %71 = arith.negf %70 : vector<8x128xf32>
      %72 = math.exp %71 : vector<8x128xf32>
      %cst_49 = arith.constant 1.000000e+00 : f32
      %73 = vector.broadcast %cst_49 : f32 to vector<8x128xf32>
      %74 = arith.addf %73, %72 : vector<8x128xf32>
      %75 = arith.divf %73, %74 : vector<8x128xf32>
      %76 = arith.mulf %67, %arg17 : vector<8x128xf32>
      %77 = arith.mulf %61, %69 : vector<8x128xf32>
      %78 = arith.addf %76, %77 : vector<8x128xf32>
      %79 = math.tanh %78 : vector<8x128xf32>
      %80 = arith.mulf %75, %79 : vector<8x128xf32>
      %81 = arith.select %46, %80, %arg15 : vector<8x128xi1>, vector<8x128xf32>
      %82 = arith.select %46, %78, %arg17 : vector<8x128xi1>, vector<8x128xf32>
      %83 = arith.truncf %81 : vector<8x128xf32> to vector<8x128xbf16>
      %84 = arith.truncf %arg16 : vector<8x128xf32> to vector<8x128xbf16>
      %c0_50 = arith.constant 0 : index
      %c0_51 = arith.constant 0 : index
      %c0_52 = arith.constant 0 : index
      %85 = vector.load %arg7[%c0_50, %c0_51, %c0_52] : memref<1x128x512xbf16, #tpu.memory_space<vmem>>, vector<1x128x512xbf16>
      %86 = vector.shape_cast %85 : vector<1x128x512xbf16> to vector<128x512xbf16>
      %cst_53 = arith.constant dense<0.000000e+00> : vector<8x512xf32>
      %87 = tpu.matmul %83, %86, %cst_53 {dimension_numbers = #tpu.dot_dimension_numbers<[1], [0], [0], [1], [0, 0, 1, 1], [], []>} : vector<8x128xbf16>, vector<128x512xbf16>, vector<8x512xf32> -> vector<8x512xf32>
      %c1_54 = arith.constant 1 : index
      %c0_55 = arith.constant 0 : index
      %c0_56 = arith.constant 0 : index
      %88 = vector.load %arg8[%c1_54, %c0_55, %c0_56] : memref<2x128x512xbf16, #tpu.memory_space<vmem>>, vector<1x128x512xbf16>
      %89 = vector.shape_cast %88 : vector<1x128x512xbf16> to vector<128x512xbf16>
      %cst_57 = arith.constant dense<0.000000e+00> : vector<8x512xf32>
      %90 = tpu.matmul %84, %89, %cst_57 {dimension_numbers = #tpu.dot_dimension_numbers<[1], [0], [0], [1], [0, 0, 1, 1], [], []>} : vector<8x128xbf16>, vector<128x512xbf16>, vector<8x512xf32> -> vector<8x512xf32>
      %91 = arith.addf %87, %90 : vector<8x512xf32>
      %92 = arith.addf %91, %16 : vector<8x512xf32>
      %93 = vector.extract_strided_slice %92 {offsets = [0, 0], sizes = [8, 128], strides = [1, 1]} : vector<8x512xf32> to vector<8x128xf32>
      %94 = arith.negf %93 : vector<8x128xf32>
      %95 = math.exp %94 : vector<8x128xf32>
      %cst_58 = arith.constant 1.000000e+00 : f32
      %96 = vector.broadcast %cst_58 : f32 to vector<8x128xf32>
      %97 = arith.addf %96, %95 : vector<8x128xf32>
      %98 = arith.divf %96, %97 : vector<8x128xf32>
      %99 = vector.extract_strided_slice %92 {offsets = [0, 128], sizes = [8, 128], strides = [1, 1]} : vector<8x512xf32> to vector<8x128xf32>
      %100 = arith.negf %99 : vector<8x128xf32>
      %101 = math.exp %100 : vector<8x128xf32>
      %cst_59 = arith.constant 1.000000e+00 : f32
      %102 = vector.broadcast %cst_59 : f32 to vector<8x128xf32>
      %103 = arith.addf %102, %101 : vector<8x128xf32>
      %104 = arith.divf %102, %103 : vector<8x128xf32>
      %105 = vector.extract_strided_slice %92 {offsets = [0, 256], sizes = [8, 128], strides = [1, 1]} : vector<8x512xf32> to vector<8x128xf32>
      %106 = math.tanh %105 : vector<8x128xf32>
      %107 = vector.extract_strided_slice %92 {offsets = [0, 384], sizes = [8, 128], strides = [1, 1]} : vector<8x512xf32> to vector<8x128xf32>
      %108 = arith.negf %107 : vector<8x128xf32>
      %109 = math.exp %108 : vector<8x128xf32>
      %cst_60 = arith.constant 1.000000e+00 : f32
      %110 = vector.broadcast %cst_60 : f32 to vector<8x128xf32>
      %111 = arith.addf %110, %109 : vector<8x128xf32>
      %112 = arith.divf %110, %111 : vector<8x128xf32>
      %113 = arith.mulf %104, %arg18 : vector<8x128xf32>
      %114 = arith.mulf %98, %106 : vector<8x128xf32>
      %115 = arith.addf %113, %114 : vector<8x128xf32>
      %116 = math.tanh %115 : vector<8x128xf32>
      %117 = arith.mulf %112, %116 : vector<8x128xf32>
      %118 = arith.select %46, %117, %arg16 : vector<8x128xi1>, vector<8x128xf32>
      %119 = arith.select %46, %115, %arg18 : vector<8x128xi1>, vector<8x128xf32>
      %cst_61 = arith.constant 0.000000e+00 : f32
      %120 = vector.broadcast %cst_61 : f32 to vector<8x128xf32>
      %121 = arith.select %46, %118, %120 : vector<8x128xi1>, vector<8x128xf32>
      %122 = arith.truncf %121 : vector<8x128xf32> to vector<8x128xbf16>
      %123 = arith.index_cast %40 : i32 to index
      %c0_62 = arith.constant 0 : index
      %c0_63 = arith.constant 0 : index
      %124 = vector.load %arg10[%123, %c0_62, %c0_63] : memref<8x8x128xbf16, #tpu.memory_space<vmem>>, vector<1x8x128xbf16>
      %125 = vector.shape_cast %124 : vector<1x8x128xbf16> to vector<8x128xbf16>
      %126 = vector.shape_cast %122 : vector<8x128xbf16> to vector<1x8x128xbf16>
      tpu.vector_store %arg10[%123, %c0_62, %c0_63], %126 {strides = array<i32>} : memref<8x8x128xbf16, #tpu.memory_space<vmem>>, vector<1x8x128xbf16>,
      %c4_i32_64 = arith.constant 4 : i32
      %127 = arith.muli %arg14, %c4_i32_64 : i32
      %c1_i32_65 = arith.constant 1 : i32
      %128 = arith.addi %127, %c1_i32_65 : i32
      %c8_i32_66 = arith.constant 8 : i32
      %129 = arith.muli %arg1, %c8_i32_66 : i32
      %130 = arith.addi %129, %128 : i32
      %131 = vector.broadcast %130 : i32 to vector<8x1xi32>
      %132 = arith.cmpi slt, %131, %12 : vector<8x1xi32>
      %133 = vector.shape_cast %132 : vector<8x1xi1> to vector<8x1xi1>
      %134 = vector.broadcast %133 : vector<8x1xi1> to vector<8x128xi1>
      %135 = arith.truncf %81 : vector<8x128xf32> to vector<8x128xbf16>
      %c8_i32_67 = arith.constant 8 : i32
      %136 = arith.muli %128, %c8_i32_67 : i32
      %137 = tpu.assume_multiple %136, 8 : i32
      %138 = arith.index_cast %137 : i32 to index
      %c0_68 = arith.constant 0 : index
      %139 = vector.load %arg13[%138, %c0_68] : memref<64x512xf32, #tpu.memory_space<vmem>>, vector<8x512xf32>
      %c0_69 = arith.constant 0 : index
      %c0_70 = arith.constant 0 : index
      %c0_71 = arith.constant 0 : index
      %140 = vector.load %arg8[%c0_69, %c0_70, %c0_71] : memref<2x128x512xbf16, #tpu.memory_space<vmem>>, vector<1x128x512xbf16>
      %141 = vector.shape_cast %140 : vector<1x128x512xbf16> to vector<128x512xbf16>
      %cst_72 = arith.constant dense<0.000000e+00> : vector<8x512xf32>
      %142 = tpu.matmul %135, %141, %cst_72 {dimension_numbers = #tpu.dot_dimension_numbers<[1], [0], [0], [1], [0, 0, 1, 1], [], []>} : vector<8x128xbf16>, vector<128x512xbf16>, vector<8x512xf32> -> vector<8x512xf32>
      %143 = arith.addf %139, %142 : vector<8x512xf32>
      %144 = vector.extract_strided_slice %143 {offsets = [0, 0], sizes = [8, 128], strides = [1, 1]} : vector<8x512xf32> to vector<8x128xf32>
      %145 = arith.negf %144 : vector<8x128xf32>
      %146 = math.exp %145 : vector<8x128xf32>
      %cst_73 = arith.constant 1.000000e+00 : f32
      %147 = vector.broadcast %cst_73 : f32 to vector<8x128xf32>
      %148 = arith.addf %147, %146 : vector<8x128xf32>
      %149 = arith.divf %147, %148 : vector<8x128xf32>
      %150 = vector.extract_strided_slice %143 {offsets = [0, 128], sizes = [8, 128], strides = [1, 1]} : vector<8x512xf32> to vector<8x128xf32>
      %151 = arith.negf %150 : vector<8x128xf32>
      %152 = math.exp %151 : vector<8x128xf32>
      %cst_74 = arith.constant 1.000000e+00 : f32
      %153 = vector.broadcast %cst_74 : f32 to vector<8x128xf32>
      %154 = arith.addf %153, %152 : vector<8x128xf32>
      %155 = arith.divf %153, %154 : vector<8x128xf32>
      %156 = vector.extract_strided_slice %143 {offsets = [0, 256], sizes = [8, 128], strides = [1, 1]} : vector<8x512xf32> to vector<8x128xf32>
      %157 = math.tanh %156 : vector<8x128xf32>
      %158 = vector.extract_strided_slice %143 {offsets = [0, 384], sizes = [8, 128], strides = [1, 1]} : vector<8x512xf32> to vector<8x128xf32>
      %159 = arith.negf %158 : vector<8x128xf32>
      %160 = math.exp %159 : vector<8x128xf32>
      %cst_75 = arith.constant 1.000000e+00 : f32
      %161 = vector.broadcast %cst_75 : f32 to vector<8x128xf32>
      %162 = arith.addf %161, %160 : vector<8x128xf32>
      %163 = arith.divf %161, %162 : vector<8x128xf32>
      %164 = arith.mulf %155, %82 : vector<8x128xf32>
      %165 = arith.mulf %149, %157 : vector<8x128xf32>
      %166 = arith.addf %164, %165 : vector<8x128xf32>
      %167 = math.tanh %166 : vector<8x128xf32>
      %168 = arith.mulf %163, %167 : vector<8x128xf32>
      %169 = arith.select %134, %168, %81 : vector<8x128xi1>, vector<8x128xf32>
      %170 = arith.select %134, %166, %82 : vector<8x128xi1>, vector<8x128xf32>
      %171 = arith.truncf %169 : vector<8x128xf32> to vector<8x128xbf16>
      %172 = arith.truncf %118 : vector<8x128xf32> to vector<8x128xbf16>
      %c0_76 = arith.constant 0 : index
      %c0_77 = arith.constant 0 : index
      %c0_78 = arith.constant 0 : index
      %173 = vector.load %arg7[%c0_76, %c0_77, %c0_78] : memref<1x128x512xbf16, #tpu.memory_space<vmem>>, vector<1x128x512xbf16>
      %174 = vector.shape_cast %173 : vector<1x128x512xbf16> to vector<128x512xbf16>
      %cst_79 = arith.constant dense<0.000000e+00> : vector<8x512xf32>
      %175 = tpu.matmul %171, %174, %cst_79 {dimension_numbers = #tpu.dot_dimension_numbers<[1], [0], [0], [1], [0, 0, 1, 1], [], []>} : vector<8x128xbf16>, vector<128x512xbf16>, vector<8x512xf32> -> vector<8x512xf32>
      %c1_80 = arith.constant 1 : index
      %c0_81 = arith.constant 0 : index
      %c0_82 = arith.constant 0 : index
      %176 = vector.load %arg8[%c1_80, %c0_81, %c0_82] : memref<2x128x512xbf16, #tpu.memory_space<vmem>>, vector<1x128x512xbf16>
      %177 = vector.shape_cast %176 : vector<1x128x512xbf16> to vector<128x512xbf16>
      %cst_83 = arith.constant dense<0.000000e+00> : vector<8x512xf32>
      %178 = tpu.matmul %172, %177, %cst_83 {dimension_numbers = #tpu.dot_dimension_numbers<[1], [0], [0], [1], [0, 0, 1, 1], [], []>} : vector<8x128xbf16>, vector<128x512xbf16>, vector<8x512xf32> -> vector<8x512xf32>
      %179 = arith.addf %175, %178 : vector<8x512xf32>
      %180 = arith.addf %179, %16 : vector<8x512xf32>
      %181 = vector.extract_strided_slice %180 {offsets = [0, 0], sizes = [8, 128], strides = [1, 1]} : vector<8x512xf32> to vector<8x128xf32>
      %182 = arith.negf %181 : vector<8x128xf32>
      %183 = math.exp %182 : vector<8x128xf32>
      %cst_84 = arith.constant 1.000000e+00 : f32
      %184 = vector.broadcast %cst_84 : f32 to vector<8x128xf32>
      %185 = arith.addf %184, %183 : vector<8x128xf32>
      %186 = arith.divf %184, %185 : vector<8x128xf32>
      %187 = vector.extract_strided_slice %180 {offsets = [0, 128], sizes = [8, 128], strides = [1, 1]} : vector<8x512xf32> to vector<8x128xf32>
      %188 = arith.negf %187 : vector<8x128xf32>
      %189 = math.exp %188 : vector<8x128xf32>
      %cst_85 = arith.constant 1.000000e+00 : f32
      %190 = vector.broadcast %cst_85 : f32 to vector<8x128xf32>
      %191 = arith.addf %190, %189 : vector<8x128xf32>
      %192 = arith.divf %190, %191 : vector<8x128xf32>
      %193 = vector.extract_strided_slice %180 {offsets = [0, 256], sizes = [8, 128], strides = [1, 1]} : vector<8x512xf32> to vector<8x128xf32>
      %194 = math.tanh %193 : vector<8x128xf32>
      %195 = vector.extract_strided_slice %180 {offsets = [0, 384], sizes = [8, 128], strides = [1, 1]} : vector<8x512xf32> to vector<8x128xf32>
      %196 = arith.negf %195 : vector<8x128xf32>
      %197 = math.exp %196 : vector<8x128xf32>
      %cst_86 = arith.constant 1.000000e+00 : f32
      %198 = vector.broadcast %cst_86 : f32 to vector<8x128xf32>
      %199 = arith.addf %198, %197 : vector<8x128xf32>
      %200 = arith.divf %198, %199 : vector<8x128xf32>
      %201 = arith.mulf %192, %119 : vector<8x128xf32>
      %202 = arith.mulf %186, %194 : vector<8x128xf32>
      %203 = arith.addf %201, %202 : vector<8x128xf32>
      %204 = math.tanh %203 : vector<8x128xf32>
      %205 = arith.mulf %200, %204 : vector<8x128xf32>
      %206 = arith.select %134, %205, %118 : vector<8x128xi1>, vector<8x128xf32>
      %207 = arith.select %134, %203, %119 : vector<8x128xi1>, vector<8x128xf32>
      %cst_87 = arith.constant 0.000000e+00 : f32
      %208 = vector.broadcast %cst_87 : f32 to vector<8x128xf32>
      %209 = arith.select %134, %206, %208 : vector<8x128xi1>, vector<8x128xf32>
      %210 = arith.truncf %209 : vector<8x128xf32> to vector<8x128xbf16>
      %211 = arith.index_cast %128 : i32 to index
      %c0_88 = arith.constant 0 : index
      %c0_89 = arith.constant 0 : index
      %212 = vector.load %arg10[%211, %c0_88, %c0_89] : memref<8x8x128xbf16, #tpu.memory_space<vmem>>, vector<1x8x128xbf16>
      %213 = vector.shape_cast %212 : vector<1x8x128xbf16> to vector<8x128xbf16>
      %214 = vector.shape_cast %210 : vector<8x128xbf16> to vector<1x8x128xbf16>
      tpu.vector_store %arg10[%211, %c0_88, %c0_89], %214 {strides = array<i32>} : memref<8x8x128xbf16, #tpu.memory_space<vmem>>, vector<1x8x128xbf16>,
      %c4_i32_90 = arith.constant 4 : i32
      %215 = arith.muli %arg14, %c4_i32_90 : i32
      %c2_i32_91 = arith.constant 2 : i32
      %216 = arith.addi %215, %c2_i32_91 : i32
      %c8_i32_92 = arith.constant 8 : i32
      %217 = arith.muli %arg1, %c8_i32_92 : i32
      %218 = arith.addi %217, %216 : i32
      %219 = vector.broadcast %218 : i32 to vector<8x1xi32>
      %220 = arith.cmpi slt, %219, %12 : vector<8x1xi32>
      %221 = vector.shape_cast %220 : vector<8x1xi1> to vector<8x1xi1>
      %222 = vector.broadcast %221 : vector<8x1xi1> to vector<8x128xi1>
      %223 = arith.truncf %169 : vector<8x128xf32> to vector<8x128xbf16>
      %c8_i32_93 = arith.constant 8 : i32
      %224 = arith.muli %216, %c8_i32_93 : i32
      %225 = tpu.assume_multiple %224, 8 : i32
      %226 = arith.index_cast %225 : i32 to index
      %c0_94 = arith.constant 0 : index
      %227 = vector.load %arg13[%226, %c0_94] : memref<64x512xf32, #tpu.memory_space<vmem>>, vector<8x512xf32>
      %c0_95 = arith.constant 0 : index
      %c0_96 = arith.constant 0 : index
      %c0_97 = arith.constant 0 : index
      %228 = vector.load %arg8[%c0_95, %c0_96, %c0_97] : memref<2x128x512xbf16, #tpu.memory_space<vmem>>, vector<1x128x512xbf16>
      %229 = vector.shape_cast %228 : vector<1x128x512xbf16> to vector<128x512xbf16>
      %cst_98 = arith.constant dense<0.000000e+00> : vector<8x512xf32>
      %230 = tpu.matmul %223, %229, %cst_98 {dimension_numbers = #tpu.dot_dimension_numbers<[1], [0], [0], [1], [0, 0, 1, 1], [], []>} : vector<8x128xbf16>, vector<128x512xbf16>, vector<8x512xf32> -> vector<8x512xf32>
      %231 = arith.addf %227, %230 : vector<8x512xf32>
      %232 = vector.extract_strided_slice %231 {offsets = [0, 0], sizes = [8, 128], strides = [1, 1]} : vector<8x512xf32> to vector<8x128xf32>
      %233 = arith.negf %232 : vector<8x128xf32>
      %234 = math.exp %233 : vector<8x128xf32>
      %cst_99 = arith.constant 1.000000e+00 : f32
      %235 = vector.broadcast %cst_99 : f32 to vector<8x128xf32>
      %236 = arith.addf %235, %234 : vector<8x128xf32>
      %237 = arith.divf %235, %236 : vector<8x128xf32>
      %238 = vector.extract_strided_slice %231 {offsets = [0, 128], sizes = [8, 128], strides = [1, 1]} : vector<8x512xf32> to vector<8x128xf32>
      %239 = arith.negf %238 : vector<8x128xf32>
      %240 = math.exp %239 : vector<8x128xf32>
      %cst_100 = arith.constant 1.000000e+00 : f32
      %241 = vector.broadcast %cst_100 : f32 to vector<8x128xf32>
      %242 = arith.addf %241, %240 : vector<8x128xf32>
      %243 = arith.divf %241, %242 : vector<8x128xf32>
      %244 = vector.extract_strided_slice %231 {offsets = [0, 256], sizes = [8, 128], strides = [1, 1]} : vector<8x512xf32> to vector<8x128xf32>
      %245 = math.tanh %244 : vector<8x128xf32>
      %246 = vector.extract_strided_slice %231 {offsets = [0, 384], sizes = [8, 128], strides = [1, 1]} : vector<8x512xf32> to vector<8x128xf32>
      %247 = arith.negf %246 : vector<8x128xf32>
      %248 = math.exp %247 : vector<8x128xf32>
      %cst_101 = arith.constant 1.000000e+00 : f32
      %249 = vector.broadcast %cst_101 : f32 to vector<8x128xf32>
      %250 = arith.addf %249, %248 : vector<8x128xf32>
      %251 = arith.divf %249, %250 : vector<8x128xf32>
      %252 = arith.mulf %243, %170 : vector<8x128xf32>
      %253 = arith.mulf %237, %245 : vector<8x128xf32>
      %254 = arith.addf %252, %253 : vector<8x128xf32>
      %255 = math.tanh %254 : vector<8x128xf32>
      %256 = arith.mulf %251, %255 : vector<8x128xf32>
      %257 = arith.select %222, %256, %169 : vector<8x128xi1>, vector<8x128xf32>
      %258 = arith.select %222, %254, %170 : vector<8x128xi1>, vector<8x128xf32>
      %259 = arith.truncf %257 : vector<8x128xf32> to vector<8x128xbf16>
      %260 = arith.truncf %206 : vector<8x128xf32> to vector<8x128xbf16>
      %c0_102 = arith.constant 0 : index
      %c0_103 = arith.constant 0 : index
      %c0_104 = arith.constant 0 : index
      %261 = vector.load %arg7[%c0_102, %c0_103, %c0_104] : memref<1x128x512xbf16, #tpu.memory_space<vmem>>, vector<1x128x512xbf16>
      %262 = vector.shape_cast %261 : vector<1x128x512xbf16> to vector<128x512xbf16>
      %cst_105 = arith.constant dense<0.000000e+00> : vector<8x512xf32>
      %263 = tpu.matmul %259, %262, %cst_105 {dimension_numbers = #tpu.dot_dimension_numbers<[1], [0], [0], [1], [0, 0, 1, 1], [], []>} : vector<8x128xbf16>, vector<128x512xbf16>, vector<8x512xf32> -> vector<8x512xf32>
      %c1_106 = arith.constant 1 : index
      %c0_107 = arith.constant 0 : index
      %c0_108 = arith.constant 0 : index
      %264 = vector.load %arg8[%c1_106, %c0_107, %c0_108] : memref<2x128x512xbf16, #tpu.memory_space<vmem>>, vector<1x128x512xbf16>
      %265 = vector.shape_cast %264 : vector<1x128x512xbf16> to vector<128x512xbf16>
      %cst_109 = arith.constant dense<0.000000e+00> : vector<8x512xf32>
      %266 = tpu.matmul %260, %265, %cst_109 {dimension_numbers = #tpu.dot_dimension_numbers<[1], [0], [0], [1], [0, 0, 1, 1], [], []>} : vector<8x128xbf16>, vector<128x512xbf16>, vector<8x512xf32> -> vector<8x512xf32>
      %267 = arith.addf %263, %266 : vector<8x512xf32>
      %268 = arith.addf %267, %16 : vector<8x512xf32>
      %269 = vector.extract_strided_slice %268 {offsets = [0, 0], sizes = [8, 128], strides = [1, 1]} : vector<8x512xf32> to vector<8x128xf32>
      %270 = arith.negf %269 : vector<8x128xf32>
      %271 = math.exp %270 : vector<8x128xf32>
      %cst_110 = arith.constant 1.000000e+00 : f32
      %272 = vector.broadcast %cst_110 : f32 to vector<8x128xf32>
      %273 = arith.addf %272, %271 : vector<8x128xf32>
      %274 = arith.divf %272, %273 : vector<8x128xf32>
      %275 = vector.extract_strided_slice %268 {offsets = [0, 128], sizes = [8, 128], strides = [1, 1]} : vector<8x512xf32> to vector<8x128xf32>
      %276 = arith.negf %275 : vector<8x128xf32>
      %277 = math.exp %276 : vector<8x128xf32>
      %cst_111 = arith.constant 1.000000e+00 : f32
      %278 = vector.broadcast %cst_111 : f32 to vector<8x128xf32>
      %279 = arith.addf %278, %277 : vector<8x128xf32>
      %280 = arith.divf %278, %279 : vector<8x128xf32>
      %281 = vector.extract_strided_slice %268 {offsets = [0, 256], sizes = [8, 128], strides = [1, 1]} : vector<8x512xf32> to vector<8x128xf32>
      %282 = math.tanh %281 : vector<8x128xf32>
      %283 = vector.extract_strided_slice %268 {offsets = [0, 384], sizes = [8, 128], strides = [1, 1]} : vector<8x512xf32> to vector<8x128xf32>
      %284 = arith.negf %283 : vector<8x128xf32>
      %285 = math.exp %284 : vector<8x128xf32>
      %cst_112 = arith.constant 1.000000e+00 : f32
      %286 = vector.broadcast %cst_112 : f32 to vector<8x128xf32>
      %287 = arith.addf %286, %285 : vector<8x128xf32>
      %288 = arith.divf %286, %287 : vector<8x128xf32>
      %289 = arith.mulf %280, %207 : vector<8x128xf32>
      %290 = arith.mulf %274, %282 : vector<8x128xf32>
      %291 = arith.addf %289, %290 : vector<8x128xf32>
      %292 = math.tanh %291 : vector<8x128xf32>
      %293 = arith.mulf %288, %292 : vector<8x128xf32>
      %294 = arith.select %222, %293, %206 : vector<8x128xi1>, vector<8x128xf32>
      %295 = arith.select %222, %291, %207 : vector<8x128xi1>, vector<8x128xf32>
      %cst_113 = arith.constant 0.000000e+00 : f32
      %296 = vector.broadcast %cst_113 : f32 to vector<8x128xf32>
      %297 = arith.select %222, %294, %296 : vector<8x128xi1>, vector<8x128xf32>
      %298 = arith.truncf %297 : vector<8x128xf32> to vector<8x128xbf16>
      %299 = arith.index_cast %216 : i32 to index
      %c0_114 = arith.constant 0 : index
      %c0_115 = arith.constant 0 : index
      %300 = vector.load %arg10[%299, %c0_114, %c0_115] : memref<8x8x128xbf16, #tpu.memory_space<vmem>>, vector<1x8x128xbf16>
      %301 = vector.shape_cast %300 : vector<1x8x128xbf16> to vector<8x128xbf16>
      %302 = vector.shape_cast %298 : vector<8x128xbf16> to vector<1x8x128xbf16>
      tpu.vector_store %arg10[%299, %c0_114, %c0_115], %302 {strides = array<i32>} : memref<8x8x128xbf16, #tpu.memory_space<vmem>>, vector<1x8x128xbf16>,
      %c4_i32_116 = arith.constant 4 : i32
      %303 = arith.muli %arg14, %c4_i32_116 : i32
      %c3_i32 = arith.constant 3 : i32
      %304 = arith.addi %303, %c3_i32 : i32
      %c8_i32_117 = arith.constant 8 : i32
      %305 = arith.muli %arg1, %c8_i32_117 : i32
      %306 = arith.addi %305, %304 : i32
      %307 = vector.broadcast %306 : i32 to vector<8x1xi32>
      %308 = arith.cmpi slt, %307, %12 : vector<8x1xi32>
      %309 = vector.shape_cast %308 : vector<8x1xi1> to vector<8x1xi1>
      %310 = vector.broadcast %309 : vector<8x1xi1> to vector<8x128xi1>
      %311 = arith.truncf %257 : vector<8x128xf32> to vector<8x128xbf16>
      %c8_i32_118 = arith.constant 8 : i32
      %312 = arith.muli %304, %c8_i32_118 : i32
      %313 = tpu.assume_multiple %312, 8 : i32
      %314 = arith.index_cast %313 : i32 to index
      %c0_119 = arith.constant 0 : index
      %315 = vector.load %arg13[%314, %c0_119] : memref<64x512xf32, #tpu.memory_space<vmem>>, vector<8x512xf32>
      %c0_120 = arith.constant 0 : index
      %c0_121 = arith.constant 0 : index
      %c0_122 = arith.constant 0 : index
      %316 = vector.load %arg8[%c0_120, %c0_121, %c0_122] : memref<2x128x512xbf16, #tpu.memory_space<vmem>>, vector<1x128x512xbf16>
      %317 = vector.shape_cast %316 : vector<1x128x512xbf16> to vector<128x512xbf16>
      %cst_123 = arith.constant dense<0.000000e+00> : vector<8x512xf32>
      %318 = tpu.matmul %311, %317, %cst_123 {dimension_numbers = #tpu.dot_dimension_numbers<[1], [0], [0], [1], [0, 0, 1, 1], [], []>} : vector<8x128xbf16>, vector<128x512xbf16>, vector<8x512xf32> -> vector<8x512xf32>
      %319 = arith.addf %315, %318 : vector<8x512xf32>
      %320 = vector.extract_strided_slice %319 {offsets = [0, 0], sizes = [8, 128], strides = [1, 1]} : vector<8x512xf32> to vector<8x128xf32>
      %321 = arith.negf %320 : vector<8x128xf32>
      %322 = math.exp %321 : vector<8x128xf32>
      %cst_124 = arith.constant 1.000000e+00 : f32
      %323 = vector.broadcast %cst_124 : f32 to vector<8x128xf32>
      %324 = arith.addf %323, %322 : vector<8x128xf32>
      %325 = arith.divf %323, %324 : vector<8x128xf32>
      %326 = vector.extract_strided_slice %319 {offsets = [0, 128], sizes = [8, 128], strides = [1, 1]} : vector<8x512xf32> to vector<8x128xf32>
      %327 = arith.negf %326 : vector<8x128xf32>
      %328 = math.exp %327 : vector<8x128xf32>
      %cst_125 = arith.constant 1.000000e+00 : f32
      %329 = vector.broadcast %cst_125 : f32 to vector<8x128xf32>
      %330 = arith.addf %329, %328 : vector<8x128xf32>
      %331 = arith.divf %329, %330 : vector<8x128xf32>
      %332 = vector.extract_strided_slice %319 {offsets = [0, 256], sizes = [8, 128], strides = [1, 1]} : vector<8x512xf32> to vector<8x128xf32>
      %333 = math.tanh %332 : vector<8x128xf32>
      %334 = vector.extract_strided_slice %319 {offsets = [0, 384], sizes = [8, 128], strides = [1, 1]} : vector<8x512xf32> to vector<8x128xf32>
      %335 = arith.negf %334 : vector<8x128xf32>
      %336 = math.exp %335 : vector<8x128xf32>
      %cst_126 = arith.constant 1.000000e+00 : f32
      %337 = vector.broadcast %cst_126 : f32 to vector<8x128xf32>
      %338 = arith.addf %337, %336 : vector<8x128xf32>
      %339 = arith.divf %337, %338 : vector<8x128xf32>
      %340 = arith.mulf %331, %258 : vector<8x128xf32>
      %341 = arith.mulf %325, %333 : vector<8x128xf32>
      %342 = arith.addf %340, %341 : vector<8x128xf32>
      %343 = math.tanh %342 : vector<8x128xf32>
      %344 = arith.mulf %339, %343 : vector<8x128xf32>
      %345 = arith.select %310, %344, %257 : vector<8x128xi1>, vector<8x128xf32>
      %346 = arith.select %310, %342, %258 : vector<8x128xi1>, vector<8x128xf32>
      %347 = arith.truncf %345 : vector<8x128xf32> to vector<8x128xbf16>
      %348 = arith.truncf %294 : vector<8x128xf32> to vector<8x128xbf16>
      %c0_127 = arith.constant 0 : index
      %c0_128 = arith.constant 0 : index
      %c0_129 = arith.constant 0 : index
      %349 = vector.load %arg7[%c0_127, %c0_128, %c0_129] : memref<1x128x512xbf16, #tpu.memory_space<vmem>>, vector<1x128x512xbf16>
      %350 = vector.shape_cast %349 : vector<1x128x512xbf16> to vector<128x512xbf16>
      %cst_130 = arith.constant dense<0.000000e+00> : vector<8x512xf32>
      %351 = tpu.matmul %347, %350, %cst_130 {dimension_numbers = #tpu.dot_dimension_numbers<[1], [0], [0], [1], [0, 0, 1, 1], [], []>} : vector<8x128xbf16>, vector<128x512xbf16>, vector<8x512xf32> -> vector<8x512xf32>
      %c1_131 = arith.constant 1 : index
      %c0_132 = arith.constant 0 : index
      %c0_133 = arith.constant 0 : index
      %352 = vector.load %arg8[%c1_131, %c0_132, %c0_133] : memref<2x128x512xbf16, #tpu.memory_space<vmem>>, vector<1x128x512xbf16>
      %353 = vector.shape_cast %352 : vector<1x128x512xbf16> to vector<128x512xbf16>
      %cst_134 = arith.constant dense<0.000000e+00> : vector<8x512xf32>
      %354 = tpu.matmul %348, %353, %cst_134 {dimension_numbers = #tpu.dot_dimension_numbers<[1], [0], [0], [1], [0, 0, 1, 1], [], []>} : vector<8x128xbf16>, vector<128x512xbf16>, vector<8x512xf32> -> vector<8x512xf32>
      %355 = arith.addf %351, %354 : vector<8x512xf32>
      %356 = arith.addf %355, %16 : vector<8x512xf32>
      %357 = vector.extract_strided_slice %356 {offsets = [0, 0], sizes = [8, 128], strides = [1, 1]} : vector<8x512xf32> to vector<8x128xf32>
      %358 = arith.negf %357 : vector<8x128xf32>
      %359 = math.exp %358 : vector<8x128xf32>
      %cst_135 = arith.constant 1.000000e+00 : f32
      %360 = vector.broadcast %cst_135 : f32 to vector<8x128xf32>
      %361 = arith.addf %360, %359 : vector<8x128xf32>
      %362 = arith.divf %360, %361 : vector<8x128xf32>
      %363 = vector.extract_strided_slice %356 {offsets = [0, 128], sizes = [8, 128], strides = [1, 1]} : vector<8x512xf32> to vector<8x128xf32>
      %364 = arith.negf %363 : vector<8x128xf32>
      %365 = math.exp %364 : vector<8x128xf32>
      %cst_136 = arith.constant 1.000000e+00 : f32
      %366 = vector.broadcast %cst_136 : f32 to vector<8x128xf32>
      %367 = arith.addf %366, %365 : vector<8x128xf32>
      %368 = arith.divf %366, %367 : vector<8x128xf32>
      %369 = vector.extract_strided_slice %356 {offsets = [0, 256], sizes = [8, 128], strides = [1, 1]} : vector<8x512xf32> to vector<8x128xf32>
      %370 = math.tanh %369 : vector<8x128xf32>
      %371 = vector.extract_strided_slice %356 {offsets = [0, 384], sizes = [8, 128], strides = [1, 1]} : vector<8x512xf32> to vector<8x128xf32>
      %372 = arith.negf %371 : vector<8x128xf32>
      %373 = math.exp %372 : vector<8x128xf32>
      %cst_137 = arith.constant 1.000000e+00 : f32
      %374 = vector.broadcast %cst_137 : f32 to vector<8x128xf32>
      %375 = arith.addf %374, %373 : vector<8x128xf32>
      %376 = arith.divf %374, %375 : vector<8x128xf32>
      %377 = arith.mulf %368, %295 : vector<8x128xf32>
      %378 = arith.mulf %362, %370 : vector<8x128xf32>
      %379 = arith.addf %377, %378 : vector<8x128xf32>
      %380 = math.tanh %379 : vector<8x128xf32>
      %381 = arith.mulf %376, %380 : vector<8x128xf32>
      %382 = arith.select %310, %381, %294 : vector<8x128xi1>, vector<8x128xf32>
      %383 = arith.select %310, %379, %295 : vector<8x128xi1>, vector<8x128xf32>
      %cst_138 = arith.constant 0.000000e+00 : f32
      %384 = vector.broadcast %cst_138 : f32 to vector<8x128xf32>
      %385 = arith.select %310, %382, %384 : vector<8x128xi1>, vector<8x128xf32>
      %386 = arith.truncf %385 : vector<8x128xf32> to vector<8x128xbf16>
      %387 = arith.index_cast %304 : i32 to index
      %c0_139 = arith.constant 0 : index
      %c0_140 = arith.constant 0 : index
      %388 = vector.load %arg10[%387, %c0_139, %c0_140] : memref<8x8x128xbf16, #tpu.memory_space<vmem>>, vector<1x8x128xbf16>
      %389 = vector.shape_cast %388 : vector<1x8x128xbf16> to vector<8x128xbf16>
      %390 = vector.shape_cast %386 : vector<8x128xbf16> to vector<1x8x128xbf16>
      tpu.vector_store %arg10[%387, %c0_139, %c0_140], %390 {strides = array<i32>} : memref<8x8x128xbf16, #tpu.memory_space<vmem>>, vector<1x8x128xbf16>,
      scf.yield %345, %382, %346, %383 : vector<8x128xf32>, vector<8x128xf32>, vector<8x128xf32>, vector<8x128xf32>
    }
    %c2_i32_27 = arith.constant 2 : i32
    %c0_28 = arith.constant 0 : index
    %c0_29 = arith.constant 0 : index
    %c0_30 = arith.constant 0 : index
    %27 = vector.load %arg11[%c0_28, %c0_29, %c0_30] : memref<2x8x128xf32, #tpu.memory_space<vmem>>, vector<1x8x128xf32>
    %28 = vector.shape_cast %27 : vector<1x8x128xf32> to vector<8x128xf32>
    %29 = vector.shape_cast %26#0 : vector<8x128xf32> to vector<1x8x128xf32>
    tpu.vector_store %arg11[%c0_28, %c0_29, %c0_30], %29 {strides = array<i32>} : memref<2x8x128xf32, #tpu.memory_space<vmem>>, vector<1x8x128xf32>,
    %c0_31 = arith.constant 0 : index
    %c0_32 = arith.constant 0 : index
    %c0_33 = arith.constant 0 : index
    %30 = vector.load %arg12[%c0_31, %c0_32, %c0_33] : memref<2x8x128xf32, #tpu.memory_space<vmem>>, vector<1x8x128xf32>
    %31 = vector.shape_cast %30 : vector<1x8x128xf32> to vector<8x128xf32>
    %32 = vector.shape_cast %26#2 : vector<8x128xf32> to vector<1x8x128xf32>
    tpu.vector_store %arg12[%c0_31, %c0_32, %c0_33], %32 {strides = array<i32>} : memref<2x8x128xf32, #tpu.memory_space<vmem>>, vector<1x8x128xf32>,
    %c1_34 = arith.constant 1 : index
    %c0_35 = arith.constant 0 : index
    %c0_36 = arith.constant 0 : index
    %33 = vector.load %arg11[%c1_34, %c0_35, %c0_36] : memref<2x8x128xf32, #tpu.memory_space<vmem>>, vector<1x8x128xf32>
    %34 = vector.shape_cast %33 : vector<1x8x128xf32> to vector<8x128xf32>
    %35 = vector.shape_cast %26#1 : vector<8x128xf32> to vector<1x8x128xf32>
    tpu.vector_store %arg11[%c1_34, %c0_35, %c0_36], %35 {strides = array<i32>} : memref<2x8x128xf32, #tpu.memory_space<vmem>>, vector<1x8x128xf32>,
    %c1_37 = arith.constant 1 : index
    %c0_38 = arith.constant 0 : index
    %c0_39 = arith.constant 0 : index
    %36 = vector.load %arg12[%c1_37, %c0_38, %c0_39] : memref<2x8x128xf32, #tpu.memory_space<vmem>>, vector<1x8x128xf32>
    %37 = vector.shape_cast %36 : vector<1x8x128xf32> to vector<8x128xf32>
    %38 = vector.shape_cast %26#3 : vector<8x128xf32> to vector<1x8x128xf32>
    tpu.vector_store %arg12[%c1_37, %c0_38, %c0_39], %38 {strides = array<i32>} : memref<2x8x128xf32, #tpu.memory_space<vmem>>, vector<1x8x128xf32>,
    return
  }
  func.func @transform_0(%arg0: i32, %arg1: i32) -> (i32, i32) {
    %c0_i32 = arith.constant 0 : i32
    %c0_i32_0 = arith.constant 0 : i32
    return %arg0, %c0_i32 : i32, i32
  }
  func.func @transform_1(%arg0: i32, %arg1: i32) -> (i32, i32, i32) {
    %c0_i32 = arith.constant 0 : i32
    %c0_i32_0 = arith.constant 0 : i32
    return %arg1, %arg0, %c0_i32 : i32, i32, i32
  }
  func.func @transform_2(%arg0: i32, %arg1: i32) -> (i32, i32, i32) {
    %c0_i32 = arith.constant 0 : i32
    %c0_i32_0 = arith.constant 0 : i32
    %c0_i32_1 = arith.constant 0 : i32
    return %c0_i32, %arg0, %c0_i32_0 : i32, i32, i32
  }
  func.func @transform_3(%arg0: i32, %arg1: i32) -> (i32, i32, i32) {
    %c0_i32 = arith.constant 0 : i32
    %c0_i32_0 = arith.constant 0 : i32
    %c0_i32_1 = arith.constant 0 : i32
    return %c0_i32, %arg0, %c0_i32_0 : i32, i32, i32
  }
  func.func @transform_4(%arg0: i32, %arg1: i32) -> (i32, i32) {
    %c0_i32 = arith.constant 0 : i32
    %c0_i32_0 = arith.constant 0 : i32
    %c0_i32_1 = arith.constant 0 : i32
    return %c0_i32, %c0_i32_0 : i32, i32
  }
  func.func @transform_5(%arg0: i32, %arg1: i32) -> (i32, i32, i32) {
    %c0_i32 = arith.constant 0 : i32
    %c0_i32_0 = arith.constant 0 : i32
    %c0_i32_1 = arith.constant 0 : i32
    %c0_i32_2 = arith.constant 0 : i32
    return %c0_i32, %c0_i32_0, %c0_i32_1 : i32, i32, i32
  }
  func.func @transform_6(%arg0: i32, %arg1: i32) -> (i32, i32, i32) {
    %c0_i32 = arith.constant 0 : i32
    %c0_i32_0 = arith.constant 0 : i32
    %c0_i32_1 = arith.constant 0 : i32
    %c0_i32_2 = arith.constant 0 : i32
    return %c0_i32, %c0_i32_0, %c0_i32_1 : i32, i32, i32
  }
  func.func @transform_7(%arg0: i32, %arg1: i32) -> (i32, i32, i32) {
    %c0_i32 = arith.constant 0 : i32
    %c0_i32_0 = arith.constant 0 : i32
    %c0_i32_1 = arith.constant 0 : i32
    %c0_i32_2 = arith.constant 0 : i32
    return %c0_i32, %c0_i32_0, %c0_i32_1 : i32, i32, i32
  }
  func.func @transform_8(%arg0: i32, %arg1: i32) -> (i32, i32, i32) {
    %c0_i32 = arith.constant 0 : i32
    %c0_i32_0 = arith.constant 0 : i32
    return %arg1, %arg0, %c0_i32 : i32, i32, i32
  }
  func.func @transform_9(%arg0: i32, %arg1: i32) -> (i32, i32, i32) {
    %c0_i32 = arith.constant 0 : i32
    %c0_i32_0 = arith.constant 0 : i32
    %c0_i32_1 = arith.constant 0 : i32
    return %c0_i32, %arg0, %c0_i32_0 : i32, i32, i32
  }
  func.func @transform_10(%arg0: i32, %arg1: i32) -> (i32, i32, i32) {
    %c0_i32 = arith.constant 0 : i32
    %c0_i32_0 = arith.constant 0 : i32
    %c0_i32_1 = arith.constant 0 : i32
    return %c0_i32, %arg0, %c0_i32_0 : i32, i32, i32
  }
}

</mosaic_0001>

<llo_original>
// kernel: tpu_custom_call.1
$region0: #{tpu_custom_call.1}
  #allocation0 [shape = 'u32[]', space=smem, size = 0x4, offset = 0x4, fixed_abs, tag = 'smem constant byte address 0x4 - core index']
  #allocation1 [shape = 'u32[72,128]{1,0:T(1,128)}', space=vmem, size = 0x9000, scoped, tag = 'internal scratch']
  #allocation2 [shape = 'f32[64,512]{1,0:T(8,128)}', space=vmem, size = 0x20000, scoped, tag = 'scratch operand']
  %s0 = inlined_call_operand.vmem [shape: s32[8,1], index: 0, kind: input, shape index: {}]
  %s1 = inlined_call_operand.vmem [shape: bf16[8,8,128], index: 1, kind: input, shape index: {}]
  %s2 = inlined_call_operand.hbm [shape: f32[2,8,128], index: 2, kind: input, shape index: {}, may-alias: {2,9}]
  %s3 = inlined_call_operand.hbm [shape: f32[2,8,128], index: 3, kind: input, shape index: {}, may-alias: {3,10}]
  %s4 = inlined_call_operand.hbm [shape: bf16[128,512], index: 4, kind: input, shape index: {}]
  %s5 = inlined_call_operand.hbm [shape: bf16[1,128,512], index: 5, kind: input, shape index: {}]
  %s6 = inlined_call_operand.hbm [shape: bf16[2,128,512], index: 6, kind: input, shape index: {}]
  %s7 = inlined_call_operand.vmem [shape: f32[2,1,512], index: 7, kind: input, shape index: {}]
  %s8 = inlined_call_operand.hbm [shape: bf16[8,8,128], index: 8, kind: output, shape index: {0}]
  %s9 = inlined_call_operand.hbm [shape: f32[2,8,128], index: 9, kind: output, shape index: {1}, may-alias: {2,9}]
  %s10 = inlined_call_operand.hbm [shape: f32[2,8,128], index: 10, kind: output, shape index: {2}, may-alias: {3,10}]
  %11 = xla_tuple %s8, %s9, %s10
  %s12 = sld [smem:[#allocation0]]
  $region89: #{tpu_custom_call.1} parent=0
    _
  %s14 = ssub.s32 1, %s12
  %s15 = scalar_select 0, %s14, %s12
  $region1: #{tpu_custom_call.1} parent=0
    #allocation3 [shape = 'u8[8192]{0}', space=vmem, size = 0x2000, scoped, tag = 'input window, operand 2, single buffered']
    #allocation4 [shape = 's32[1]{0}', space=sflag, size = 0x4, scoped, tag = 'scoped memory for tpu_custom_call.1']
    #allocation5 [shape = 's32[1]{0}', space=sflag, size = 0x4, scoped, tag = 'scoped memory for tpu_custom_call.1']
    #allocation6 [shape = 'u8[8192]{0}', space=vmem, size = 0x2000, scoped, tag = 'input window, operand 3, single buffered']
    #allocation7 [shape = 's32[1]{0}', space=sflag, size = 0x4, scoped, tag = 'scoped memory for tpu_custom_call.1']
    #allocation8 [shape = 'u8[131072]{0}', space=vmem, size = 0x20000, scoped, tag = 'input window, operand 4, single buffered']
    #allocation9 [shape = 'u8[131072]{0}', space=vmem, size = 0x20000, scoped, tag = 'input window, operand 5, single buffered']
    #allocation10 [shape = 's32[1]{0}', space=sflag, size = 0x4, scoped, tag = 'scoped memory for tpu_custom_call.1']
    #allocation11 [shape = 'u8[262144]{0}', space=vmem, size = 0x40000, scoped, tag = 'input window, operand 6, single buffered']
    #allocation12 [shape = 'u8[16384]{0}', space=vmem, size = 0x4000, scoped, tag = 'output window, operand 0, single buffered']
    #allocation13 [shape = 'u8[8192]{0}', space=vmem, size = 0x2000, scoped, tag = 'output window, operand 1, single buffered']
    #allocation14 [shape = 's32[1]{0}', space=sflag, size = 0x4, scoped, tag = 'scoped memory for tpu_custom_call.1']
    #allocation15 [shape = 'u8[8192]{0}', space=vmem, size = 0x2000, scoped, tag = 'output window, operand 2, single buffered']
    %16 = vsyncpa [#allocation4], 0
    %17 = vsyncpa [#allocation7], 0
    %18 = vsyncpa [#allocation10], 0
    %19 = vsyncpa [#allocation5], 0
    %20 = vsyncpa [#allocation14], 0
    // Predicated region
    $region2: #{tpu_custom_call.1} parent=1 // pred_check
      _
    $region3: #{tpu_custom_call.1} parent=1 // pred_check_branch
      %22 = sbr.rel (0) target = $region5
    $region4: #{tpu_custom_call.1} parent=1 // pred_region
      _
    $region5: #{tpu_custom_call.1} parent=1 // pred_fallthru
      _
    // Predicated region
    $region6: #{tpu_custom_call.1} parent=1 // pred_check
      _
    $region7: #{tpu_custom_call.1} parent=1 // pred_check_branch
      %24 = sbr.rel (0) target = $region9
    $region8: #{tpu_custom_call.1} parent=1 // pred_region
      _
    $region9: #{tpu_custom_call.1} parent=1 // pred_fallthru
      _
    // Predicated region
    $region10: #{tpu_custom_call.1} parent=1 // pred_check
      _
    $region11: #{tpu_custom_call.1} parent=1 // pred_check_branch
      %26 = sbr.rel (0) target = $region13
    $region12: #{tpu_custom_call.1} parent=1 // pred_region
      %28 = vsyncadd [#allocation4], 0
      %s29 = sshll.u32 %s2, 4
      %s30 = int_to_ptr.hbm [resolvable:$true] %s29
      %s31 = sshll.u32 [#allocation3], 4
      %s32 = int_to_ptr.vmem [resolvable:$true] %s31
      %37 = dma.hbm_to_vmem [thread:$0]  %s30, 256, %s32, [#allocation4], 128, 128, 8
    $region13: #{tpu_custom_call.1} parent=1 // pred_fallthru
      _
    // Predicated region
    $region14: #{tpu_custom_call.1} parent=1 // pred_check
      _
    $region15: #{tpu_custom_call.1} parent=1 // pred_check_branch
      %39 = sbr.rel (0) target = $region17
    $region16: #{tpu_custom_call.1} parent=1 // pred_region
      %41 = vsyncadd [#allocation7], 0
      %s42 = sshll.u32 %s3, 4
      %s43 = int_to_ptr.hbm [resolvable:$true] %s42
      %s44 = sshll.u32 [#allocation6], 4
      %s45 = int_to_ptr.vmem [resolvable:$true] %s44
      %50 = dma.hbm_to_vmem [thread:$0]  %s43, 256, %s45, [#allocation7], 128, 128, 8
    $region17: #{tpu_custom_call.1} parent=1 // pred_fallthru
      _
    // Predicated region
    $region18: #{tpu_custom_call.1} parent=1 // pred_check
      _
    $region19: #{tpu_custom_call.1} parent=1 // pred_check_branch
      %52 = sbr.rel (0) target = $region21
    $region20: #{tpu_custom_call.1} parent=1 // pred_region
      %54 = vsyncadd [#allocation7], 0
      %s55 = sshll.u32 %s4, 4
      %s56 = int_to_ptr.hbm [resolvable:$true] %s55
      %s57 = sshll.u32 [#allocation8], 4
      %s58 = int_to_ptr.vmem [resolvable:$true] %s57
      %63 = dma.hbm_to_vmem [thread:$0]  %s56, 4096, %s58, [#allocation7], 256, 256, 16
    $region21: #{tpu_custom_call.1} parent=1 // pred_fallthru
      _
    // Predicated region
    $region22: #{tpu_custom_call.1} parent=1 // pred_check
      _
    $region23: #{tpu_custom_call.1} parent=1 // pred_check_branch
      %65 = sbr.rel (0) target = $region25
    $region24: #{tpu_custom_call.1} parent=1 // pred_region
      %67 = vsyncadd [#allocation10], 0
      %s68 = sshll.u32 %s5, 4
      %s69 = int_to_ptr.hbm [resolvable:$true] %s68
      %s70 = sshll.u32 [#allocation9], 4
      %s71 = int_to_ptr.vmem [resolvable:$true] %s70
      %76 = dma.hbm_to_vmem [thread:$0]  %s69, 4096, %s71, [#allocation10], 256, 256, 16
    $region25: #{tpu_custom_call.1} parent=1 // pred_fallthru
      _
    // Predicated region
    $region26: #{tpu_custom_call.1} parent=1 // pred_check
      _
    $region27: #{tpu_custom_call.1} parent=1 // pred_check_branch
      %78 = sbr.rel (0) target = $region29
    $region28: #{tpu_custom_call.1} parent=1 // pred_region
      %80 = vsyncadd [#allocation10], 0
      %s81 = sshll.u32 %s6, 4
      %s82 = int_to_ptr.hbm [resolvable:$true] %s81
      %s83 = sshll.u32 [#allocation11], 4
      %s84 = int_to_ptr.vmem [resolvable:$true] %s83
      %89 = dma.hbm_to_vmem [thread:$0]  %s82, 8192, %s84, [#allocation10], 256, 256, 16
    $region29: #{tpu_custom_call.1} parent=1 // pred_fallthru
      _
    // Predicated region
    $region30: #{tpu_custom_call.1} parent=1 // pred_check
      _
    $region31: #{tpu_custom_call.1} parent=1 // pred_check_branch
      %91 = sbr.rel (0) target = $region33
    $region32: #{tpu_custom_call.1} parent=1 // pred_region
      _
    $region33: #{tpu_custom_call.1} parent=1 // pred_fallthru
      _
    // Predicated region
    $region34: #{tpu_custom_call.1} parent=1 // pred_check
      _
    $region35: #{tpu_custom_call.1} parent=1 // pred_check_branch
      %93 = sbr.rel (0) target = $region37
    $region36: #{tpu_custom_call.1} parent=1 // pred_region
      %95 = dma.done [#allocation4], 256
    $region37: #{tpu_custom_call.1} parent=1 // pred_fallthru
      _
    // Predicated region
    $region38: #{tpu_custom_call.1} parent=1 // pred_check
      _
    $region39: #{tpu_custom_call.1} parent=1 // pred_check_branch
      %97 = sbr.rel (0) target = $region41
    $region40: #{tpu_custom_call.1} parent=1 // pred_region
      %99 = dma.done [#allocation7], 256
    $region41: #{tpu_custom_call.1} parent=1 // pred_fallthru
      _
    // Predicated region
    $region42: #{tpu_custom_call.1} parent=1 // pred_check
      _
    $region43: #{tpu_custom_call.1} parent=1 // pred_check_branch
      %101 = sbr.rel (0) target = $region45
    $region44: #{tpu_custom_call.1} parent=1 // pred_region
      %103 = dma.done [#allocation7], 4096
    $region45: #{tpu_custom_call.1} parent=1 // pred_fallthru
      _
    // Predicated region
    $region46: #{tpu_custom_call.1} parent=1 // pred_check
      _
    $region47: #{tpu_custom_call.1} parent=1 // pred_check_branch
      %105 = sbr.rel (0) target = $region49
    $region48: #{tpu_custom_call.1} parent=1 // pred_region
      %107 = dma.done [#allocation10], 4096
    $region49: #{tpu_custom_call.1} parent=1 // pred_fallthru
      _
    // Predicated region
    $region50: #{tpu_custom_call.1} parent=1 // pred_check
      _
    $region51: #{tpu_custom_call.1} parent=1 // pred_check_branch
      %109 = sbr.rel (0) target = $region53
    $region52: #{tpu_custom_call.1} parent=1 // pred_region
      %111 = dma.done [#allocation10], 8192
    $region53: #{tpu_custom_call.1} parent=1 // pred_fallthru
      _
    %p112 = scmp.eq.s32.totalorder 0, 0
    // Predicated region
    $region54: #{tpu_custom_call.1} parent=1 // pred_check
      %p113 = pneg %p112
    $region55: #{tpu_custom_call.1} parent=1 // pred_check_branch
      %115 = sbr.rel (%p113) target = $region57
    $region56: #{tpu_custom_call.1} parent=1 // pred_region
      %v116 = vld [vmem:[#allocation3] sm:$0xff]
      %v117 = vld [vmem:[#allocation3 + $0x8] sm:$0xff]
      %118 = vst [vmem:[#allocation13] sm:$0xff] %v116
      %119 = vst [vmem:[#allocation13 + $0x8] sm:$0xff] %v117
      %v120 = vld [vmem:[#allocation6] sm:$0xff]
      %v121 = vld [vmem:[#allocation6 + $0x8] sm:$0xff]
      %122 = vst [vmem:[#allocation15] sm:$0xff] %v120
      %123 = vst [vmem:[#allocation15 + $0x8] sm:$0xff] %v121
    $region57: #{tpu_custom_call.1} parent=1 // pred_fallthru
      _
    %v124 = vld [vmem:[%s1] sm:$0xf]
    %v125 = vld [vmem:[%s1 + $0x4] sm:$0xf]
    %v126 = vld [vmem:[%s1 + $0x8] sm:$0xf]
    %v127 = vld [vmem:[%s1 + $0xc] sm:$0xf]
    %v128 = vld [vmem:[%s1 + $0x10] sm:$0xf]
    %v129 = vld [vmem:[%s1 + $0x14] sm:$0xf]
    %v130 = vld [vmem:[%s1 + $0x18] sm:$0xf]
    %v131 = vld [vmem:[%s1 + $0x1c] sm:$0xf]
    %v132 = vld [vmem:[#allocation8] sm:$0xff]
    %v133 = vld [vmem:[#allocation8 + $0x8] sm:$0xff]
    %v134 = vld [vmem:[#allocation8 + $0x10] sm:$0xff]
    %v135 = vld [vmem:[#allocation8 + $0x18] sm:$0xff]
    %v136 = vld [vmem:[#allocation8 + $0x20] sm:$0xff]
    %v137 = vld [vmem:[#allocation8 + $0x28] sm:$0xff]
    %v138 = vld [vmem:[#allocation8 + $0x30] sm:$0xff]
    %v139 = vld [vmem:[#allocation8 + $0x38] sm:$0xff]
    %v140 = vld [vmem:[#allocation8 + $0x40] sm:$0xff]
    %v141 = vld [vmem:[#allocation8 + $0x48] sm:$0xff]
    %v142 = vld [vmem:[#allocation8 + $0x50] sm:$0xff]
    %v143 = vld [vmem:[#allocation8 + $0x58] sm:$0xff]
    %v144 = vld [vmem:[#allocation8 + $0x60] sm:$0xff]
    %v145 = vld [vmem:[#allocation8 + $0x68] sm:$0xff]
    %v146 = vld [vmem:[#allocation8 + $0x70] sm:$0xff]
    %v147 = vld [vmem:[#allocation8 + $0x78] sm:$0xff]
    %v148 = vld [vmem:[#allocation8 + $0x80] sm:$0xff]
    %v149 = vld [vmem:[#allocation8 + $0x88] sm:$0xff]
    %v150 = vld [vmem:[#allocation8 + $0x90] sm:$0xff]
    %v151 = vld [vmem:[#allocation8 + $0x98] sm:$0xff]
    %v152 = vld [vmem:[#allocation8 + $0xa0] sm:$0xff]
    %v153 = vld [vmem:[#allocation8 + $0xa8] sm:$0xff]
    %v154 = vld [vmem:[#allocation8 + $0xb0] sm:$0xff]
    %v155 = vld [vmem:[#allocation8 + $0xb8] sm:$0xff]
    %v156 = vld [vmem:[#allocation8 + $0xc0] sm:$0xff]
    %v157 = vld [vmem:[#allocation8 + $0xc8] sm:$0xff]
    %v158 = vld [vmem:[#allocation8 + $0xd0] sm:$0xff]
    %v159 = vld [vmem:[#allocation8 + $0xd8] sm:$0xff]
    %v160 = vld [vmem:[#allocation8 + $0xe0] sm:$0xff]
    %v161 = vld [vmem:[#allocation8 + $0xe8] sm:$0xff]
    %v162 = vld [vmem:[#allocation8 + $0xf0] sm:$0xff]
    %v163 = vld [vmem:[#allocation8 + $0xf8] sm:$0xff]
    %v164 = vld [vmem:[%s7] sm:$0xf]
    %v166 = vperm.slane %v164, 0
    %v167 = vperm.slane %v164, 1
    %v168 = vperm.slane %v164, 2
    %v169 = vperm.slane %v164, 3
    %v182 = vunpack.c.l.b16 %v124
    %v183 = vunpack.c.l.b16 %v125
    %v184 = vunpack.c.l.b16 %v126
    %v185 = vunpack.c.l.b16 %v127
    %v186 = vunpack.c.l.b16 %v128
    %v187 = vunpack.c.l.b16 %v129
    %v188 = vunpack.c.l.b16 %v130
    %v189 = vunpack.c.l.b16 %v131
    %v190 = vpack.c.b16 %v183, %v182
    %v191 = vpack.c.b16 %v185, %v184
    %v192 = vpack.c.b16 %v187, %v186
    %v193 = vpack.c.b16 %v189, %v188
    %v230 = vunpack.c.l.b16 %v132
    %v231 = vunpack.c.h.b16 %v132
    %v232 = vunpack.c.l.b16 %v133
    %v233 = vunpack.c.h.b16 %v133
    %v234 = vunpack.c.l.b16 %v134
    %v235 = vunpack.c.h.b16 %v134
    %v236 = vunpack.c.l.b16 %v135
    %v237 = vunpack.c.h.b16 %v135
    %v238 = vunpack.c.l.b16 %v136
    %v239 = vunpack.c.h.b16 %v136
    %v240 = vunpack.c.l.b16 %v137
    %v241 = vunpack.c.h.b16 %v137
    %v242 = vunpack.c.l.b16 %v138
    %v243 = vunpack.c.h.b16 %v138
    %v244 = vunpack.c.l.b16 %v139
    %v245 = vunpack.c.h.b16 %v139
    %v246 = vunpack.c.l.b16 %v140
    %v247 = vunpack.c.h.b16 %v140
    %v248 = vunpack.c.l.b16 %v141
    %v249 = vunpack.c.h.b16 %v141
    %v250 = vunpack.c.l.b16 %v142
    %v251 = vunpack.c.h.b16 %v142
    %v252 = vunpack.c.l.b16 %v143
    %v253 = vunpack.c.h.b16 %v143
    %v254 = vunpack.c.l.b16 %v144
    %v255 = vunpack.c.h.b16 %v144
    %v256 = vunpack.c.l.b16 %v145
    %v257 = vunpack.c.h.b16 %v145
    %v258 = vunpack.c.l.b16 %v146
    %v259 = vunpack.c.h.b16 %v146
    %v260 = vunpack.c.l.b16 %v147
    %v261 = vunpack.c.h.b16 %v147
    %v262 = vunpack.c.l.b16 %v148
    %v263 = vunpack.c.h.b16 %v148
    %v264 = vunpack.c.l.b16 %v149
    %v265 = vunpack.c.h.b16 %v149
    %v266 = vunpack.c.l.b16 %v150
    %v267 = vunpack.c.h.b16 %v150
    %v268 = vunpack.c.l.b16 %v151
    %v269 = vunpack.c.h.b16 %v151
    %v270 = vunpack.c.l.b16 %v152
    %v271 = vunpack.c.h.b16 %v152
    %v272 = vunpack.c.l.b16 %v153
    %v273 = vunpack.c.h.b16 %v153
    %v274 = vunpack.c.l.b16 %v154
    %v275 = vunpack.c.h.b16 %v154
    %v276 = vunpack.c.l.b16 %v155
    %v277 = vunpack.c.h.b16 %v155
    %v278 = vunpack.c.l.b16 %v156
    %v279 = vunpack.c.h.b16 %v156
    %v280 = vunpack.c.l.b16 %v157
    %v281 = vunpack.c.h.b16 %v157
    %v282 = vunpack.c.l.b16 %v158
    %v283 = vunpack.c.h.b16 %v158
    %v284 = vunpack.c.l.b16 %v159
    %v285 = vunpack.c.h.b16 %v159
    %v286 = vunpack.c.l.b16 %v160
    %v287 = vunpack.c.h.b16 %v160
    %v288 = vunpack.c.l.b16 %v161
    %v289 = vunpack.c.h.b16 %v161
    %v290 = vunpack.c.l.b16 %v162
    %v291 = vunpack.c.h.b16 %v162
    %v292 = vunpack.c.l.b16 %v163
    %v293 = vunpack.c.h.b16 %v163
    %v294 = vpack.c.b16 %v234, %v230
    %v295 = vpack.c.b16 %v235, %v231
    %v296 = vpack.c.b16 %v236, %v232
    %v297 = vpack.c.b16 %v237, %v233
    %v298 = vpack.c.b16 %v242, %v238
    %v299 = vpack.c.b16 %v243, %v239
    %v300 = vpack.c.b16 %v244, %v240
    %v301 = vpack.c.b16 %v245, %v241
    %v302 = vpack.c.b16 %v250, %v246
    %v303 = vpack.c.b16 %v251, %v247
    %v304 = vpack.c.b16 %v252, %v248
    %v305 = vpack.c.b16 %v253, %v249
    %v306 = vpack.c.b16 %v258, %v254
    %v307 = vpack.c.b16 %v259, %v255
    %v308 = vpack.c.b16 %v260, %v256
    %v309 = vpack.c.b16 %v261, %v257
    %v310 = vpack.c.b16 %v266, %v262
    %v311 = vpack.c.b16 %v267, %v263
    %v312 = vpack.c.b16 %v268, %v264
    %v313 = vpack.c.b16 %v269, %v265
    %v314 = vpack.c.b16 %v274, %v270
    %v315 = vpack.c.b16 %v275, %v271
    %v316 = vpack.c.b16 %v276, %v272
    %v317 = vpack.c.b16 %v277, %v273
    %v318 = vpack.c.b16 %v282, %v278
    %v319 = vpack.c.b16 %v283, %v279
    %v320 = vpack.c.b16 %v284, %v280
    %v321 = vpack.c.b16 %v285, %v281
    %v322 = vpack.c.b16 %v290, %v286
    %v323 = vpack.c.b16 %v291, %v287
    %v324 = vpack.c.b16 %v292, %v288
    %v325 = vpack.c.b16 %v293, %v289
    %358 = vmatpush.bf16.msra.mxu0 %v322
    %359 = vmatpush.bf16.msra.mxu0 %v318
    %360 = vmatpush.bf16.msra.mxu0 %v314
    %361 = vmatpush.bf16.msra.mxu0 %v310
    %362 = vmatpush.bf16.msra.mxu0 %v306
    %363 = vmatpush.bf16.msra.mxu0 %v302
    %364 = vmatpush.bf16.msra.mxu0 %v298
    %365 = vmatpush.bf16.msra.mxu0 %v294
    %366 = vmatmul.bf16.gmra.mxu0 %v190
    %v367 = vpop.f32.mrf.mxu0
    %v368 = vadd.f32 %v166, %v367
    %v369 = vpop.f32.mrf.mxu0
    %v370 = vadd.f32 %v166, %v369
    %371 = vmatmul.bf16.gmra.mxu0 %v191
    %v372 = vpop.f32.mrf.mxu0
    %v373 = vadd.f32 %v166, %v372
    %v374 = vpop.f32.mrf.mxu0
    %v375 = vadd.f32 %v166, %v374
    %376 = vmatmul.bf16.gmra.mxu0 %v192
    %v377 = vpop.f32.mrf.mxu0
    %v378 = vadd.f32 %v166, %v377
    %v379 = vpop.f32.mrf.mxu0
    %v380 = vadd.f32 %v166, %v379
    %381 = vmatmul.bf16.gmra.mxu0 %v193
    %v382 = vpop.f32.mrf.mxu0
    %v383 = vadd.f32 %v166, %v382
    %v384 = vpop.f32.mrf.mxu0
    %v385 = vadd.f32 %v166, %v384
    %386 = vdwg.mxu0
    %387 = vmatpush.bf16.msra.mxu0 %v323
    %388 = vmatpush.bf16.msra.mxu0 %v319
    %389 = vmatpush.bf16.msra.mxu0 %v315
    %390 = vmatpush.bf16.msra.mxu0 %v311
    %391 = vmatpush.bf16.msra.mxu0 %v307
    %392 = vmatpush.bf16.msra.mxu0 %v303
    %393 = vmatpush.bf16.msra.mxu0 %v299
    %394 = vmatpush.bf16.msra.mxu0 %v295
    %395 = vmatmul.bf16.gmra.mxu0 %v190
    %v396 = vpop.f32.mrf.mxu0
    %v397 = vadd.f32 %v167, %v396
    %v398 = vpop.f32.mrf.mxu0
    %v399 = vadd.f32 %v167, %v398
    %400 = vmatmul.bf16.gmra.mxu0 %v191
    %v401 = vpop.f32.mrf.mxu0
    %v402 = vadd.f32 %v167, %v401
    %v403 = vpop.f32.mrf.mxu0
    %v404 = vadd.f32 %v167, %v403
    %405 = vmatmul.bf16.gmra.mxu0 %v192
    %v406 = vpop.f32.mrf.mxu0
    %v407 = vadd.f32 %v167, %v406
    %v408 = vpop.f32.mrf.mxu0
    %v409 = vadd.f32 %v167, %v408
    %410 = vmatmul.bf16.gmra.mxu0 %v193
    %v411 = vpop.f32.mrf.mxu0
    %v412 = vadd.f32 %v167, %v411
    %v413 = vpop.f32.mrf.mxu0
    %v414 = vadd.f32 %v167, %v413
    %415 = vdwg.mxu0
    %416 = vmatpush.bf16.msra.mxu0 %v324
    %417 = vmatpush.bf16.msra.mxu0 %v320
    %418 = vmatpush.bf16.msra.mxu0 %v316
    %419 = vmatpush.bf16.msra.mxu0 %v312
    %420 = vmatpush.bf16.msra.mxu0 %v308
    %421 = vmatpush.bf16.msra.mxu0 %v304
    %422 = vmatpush.bf16.msra.mxu0 %v300
    %423 = vmatpush.bf16.msra.mxu0 %v296
    %424 = vmatmul.bf16.gmra.mxu0 %v190
    %v425 = vpop.f32.mrf.mxu0
    %v426 = vadd.f32 %v168, %v425
    %v427 = vpop.f32.mrf.mxu0
    %v428 = vadd.f32 %v168, %v427
    %429 = vmatmul.bf16.gmra.mxu0 %v191
    %v430 = vpop.f32.mrf.mxu0
    %v431 = vadd.f32 %v168, %v430
    %v432 = vpop.f32.mrf.mxu0
    %v433 = vadd.f32 %v168, %v432
    %434 = vmatmul.bf16.gmra.mxu0 %v192
    %v435 = vpop.f32.mrf.mxu0
    %v436 = vadd.f32 %v168, %v435
    %v437 = vpop.f32.mrf.mxu0
    %v438 = vadd.f32 %v168, %v437
    %439 = vmatmul.bf16.gmra.mxu0 %v193
    %v440 = vpop.f32.mrf.mxu0
    %v441 = vadd.f32 %v168, %v440
    %v442 = vpop.f32.mrf.mxu0
    %v443 = vadd.f32 %v168, %v442
    %444 = vdwg.mxu0
    %445 = vmatpush.bf16.msra.mxu0 %v325
    %446 = vmatpush.bf16.msra.mxu0 %v321
    %447 = vmatpush.bf16.msra.mxu0 %v317
    %448 = vmatpush.bf16.msra.mxu0 %v313
    %449 = vmatpush.bf16.msra.mxu0 %v309
    %450 = vmatpush.bf16.msra.mxu0 %v305
    %451 = vmatpush.bf16.msra.mxu0 %v301
    %452 = vmatpush.bf16.msra.mxu0 %v297
    %453 = vmatmul.bf16.gmra.mxu0 %v190
    %v454 = vpop.f32.mrf.mxu0
    %v455 = vadd.f32 %v169, %v454
    %v456 = vpop.f32.mrf.mxu0
    %v457 = vadd.f32 %v169, %v456
    %458 = vmatmul.bf16.gmra.mxu0 %v191
    %v459 = vpop.f32.mrf.mxu0
    %v460 = vadd.f32 %v169, %v459
    %v461 = vpop.f32.mrf.mxu0
    %v462 = vadd.f32 %v169, %v461
    %463 = vmatmul.bf16.gmra.mxu0 %v192
    %v464 = vpop.f32.mrf.mxu0
    %v465 = vadd.f32 %v169, %v464
    %v466 = vpop.f32.mrf.mxu0
    %v467 = vadd.f32 %v169, %v466
    %468 = vmatmul.bf16.gmra.mxu0 %v193
    %v469 = vpop.f32.mrf.mxu0
    %v470 = vadd.f32 %v169, %v469
    %v471 = vpop.f32.mrf.mxu0
    %v472 = vadd.f32 %v169, %v471
    %473 = vdwg.mxu0
    %474 = vst [vmem:[#allocation2] sm:$0xff] %v368
    %475 = vst [vmem:[#allocation2 + $0x8] sm:$0xff] %v397
    %476 = vst [vmem:[#allocation2 + $0x10] sm:$0xff] %v426
    %477 = vst [vmem:[#allocation2 + $0x18] sm:$0xff] %v455
    %478 = vst [vmem:[#allocation2 + $0x20] sm:$0xff] %v370
    %479 = vst [vmem:[#allocation2 + $0x28] sm:$0xff] %v399
    %480 = vst [vmem:[#allocation2 + $0x30] sm:$0xff] %v428
    %481 = vst [vmem:[#allocation2 + $0x38] sm:$0xff] %v457
    %482 = vst [vmem:[#allocation2 + $0x40] sm:$0xff] %v373
    %483 = vst [vmem:[#allocation2 + $0x48] sm:$0xff] %v402
    %484 = vst [vmem:[#allocation2 + $0x50] sm:$0xff] %v431
    %485 = vst [vmem:[#allocation2 + $0x58] sm:$0xff] %v460
    %486 = vst [vmem:[#allocation2 + $0x60] sm:$0xff] %v375
    %487 = vst [vmem:[#allocation2 + $0x68] sm:$0xff] %v404
    %488 = vst [vmem:[#allocation2 + $0x70] sm:$0xff] %v433
    %489 = vst [vmem:[#allocation2 + $0x78] sm:$0xff] %v462
    %490 = vst [vmem:[#allocation2 + $0x80] sm:$0xff] %v378
    %491 = vst [vmem:[#allocation2 + $0x88] sm:$0xff] %v407
    %492 = vst [vmem:[#allocation2 + $0x90] sm:$0xff] %v436
    %493 = vst [vmem:[#allocation2 + $0x98] sm:$0xff] %v465
    %494 = vst [vmem:[#allocation2 + $0xa0] sm:$0xff] %v380
    %495 = vst [vmem:[#allocation2 + $0xa8] sm:$0xff] %v409
    %496 = vst [vmem:[#allocation2 + $0xb0] sm:$0xff] %v438
    %497 = vst [vmem:[#allocation2 + $0xb8] sm:$0xff] %v467
    %498 = vst [vmem:[#allocation2 + $0xc0] sm:$0xff] %v383
    %499 = vst [vmem:[#allocation2 + $0xc8] sm:$0xff] %v412
    %500 = vst [vmem:[#allocation2 + $0xd0] sm:$0xff] %v441
    %501 = vst [vmem:[#allocation2 + $0xd8] sm:$0xff] %v470
    %502 = vst [vmem:[#allocation2 + $0xe0] sm:$0xff] %v385
    %503 = vst [vmem:[#allocation2 + $0xe8] sm:$0xff] %v414
    %504 = vst [vmem:[#allocation2 + $0xf0] sm:$0xff] %v443
    %505 = vst [vmem:[#allocation2 + $0xf8] sm:$0xff] %v472
    %v506 = vld [vmem:[%s0] sm:$0xff]
    %s507 = scalar_lea.vmem %s7, 4
    %v508 = vld [vmem:[%s507] sm:$0xf]
    %v510 = vperm.slane %v508, 0
    %v511 = vperm.slane %v508, 1
    %v512 = vperm.slane %v508, 2
    %v513 = vperm.slane %v508, 3
    %v518 = vld [vmem:[#allocation13] sm:$0xff]
    %s519 = scalar_lea.vmem [#allocation13], 8
    %v520 = vld [vmem:[%s519] sm:$0xff]
    %v521 = vld [vmem:[#allocation15] sm:$0xff]
    %s522 = scalar_lea.vmem [#allocation15], 8
    %v523 = vld [vmem:[%s522] sm:$0xff]
    loop: start=0, step=1, limit=2
    $region58: #{tpu_custom_call.1} parent=1 // loop_pre_header
      _
    $region59: #{tpu_custom_call.1} parent=1 // loop_header
      %s525 = sphi 0, %s529
      %p526 = scmp.ge.s32.totalorder %s525, 2
      %v530 = vphi %v518, %v3555
      %v531 = vphi %v520, %v4114
      %v532 = vphi %v521, %v3556
      %v533 = vphi %v523, %v4115
    $region60: #{tpu_custom_call.1} parent=1 // loop_header_branch
      %528 = sbr.rel (%p526) target = $region64
    $region61: #{tpu_custom_call.1} parent=1 // loop_body
      %s534 = smul.u32 %s525, 4
      %s535 = smul.u32 0, 8
      %s536 = sadd.s32 %s535, %s534
      %v537 = vstv %s536
      %vm538 = vcmp.lt.s32.totalorder %v537, %v506
      %v539 = vsel %vm538, 1, 0
      %540 = vset.pattern.permute.xlu0 0
      %541 = vperm.xlu0 %540, %v539
      %v542 = vpop.permute.xlu0 %541
      %vm543 = vcmp.eq.s32.totalorder %v542, 1
      %v544 = vpack.c.bf16 %v530, %v530
      %s545 = smul.u32 %s525, 32
      %s546 = sshra.s32 %s545, 3
      %s547 = sand.u32 %s545, 7
      %s548 = smul.u32 %s546, 4
      %s549 = smul.addr %s548, 8
      %s550 = scalar_lea.vmem [#allocation2], %s549
      %v551 = vld [vmem:[%s550] sm:$0xff]
      %v552 = vld [vmem:[%s550 + $0x8] sm:$0xff]
      %v553 = vld [vmem:[%s550 + $0x10] sm:$0xff]
      %v554 = vld [vmem:[%s550 + $0x18] sm:$0xff]
      %v555 = vld [vmem:[#allocation11] sm:$0xff]
      %v556 = vld [vmem:[#allocation11 + $0x8] sm:$0xff]
      %v557 = vld [vmem:[#allocation11 + $0x10] sm:$0xff]
      %v558 = vld [vmem:[#allocation11 + $0x18] sm:$0xff]
      %v559 = vld [vmem:[#allocation11 + $0x20] sm:$0xff]
      %v560 = vld [vmem:[#allocation11 + $0x28] sm:$0xff]
      %v561 = vld [vmem:[#allocation11 + $0x30] sm:$0xff]
      %v562 = vld [vmem:[#allocation11 + $0x38] sm:$0xff]
      %v563 = vld [vmem:[#allocation11 + $0x40] sm:$0xff]
      %v564 = vld [vmem:[#allocation11 + $0x48] sm:$0xff]
      %v565 = vld [vmem:[#allocation11 + $0x50] sm:$0xff]
      %v566 = vld [vmem:[#allocation11 + $0x58] sm:$0xff]
      %v567 = vld [vmem:[#allocation11 + $0x60] sm:$0xff]
      %v568 = vld [vmem:[#allocation11 + $0x68] sm:$0xff]
      %v569 = vld [vmem:[#allocation11 + $0x70] sm:$0xff]
      %v570 = vld [vmem:[#allocation11 + $0x78] sm:$0xff]
      %v571 = vld [vmem:[#allocation11 + $0x80] sm:$0xff]
      %v572 = vld [vmem:[#allocation11 + $0x88] sm:$0xff]
      %v573 = vld [vmem:[#allocation11 + $0x90] sm:$0xff]
      %v574 = vld [vmem:[#allocation11 + $0x98] sm:$0xff]
      %v575 = vld [vmem:[#allocation11 + $0xa0] sm:$0xff]
      %v576 = vld [vmem:[#allocation11 + $0xa8] sm:$0xff]
      %v577 = vld [vmem:[#allocation11 + $0xb0] sm:$0xff]
      %v578 = vld [vmem:[#allocation11 + $0xb8] sm:$0xff]
      %v579 = vld [vmem:[#allocation11 + $0xc0] sm:$0xff]
      %v580 = vld [vmem:[#allocation11 + $0xc8] sm:$0xff]
      %v581 = vld [vmem:[#allocation11 + $0xd0] sm:$0xff]
      %v582 = vld [vmem:[#allocation11 + $0xd8] sm:$0xff]
      %v583 = vld [vmem:[#allocation11 + $0xe0] sm:$0xff]
      %v584 = vld [vmem:[#allocation11 + $0xe8] sm:$0xff]
      %v585 = vld [vmem:[#allocation11 + $0xf0] sm:$0xff]
      %v586 = vld [vmem:[#allocation11 + $0xf8] sm:$0xff]
      %v619 = vunpack.c.l.b16 %v555
      %v620 = vunpack.c.h.b16 %v555
      %v621 = vunpack.c.l.b16 %v556
      %v622 = vunpack.c.h.b16 %v556
      %v623 = vunpack.c.l.b16 %v557
      %v624 = vunpack.c.h.b16 %v557
      %v625 = vunpack.c.l.b16 %v558
      %v626 = vunpack.c.h.b16 %v558
      %v627 = vunpack.c.l.b16 %v559
      %v628 = vunpack.c.h.b16 %v559
      %v629 = vunpack.c.l.b16 %v560
      %v630 = vunpack.c.h.b16 %v560
      %v631 = vunpack.c.l.b16 %v561
      %v632 = vunpack.c.h.b16 %v561
      %v633 = vunpack.c.l.b16 %v562
      %v634 = vunpack.c.h.b16 %v562
      %v635 = vunpack.c.l.b16 %v563
      %v636 = vunpack.c.h.b16 %v563
      %v637 = vunpack.c.l.b16 %v564
      %v638 = vunpack.c.h.b16 %v564
      %v639 = vunpack.c.l.b16 %v565
      %v640 = vunpack.c.h.b16 %v565
      %v641 = vunpack.c.l.b16 %v566
      %v642 = vunpack.c.h.b16 %v566
      %v643 = vunpack.c.l.b16 %v567
      %v644 = vunpack.c.h.b16 %v567
      %v645 = vunpack.c.l.b16 %v568
      %v646 = vunpack.c.h.b16 %v568
      %v647 = vunpack.c.l.b16 %v569
      %v648 = vunpack.c.h.b16 %v569
      %v649 = vunpack.c.l.b16 %v570
      %v650 = vunpack.c.h.b16 %v570
      %v651 = vunpack.c.l.b16 %v571
      %v652 = vunpack.c.h.b16 %v571
      %v653 = vunpack.c.l.b16 %v572
      %v654 = vunpack.c.h.b16 %v572
      %v655 = vunpack.c.l.b16 %v573
      %v656 = vunpack.c.h.b16 %v573
      %v657 = vunpack.c.l.b16 %v574
      %v658 = vunpack.c.h.b16 %v574
      %v659 = vunpack.c.l.b16 %v575
      %v660 = vunpack.c.h.b16 %v575
      %v661 = vunpack.c.l.b16 %v576
      %v662 = vunpack.c.h.b16 %v576
      %v663 = vunpack.c.l.b16 %v577
      %v664 = vunpack.c.h.b16 %v577
      %v665 = vunpack.c.l.b16 %v578
      %v666 = vunpack.c.h.b16 %v578
      %v667 = vunpack.c.l.b16 %v579
      %v668 = vunpack.c.h.b16 %v579
      %v669 = vunpack.c.l.b16 %v580
      %v670 = vunpack.c.h.b16 %v580
      %v671 = vunpack.c.l.b16 %v581
      %v672 = vunpack.c.h.b16 %v581
      %v673 = vunpack.c.l.b16 %v582
      %v674 = vunpack.c.h.b16 %v582
      %v675 = vunpack.c.l.b16 %v583
      %v676 = vunpack.c.h.b16 %v583
      %v677 = vunpack.c.l.b16 %v584
      %v678 = vunpack.c.h.b16 %v584
      %v679 = vunpack.c.l.b16 %v585
      %v680 = vunpack.c.h.b16 %v585
      %v681 = vunpack.c.l.b16 %v586
      %v682 = vunpack.c.h.b16 %v586
      %v683 = vpack.c.b16 %v623, %v619
      %v684 = vpack.c.b16 %v624, %v620
      %v685 = vpack.c.b16 %v625, %v621
      %v686 = vpack.c.b16 %v626, %v622
      %v687 = vpack.c.b16 %v631, %v627
      %v688 = vpack.c.b16 %v632, %v628
      %v689 = vpack.c.b16 %v633, %v629
      %v690 = vpack.c.b16 %v634, %v630
      %v691 = vpack.c.b16 %v639, %v635
      %v692 = vpack.c.b16 %v640, %v636
      %v693 = vpack.c.b16 %v641, %v637
      %v694 = vpack.c.b16 %v642, %v638
      %v695 = vpack.c.b16 %v647, %v643
      %v696 = vpack.c.b16 %v648, %v644
      %v697 = vpack.c.b16 %v649, %v645
      %v698 = vpack.c.b16 %v650, %v646
      %v699 = vpack.c.b16 %v655, %v651
      %v700 = vpack.c.b16 %v656, %v652
      %v701 = vpack.c.b16 %v657, %v653
      %v702 = vpack.c.b16 %v658, %v654
      %v703 = vpack.c.b16 %v663, %v659
      %v704 = vpack.c.b16 %v664, %v660
      %v705 = vpack.c.b16 %v665, %v661
      %v706 = vpack.c.b16 %v666, %v662
      %v707 = vpack.c.b16 %v671, %v667
      %v708 = vpack.c.b16 %v672, %v668
      %v709 = vpack.c.b16 %v673, %v669
      %v710 = vpack.c.b16 %v674, %v670
      %v711 = vpack.c.b16 %v679, %v675
      %v712 = vpack.c.b16 %v680, %v676
      %v713 = vpack.c.b16 %v681, %v677
      %v714 = vpack.c.b16 %v682, %v678
      %747 = vmatpush.bf16.msra.mxu0 %v711
      %748 = vmatpush.bf16.msra.mxu0 %v707
      %749 = vmatpush.bf16.msra.mxu0 %v703
      %750 = vmatpush.bf16.msra.mxu0 %v699
      %751 = vmatpush.bf16.msra.mxu0 %v695
      %752 = vmatpush.bf16.msra.mxu0 %v691
      %753 = vmatpush.bf16.msra.mxu0 %v687
      %754 = vmatpush.bf16.msra.mxu0 %v683
      %755 = vmatmul.bf16.gmra.mxu0 %v544
      %v756 = vpop.f32.mrf.mxu0
      %v757 = vadd.f32 0.0, %v756
      %v758 = vpop.f32.mrf.mxu0
      %759 = vdwg.mxu0
      %760 = vmatpush.bf16.msra.mxu0 %v712
      %761 = vmatpush.bf16.msra.mxu0 %v708
      %762 = vmatpush.bf16.msra.mxu0 %v704
      %763 = vmatpush.bf16.msra.mxu0 %v700
      %764 = vmatpush.bf16.msra.mxu0 %v696
      %765 = vmatpush.bf16.msra.mxu0 %v692
      %766 = vmatpush.bf16.msra.mxu0 %v688
      %767 = vmatpush.bf16.msra.mxu0 %v684
      %768 = vmatmul.bf16.gmra.mxu0 %v544
      %v769 = vpop.f32.mrf.mxu0
      %v770 = vadd.f32 0.0, %v769
      %v771 = vpop.f32.mrf.mxu0
      %772 = vdwg.mxu0
      %773 = vmatpush.bf16.msra.mxu0 %v713
      %774 = vmatpush.bf16.msra.mxu0 %v709
      %775 = vmatpush.bf16.msra.mxu0 %v705
      %776 = vmatpush.bf16.msra.mxu0 %v701
      %777 = vmatpush.bf16.msra.mxu0 %v697
      %778 = vmatpush.bf16.msra.mxu0 %v693
      %779 = vmatpush.bf16.msra.mxu0 %v689
      %780 = vmatpush.bf16.msra.mxu0 %v685
      %781 = vmatmul.bf16.gmra.mxu0 %v544
      %v782 = vpop.f32.mrf.mxu0
      %v783 = vadd.f32 0.0, %v782
      %v784 = vpop.f32.mrf.mxu0
      %785 = vdwg.mxu0
      %786 = vmatpush.bf16.msra.mxu0 %v714
      %787 = vmatpush.bf16.msra.mxu0 %v710
      %788 = vmatpush.bf16.msra.mxu0 %v706
      %789 = vmatpush.bf16.msra.mxu0 %v702
      %790 = vmatpush.bf16.msra.mxu0 %v698
      %791 = vmatpush.bf16.msra.mxu0 %v694
      %792 = vmatpush.bf16.msra.mxu0 %v690
      %793 = vmatpush.bf16.msra.mxu0 %v686
      %794 = vmatmul.bf16.gmra.mxu0 %v544
      %v795 = vpop.f32.mrf.mxu0
      %v796 = vadd.f32 0.0, %v795
      %v797 = vpop.f32.mrf.mxu0
      %798 = vdwg.mxu0
      %v799 = vadd.f32 %v551, %v757
      %v800 = vadd.f32 %v552, %v770
      %v801 = vadd.f32 %v553, %v783
      %v802 = vadd.f32 %v554, %v796
      %v803 = vxor.u32 %v799, 2147483648
      %v804 = vmul.f32 %v803, 1.442695
      %v805 = vpow.pop %v804
      %v806 = vadd.f32 %v805, 1.0
      %v807 = vrcp.pop %v806
      %v808 = vmul.f32 %v806, %v807
      %v809 = vsub.f32 1.0, %v808
      %v810 = vmul.f32 %v807, %v809
      %v811 = vadd.f32 %v807, %v810
      %vm812 = vweird.f32 %v806
      %vm813 = vweird.f32 %v807
      %vm814 = vmor %vm812, %vm813
      %v815 = vsel %vm814, %v807, %v811
      %v816 = vand.u32 2147483647, %v806
      %vm817 = vcmp.eq.f32.partialorder %v816, 8.507059e+37
      %v818 = vand.u32 %v806, 2147483648
      %v819 = vor.u32 1.1754944e-38, %v818
      %v820 = vsel %vm817, %v819, %v815
      %v821 = vmul.f32 1.0, %v820
      %v822 = vxor.u32 %v800, 2147483648
      %v823 = vmul.f32 %v822, 1.442695
      %v824 = vpow.pop %v823
      %v825 = vadd.f32 %v824, 1.0
      %v826 = vrcp.pop %v825
      %v827 = vmul.f32 %v825, %v826
      %v828 = vsub.f32 1.0, %v827
      %v829 = vmul.f32 %v826, %v828
      %v830 = vadd.f32 %v826, %v829
      %vm831 = vweird.f32 %v825
      %vm832 = vweird.f32 %v826
      %vm833 = vmor %vm831, %vm832
      %v834 = vsel %vm833, %v826, %v830
      %v835 = vand.u32 2147483647, %v825
      %vm836 = vcmp.eq.f32.partialorder %v835, 8.507059e+37
      %v837 = vand.u32 %v825, 2147483648
      %v838 = vor.u32 1.1754944e-38, %v837
      %v839 = vsel %vm836, %v838, %v834
      %v840 = vmul.f32 1.0, %v839
      %v841 = vtanh.pop %v801
      %v842 = vxor.u32 %v802, 2147483648
      %v843 = vmul.f32 %v842, 1.442695
      %v844 = vpow.pop %v843
      %v845 = vadd.f32 %v844, 1.0
      %v846 = vrcp.pop %v845
      %v847 = vmul.f32 %v845, %v846
      %v848 = vsub.f32 1.0, %v847
      %v849 = vmul.f32 %v846, %v848
      %v850 = vadd.f32 %v846, %v849
      %vm851 = vweird.f32 %v845
      %vm852 = vweird.f32 %v846
      %vm853 = vmor %vm851, %vm852
      %v854 = vsel %vm853, %v846, %v850
      %v855 = vand.u32 2147483647, %v845
      %vm856 = vcmp.eq.f32.partialorder %v855, 8.507059e+37
      %v857 = vand.u32 %v845, 2147483648
      %v858 = vor.u32 1.1754944e-38, %v857
      %v859 = vsel %vm856, %v858, %v854
      %v860 = vmul.f32 1.0, %v859
      %v861 = vmul.f32 %v840, %v532
      %v862 = vmul.f32 %v821, %v841
      %v863 = vadd.f32 %v861, %v862
      %v864 = vtanh.pop %v863
      %v865 = vmul.f32 %v860, %v864
      %v866 = vsel %vm543, %v865, %v530
      %v867 = vsel %vm543, %v863, %v532
      %v868 = vpack.c.bf16 %v866, %v866
      %v869 = vpack.c.bf16 %v531, %v531
      %v870 = vld [vmem:[#allocation9] sm:$0xff]
      %v871 = vld [vmem:[#allocation9 + $0x8] sm:$0xff]
      %v872 = vld [vmem:[#allocation9 + $0x10] sm:$0xff]
      %v873 = vld [vmem:[#allocation9 + $0x18] sm:$0xff]
      %v874 = vld [vmem:[#allocation9 + $0x20] sm:$0xff]
      %v875 = vld [vmem:[#allocation9 + $0x28] sm:$0xff]
      %v876 = vld [vmem:[#allocation9 + $0x30] sm:$0xff]
      %v877 = vld [vmem:[#allocation9 + $0x38] sm:$0xff]
      %v878 = vld [vmem:[#allocation9 + $0x40] sm:$0xff]
      %v879 = vld [vmem:[#allocation9 + $0x48] sm:$0xff]
      %v880 = vld [vmem:[#allocation9 + $0x50] sm:$0xff]
      %v881 = vld [vmem:[#allocation9 + $0x58] sm:$0xff]
      %v882 = vld [vmem:[#allocation9 + $0x60] sm:$0xff]
      %v883 = vld [vmem:[#allocation9 + $0x68] sm:$0xff]
      %v884 = vld [vmem:[#allocation9 + $0x70] sm:$0xff]
      %v885 = vld [vmem:[#allocation9 + $0x78] sm:$0xff]
      %v886 = vld [vmem:[#allocation9 + $0x80] sm:$0xff]
      %v887 = vld [vmem:[#allocation9 + $0x88] sm:$0xff]
      %v888 = vld [vmem:[#allocation9 + $0x90] sm:$0xff]
      %v889 = vld [vmem:[#allocation9 + $0x98] sm:$0xff]
      %v890 = vld [vmem:[#allocation9 + $0xa0] sm:$0xff]
      %v891 = vld [vmem:[#allocation9 + $0xa8] sm:$0xff]
      %v892 = vld [vmem:[#allocation9 + $0xb0] sm:$0xff]
      %v893 = vld [vmem:[#allocation9 + $0xb8] sm:$0xff]
      %v894 = vld [vmem:[#allocation9 + $0xc0] sm:$0xff]
      %v895 = vld [vmem:[#allocation9 + $0xc8] sm:$0xff]
      %v896 = vld [vmem:[#allocation9 + $0xd0] sm:$0xff]
      %v897 = vld [vmem:[#allocation9 + $0xd8] sm:$0xff]
      %v898 = vld [vmem:[#allocation9 + $0xe0] sm:$0xff]
      %v899 = vld [vmem:[#allocation9 + $0xe8] sm:$0xff]
      %v900 = vld [vmem:[#allocation9 + $0xf0] sm:$0xff]
      %v901 = vld [vmem:[#allocation9 + $0xf8] sm:$0xff]
      %s902 = scalar_lea.vmem [#allocation11], 256
      %v903 = vld [vmem:[%s902] sm:$0xff]
      %v904 = vld [vmem:[%s902 + $0x8] sm:$0xff]
      %v905 = vld [vmem:[%s902 + $0x10] sm:$0xff]
      %v906 = vld [vmem:[%s902 + $0x18] sm:$0xff]
      %v907 = vld [vmem:[%s902 + $0x20] sm:$0xff]
      %v908 = vld [vmem:[%s902 + $0x28] sm:$0xff]
      %v909 = vld [vmem:[%s902 + $0x30] sm:$0xff]
      %v910 = vld [vmem:[%s902 + $0x38] sm:$0xff]
      %v911 = vld [vmem:[%s902 + $0x40] sm:$0xff]
      %v912 = vld [vmem:[%s902 + $0x48] sm:$0xff]
      %v913 = vld [vmem:[%s902 + $0x50] sm:$0xff]
      %v914 = vld [vmem:[%s902 + $0x58] sm:$0xff]
      %v915 = vld [vmem:[%s902 + $0x60] sm:$0xff]
      %v916 = vld [vmem:[%s902 + $0x68] sm:$0xff]
      %v917 = vld [vmem:[%s902 + $0x70] sm:$0xff]
      %v918 = vld [vmem:[%s902 + $0x78] sm:$0xff]
      %v919 = vld [vmem:[%s902 + $0x80] sm:$0xff]
      %v920 = vld [vmem:[%s902 + $0x88] sm:$0xff]
      %v921 = vld [vmem:[%s902 + $0x90] sm:$0xff]
      %v922 = vld [vmem:[%s902 + $0x98] sm:$0xff]
      %v923 = vld [vmem:[%s902 + $0xa0] sm:$0xff]
      %v924 = vld [vmem:[%s902 + $0xa8] sm:$0xff]
      %v925 = vld [vmem:[%s902 + $0xb0] sm:$0xff]
      %v926 = vld [vmem:[%s902 + $0xb8] sm:$0xff]
      %v927 = vld [vmem:[%s902 + $0xc0] sm:$0xff]
      %v928 = vld [vmem:[%s902 + $0xc8] sm:$0xff]
      %v929 = vld [vmem:[%s902 + $0xd0] sm:$0xff]
      %v930 = vld [vmem:[%s902 + $0xd8] sm:$0xff]
      %v931 = vld [vmem:[%s902 + $0xe0] sm:$0xff]
      %v932 = vld [vmem:[%s902 + $0xe8] sm:$0xff]
      %v933 = vld [vmem:[%s902 + $0xf0] sm:$0xff]
      %v934 = vld [vmem:[%s902 + $0xf8] sm:$0xff]
      %v967 = vunpack.c.l.b16 %v903
      %v968 = vunpack.c.h.b16 %v903
      %v969 = vunpack.c.l.b16 %v904
      %v970 = vunpack.c.h.b16 %v904
      %v971 = vunpack.c.l.b16 %v905
      %v972 = vunpack.c.h.b16 %v905
      %v973 = vunpack.c.l.b16 %v906
      %v974 = vunpack.c.h.b16 %v906
      %v975 = vunpack.c.l.b16 %v907
      %v976 = vunpack.c.h.b16 %v907
      %v977 = vunpack.c.l.b16 %v908
      %v978 = vunpack.c.h.b16 %v908
      %v979 = vunpack.c.l.b16 %v909
      %v980 = vunpack.c.h.b16 %v909
      %v981 = vunpack.c.l.b16 %v910
      %v982 = vunpack.c.h.b16 %v910
      %v983 = vunpack.c.l.b16 %v911
      %v984 = vunpack.c.h.b16 %v911
      %v985 = vunpack.c.l.b16 %v912
      %v986 = vunpack.c.h.b16 %v912
      %v987 = vunpack.c.l.b16 %v913
      %v988 = vunpack.c.h.b16 %v913
      %v989 = vunpack.c.l.b16 %v914
      %v990 = vunpack.c.h.b16 %v914
      %v991 = vunpack.c.l.b16 %v915
      %v992 = vunpack.c.h.b16 %v915
      %v993 = vunpack.c.l.b16 %v916
      %v994 = vunpack.c.h.b16 %v916
      %v995 = vunpack.c.l.b16 %v917
      %v996 = vunpack.c.h.b16 %v917
      %v997 = vunpack.c.l.b16 %v918
      %v998 = vunpack.c.h.b16 %v918
      %v999 = vunpack.c.l.b16 %v919
      %v1000 = vunpack.c.h.b16 %v919
      %v1001 = vunpack.c.l.b16 %v920
      %v1002 = vunpack.c.h.b16 %v920
      %v1003 = vunpack.c.l.b16 %v921
      %v1004 = vunpack.c.h.b16 %v921
      %v1005 = vunpack.c.l.b16 %v922
      %v1006 = vunpack.c.h.b16 %v922
      %v1007 = vunpack.c.l.b16 %v923
      %v1008 = vunpack.c.h.b16 %v923
      %v1009 = vunpack.c.l.b16 %v924
      %v1010 = vunpack.c.h.b16 %v924
      %v1011 = vunpack.c.l.b16 %v925
      %v1012 = vunpack.c.h.b16 %v925
      %v1013 = vunpack.c.l.b16 %v926
      %v1014 = vunpack.c.h.b16 %v926
      %v1015 = vunpack.c.l.b16 %v927
      %v1016 = vunpack.c.h.b16 %v927
      %v1017 = vunpack.c.l.b16 %v928
      %v1018 = vunpack.c.h.b16 %v928
      %v1019 = vunpack.c.l.b16 %v929
      %v1020 = vunpack.c.h.b16 %v929
      %v1021 = vunpack.c.l.b16 %v930
      %v1022 = vunpack.c.h.b16 %v930
      %v1023 = vunpack.c.l.b16 %v931
      %v1024 = vunpack.c.h.b16 %v931
      %v1025 = vunpack.c.l.b16 %v932
      %v1026 = vunpack.c.h.b16 %v932
      %v1027 = vunpack.c.l.b16 %v933
      %v1028 = vunpack.c.h.b16 %v933
      %v1029 = vunpack.c.l.b16 %v934
      %v1030 = vunpack.c.h.b16 %v934
      %v1031 = vpack.c.b16 %v971, %v967
      %v1032 = vpack.c.b16 %v972, %v968
      %v1033 = vpack.c.b16 %v973, %v969
      %v1034 = vpack.c.b16 %v974, %v970
      %v1035 = vpack.c.b16 %v979, %v975
      %v1036 = vpack.c.b16 %v980, %v976
      %v1037 = vpack.c.b16 %v981, %v977
      %v1038 = vpack.c.b16 %v982, %v978
      %v1039 = vpack.c.b16 %v987, %v983
      %v1040 = vpack.c.b16 %v988, %v984
      %v1041 = vpack.c.b16 %v989, %v985
      %v1042 = vpack.c.b16 %v990, %v986
      %v1043 = vpack.c.b16 %v995, %v991
      %v1044 = vpack.c.b16 %v996, %v992
      %v1045 = vpack.c.b16 %v997, %v993
      %v1046 = vpack.c.b16 %v998, %v994
      %v1047 = vpack.c.b16 %v1003, %v999
      %v1048 = vpack.c.b16 %v1004, %v1000
      %v1049 = vpack.c.b16 %v1005, %v1001
      %v1050 = vpack.c.b16 %v1006, %v1002
      %v1051 = vpack.c.b16 %v1011, %v1007
      %v1052 = vpack.c.b16 %v1012, %v1008
      %v1053 = vpack.c.b16 %v1013, %v1009
      %v1054 = vpack.c.b16 %v1014, %v1010
      %v1055 = vpack.c.b16 %v1019, %v1015
      %v1056 = vpack.c.b16 %v1020, %v1016
      %v1057 = vpack.c.b16 %v1021, %v1017
      %v1058 = vpack.c.b16 %v1022, %v1018
      %v1059 = vpack.c.b16 %v1027, %v1023
      %v1060 = vpack.c.b16 %v1028, %v1024
      %v1061 = vpack.c.b16 %v1029, %v1025
      %v1062 = vpack.c.b16 %v1030, %v1026
      %1095 = vmatpush.bf16.msra.mxu0 %v1059
      %1096 = vmatpush.bf16.msra.mxu0 %v1055
      %1097 = vmatpush.bf16.msra.mxu0 %v1051
      %1098 = vmatpush.bf16.msra.mxu0 %v1047
      %1099 = vmatpush.bf16.msra.mxu0 %v1043
      %1100 = vmatpush.bf16.msra.mxu0 %v1039
      %1101 = vmatpush.bf16.msra.mxu0 %v1035
      %1102 = vmatpush.bf16.msra.mxu0 %v1031
      %1103 = vmatmul.bf16.gmra.mxu0 %v869
      %v1104 = vpop.f32.mrf.mxu0
      %v1105 = vadd.f32 0.0, %v1104
      %v1106 = vpop.f32.mrf.mxu0
      %1107 = vdwg.mxu0
      %1108 = vmatpush.bf16.msra.mxu0 %v1060
      %1109 = vmatpush.bf16.msra.mxu0 %v1056
      %1110 = vmatpush.bf16.msra.mxu0 %v1052
      %1111 = vmatpush.bf16.msra.mxu0 %v1048
      %1112 = vmatpush.bf16.msra.mxu0 %v1044
      %1113 = vmatpush.bf16.msra.mxu0 %v1040
      %1114 = vmatpush.bf16.msra.mxu0 %v1036
      %1115 = vmatpush.bf16.msra.mxu0 %v1032
      %1116 = vmatmul.bf16.gmra.mxu0 %v869
      %v1117 = vpop.f32.mrf.mxu0
      %v1118 = vadd.f32 0.0, %v1117
      %v1119 = vpop.f32.mrf.mxu0
      %1120 = vdwg.mxu0
      %1121 = vmatpush.bf16.msra.mxu0 %v1061
      %1122 = vmatpush.bf16.msra.mxu0 %v1057
      %1123 = vmatpush.bf16.msra.mxu0 %v1053
      %1124 = vmatpush.bf16.msra.mxu0 %v1049
      %1125 = vmatpush.bf16.msra.mxu0 %v1045
      %1126 = vmatpush.bf16.msra.mxu0 %v1041
      %1127 = vmatpush.bf16.msra.mxu0 %v1037
      %1128 = vmatpush.bf16.msra.mxu0 %v1033
      %1129 = vmatmul.bf16.gmra.mxu0 %v869
      %v1130 = vpop.f32.mrf.mxu0
      %v1131 = vadd.f32 0.0, %v1130
      %v1132 = vpop.f32.mrf.mxu0
      %1133 = vdwg.mxu0
      %1134 = vmatpush.bf16.msra.mxu0 %v1062
      %1135 = vmatpush.bf16.msra.mxu0 %v1058
      %1136 = vmatpush.bf16.msra.mxu0 %v1054
      %1137 = vmatpush.bf16.msra.mxu0 %v1050
      %1138 = vmatpush.bf16.msra.mxu0 %v1046
      %1139 = vmatpush.bf16.msra.mxu0 %v1042
      %1140 = vmatpush.bf16.msra.mxu0 %v1038
      %1141 = vmatpush.bf16.msra.mxu0 %v1034
      %1142 = vmatmul.bf16.gmra.mxu0 %v869
      %v1143 = vpop.f32.mrf.mxu0
      %v1144 = vadd.f32 0.0, %v1143
      %v1145 = vpop.f32.mrf.mxu0
      %1146 = vdwg.mxu0
      %v1179 = vunpack.c.l.b16 %v870
      %v1180 = vunpack.c.h.b16 %v870
      %v1181 = vunpack.c.l.b16 %v871
      %v1182 = vunpack.c.h.b16 %v871
      %v1183 = vunpack.c.l.b16 %v872
      %v1184 = vunpack.c.h.b16 %v872
      %v1185 = vunpack.c.l.b16 %v873
      %v1186 = vunpack.c.h.b16 %v873
      %v1187 = vunpack.c.l.b16 %v874
      %v1188 = vunpack.c.h.b16 %v874
      %v1189 = vunpack.c.l.b16 %v875
      %v1190 = vunpack.c.h.b16 %v875
      %v1191 = vunpack.c.l.b16 %v876
      %v1192 = vunpack.c.h.b16 %v876
      %v1193 = vunpack.c.l.b16 %v877
      %v1194 = vunpack.c.h.b16 %v877
      %v1195 = vunpack.c.l.b16 %v878
      %v1196 = vunpack.c.h.b16 %v878
      %v1197 = vunpack.c.l.b16 %v879
      %v1198 = vunpack.c.h.b16 %v879
      %v1199 = vunpack.c.l.b16 %v880
      %v1200 = vunpack.c.h.b16 %v880
      %v1201 = vunpack.c.l.b16 %v881
      %v1202 = vunpack.c.h.b16 %v881
      %v1203 = vunpack.c.l.b16 %v882
      %v1204 = vunpack.c.h.b16 %v882
      %v1205 = vunpack.c.l.b16 %v883
      %v1206 = vunpack.c.h.b16 %v883
      %v1207 = vunpack.c.l.b16 %v884
      %v1208 = vunpack.c.h.b16 %v884
      %v1209 = vunpack.c.l.b16 %v885
      %v1210 = vunpack.c.h.b16 %v885
      %v1211 = vunpack.c.l.b16 %v886
      %v1212 = vunpack.c.h.b16 %v886
      %v1213 = vunpack.c.l.b16 %v887
      %v1214 = vunpack.c.h.b16 %v887
      %v1215 = vunpack.c.l.b16 %v888
      %v1216 = vunpack.c.h.b16 %v888
      %v1217 = vunpack.c.l.b16 %v889
      %v1218 = vunpack.c.h.b16 %v889
      %v1219 = vunpack.c.l.b16 %v890
      %v1220 = vunpack.c.h.b16 %v890
      %v1221 = vunpack.c.l.b16 %v891
      %v1222 = vunpack.c.h.b16 %v891
      %v1223 = vunpack.c.l.b16 %v892
      %v1224 = vunpack.c.h.b16 %v892
      %v1225 = vunpack.c.l.b16 %v893
      %v1226 = vunpack.c.h.b16 %v893
      %v1227 = vunpack.c.l.b16 %v894
      %v1228 = vunpack.c.h.b16 %v894
      %v1229 = vunpack.c.l.b16 %v895
      %v1230 = vunpack.c.h.b16 %v895
      %v1231 = vunpack.c.l.b16 %v896
      %v1232 = vunpack.c.h.b16 %v896
      %v1233 = vunpack.c.l.b16 %v897
      %v1234 = vunpack.c.h.b16 %v897
      %v1235 = vunpack.c.l.b16 %v898
      %v1236 = vunpack.c.h.b16 %v898
      %v1237 = vunpack.c.l.b16 %v899
      %v1238 = vunpack.c.h.b16 %v899
      %v1239 = vunpack.c.l.b16 %v900
      %v1240 = vunpack.c.h.b16 %v900
      %v1241 = vunpack.c.l.b16 %v901
      %v1242 = vunpack.c.h.b16 %v901
      %v1243 = vpack.c.b16 %v1183, %v1179
      %v1244 = vpack.c.b16 %v1184, %v1180
      %v1245 = vpack.c.b16 %v1185, %v1181
      %v1246 = vpack.c.b16 %v1186, %v1182
      %v1247 = vpack.c.b16 %v1191, %v1187
      %v1248 = vpack.c.b16 %v1192, %v1188
      %v1249 = vpack.c.b16 %v1193, %v1189
      %v1250 = vpack.c.b16 %v1194, %v1190
      %v1251 = vpack.c.b16 %v1199, %v1195
      %v1252 = vpack.c.b16 %v1200, %v1196
      %v1253 = vpack.c.b16 %v1201, %v1197
      %v1254 = vpack.c.b16 %v1202, %v1198
      %v1255 = vpack.c.b16 %v1207, %v1203
      %v1256 = vpack.c.b16 %v1208, %v1204
      %v1257 = vpack.c.b16 %v1209, %v1205
      %v1258 = vpack.c.b16 %v1210, %v1206
      %v1259 = vpack.c.b16 %v1215, %v1211
      %v1260 = vpack.c.b16 %v1216, %v1212
      %v1261 = vpack.c.b16 %v1217, %v1213
      %v1262 = vpack.c.b16 %v1218, %v1214
      %v1263 = vpack.c.b16 %v1223, %v1219
      %v1264 = vpack.c.b16 %v1224, %v1220
      %v1265 = vpack.c.b16 %v1225, %v1221
      %v1266 = vpack.c.b16 %v1226, %v1222
      %v1267 = vpack.c.b16 %v1231, %v1227
      %v1268 = vpack.c.b16 %v1232, %v1228
      %v1269 = vpack.c.b16 %v1233, %v1229
      %v1270 = vpack.c.b16 %v1234, %v1230
      %v1271 = vpack.c.b16 %v1239, %v1235
      %v1272 = vpack.c.b16 %v1240, %v1236
      %v1273 = vpack.c.b16 %v1241, %v1237
      %v1274 = vpack.c.b16 %v1242, %v1238
      %1307 = vmatpush.bf16.msra.mxu0 %v1271
      %1308 = vmatpush.bf16.msra.mxu0 %v1267
      %1309 = vmatpush.bf16.msra.mxu0 %v1263
      %1310 = vmatpush.bf16.msra.mxu0 %v1259
      %1311 = vmatpush.bf16.msra.mxu0 %v1255
      %1312 = vmatpush.bf16.msra.mxu0 %v1251
      %1313 = vmatpush.bf16.msra.mxu0 %v1247
      %1314 = vmatpush.bf16.msra.mxu0 %v1243
      %1315 = vmatmul.bf16.gmra.mxu0 %v868
      %v1316 = vpop.f32.mrf.mxu0
      %v1317 = vadd.f32 %v1105, %v1316
      %v1318 = vpop.f32.mrf.mxu0
      %1319 = vdwg.mxu0
      %1320 = vmatpush.bf16.msra.mxu0 %v1272
      %1321 = vmatpush.bf16.msra.mxu0 %v1268
      %1322 = vmatpush.bf16.msra.mxu0 %v1264
      %1323 = vmatpush.bf16.msra.mxu0 %v1260
      %1324 = vmatpush.bf16.msra.mxu0 %v1256
      %1325 = vmatpush.bf16.msra.mxu0 %v1252
      %1326 = vmatpush.bf16.msra.mxu0 %v1248
      %1327 = vmatpush.bf16.msra.mxu0 %v1244
      %1328 = vmatmul.bf16.gmra.mxu0 %v868
      %v1329 = vpop.f32.mrf.mxu0
      %v1330 = vadd.f32 %v1118, %v1329
      %v1331 = vpop.f32.mrf.mxu0
      %1332 = vdwg.mxu0
      %1333 = vmatpush.bf16.msra.mxu0 %v1273
      %1334 = vmatpush.bf16.msra.mxu0 %v1269
      %1335 = vmatpush.bf16.msra.mxu0 %v1265
      %1336 = vmatpush.bf16.msra.mxu0 %v1261
      %1337 = vmatpush.bf16.msra.mxu0 %v1257
      %1338 = vmatpush.bf16.msra.mxu0 %v1253
      %1339 = vmatpush.bf16.msra.mxu0 %v1249
      %1340 = vmatpush.bf16.msra.mxu0 %v1245
      %1341 = vmatmul.bf16.gmra.mxu0 %v868
      %v1342 = vpop.f32.mrf.mxu0
      %v1343 = vadd.f32 %v1131, %v1342
      %v1344 = vpop.f32.mrf.mxu0
      %1345 = vdwg.mxu0
      %1346 = vmatpush.bf16.msra.mxu0 %v1274
      %1347 = vmatpush.bf16.msra.mxu0 %v1270
      %1348 = vmatpush.bf16.msra.mxu0 %v1266
      %1349 = vmatpush.bf16.msra.mxu0 %v1262
      %1350 = vmatpush.bf16.msra.mxu0 %v1258
      %1351 = vmatpush.bf16.msra.mxu0 %v1254
      %1352 = vmatpush.bf16.msra.mxu0 %v1250
      %1353 = vmatpush.bf16.msra.mxu0 %v1246
      %1354 = vmatmul.bf16.gmra.mxu0 %v868
      %v1355 = vpop.f32.mrf.mxu0
      %v1356 = vadd.f32 %v1144, %v1355
      %v1357 = vpop.f32.mrf.mxu0
      %1358 = vdwg.mxu0
      %v1359 = vadd.f32 %v1317, %v510
      %v1360 = vadd.f32 %v1330, %v511
      %v1361 = vadd.f32 %v1343, %v512
      %v1362 = vadd.f32 %v1356, %v513
      %v1363 = vxor.u32 %v1359, 2147483648
      %v1364 = vmul.f32 %v1363, 1.442695
      %v1365 = vpow.pop %v1364
      %v1366 = vadd.f32 %v1365, 1.0
      %v1367 = vrcp.pop %v1366
      %v1368 = vmul.f32 %v1366, %v1367
      %v1369 = vsub.f32 1.0, %v1368
      %v1370 = vmul.f32 %v1367, %v1369
      %v1371 = vadd.f32 %v1367, %v1370
      %vm1372 = vweird.f32 %v1366
      %vm1373 = vweird.f32 %v1367
      %vm1374 = vmor %vm1372, %vm1373
      %v1375 = vsel %vm1374, %v1367, %v1371
      %v1376 = vand.u32 2147483647, %v1366
      %vm1377 = vcmp.eq.f32.partialorder %v1376, 8.507059e+37
      %v1378 = vand.u32 %v1366, 2147483648
      %v1379 = vor.u32 1.1754944e-38, %v1378
      %v1380 = vsel %vm1377, %v1379, %v1375
      %v1381 = vmul.f32 1.0, %v1380
      %v1382 = vxor.u32 %v1360, 2147483648
      %v1383 = vmul.f32 %v1382, 1.442695
      %v1384 = vpow.pop %v1383
      %v1385 = vadd.f32 %v1384, 1.0
      %v1386 = vrcp.pop %v1385
      %v1387 = vmul.f32 %v1385, %v1386
      %v1388 = vsub.f32 1.0, %v1387
      %v1389 = vmul.f32 %v1386, %v1388
      %v1390 = vadd.f32 %v1386, %v1389
      %vm1391 = vweird.f32 %v1385
      %vm1392 = vweird.f32 %v1386
      %vm1393 = vmor %vm1391, %vm1392
      %v1394 = vsel %vm1393, %v1386, %v1390
      %v1395 = vand.u32 2147483647, %v1385
      %vm1396 = vcmp.eq.f32.partialorder %v1395, 8.507059e+37
      %v1397 = vand.u32 %v1385, 2147483648
      %v1398 = vor.u32 1.1754944e-38, %v1397
      %v1399 = vsel %vm1396, %v1398, %v1394
      %v1400 = vmul.f32 1.0, %v1399
      %v1401 = vtanh.pop %v1361
      %v1402 = vxor.u32 %v1362, 2147483648
      %v1403 = vmul.f32 %v1402, 1.442695
      %v1404 = vpow.pop %v1403
      %v1405 = vadd.f32 %v1404, 1.0
      %v1406 = vrcp.pop %v1405
      %v1407 = vmul.f32 %v1405, %v1406
      %v1408 = vsub.f32 1.0, %v1407
      %v1409 = vmul.f32 %v1406, %v1408
      %v1410 = vadd.f32 %v1406, %v1409
      %vm1411 = vweird.f32 %v1405
      %vm1412 = vweird.f32 %v1406
      %vm1413 = vmor %vm1411, %vm1412
      %v1414 = vsel %vm1413, %v1406, %v1410
      %v1415 = vand.u32 2147483647, %v1405
      %vm1416 = vcmp.eq.f32.partialorder %v1415, 8.507059e+37
      %v1417 = vand.u32 %v1405, 2147483648
      %v1418 = vor.u32 1.1754944e-38, %v1417
      %v1419 = vsel %vm1416, %v1418, %v1414
      %v1420 = vmul.f32 1.0, %v1419
      %v1421 = vmul.f32 %v1400, %v533
      %v1422 = vmul.f32 %v1381, %v1401
      %v1423 = vadd.f32 %v1421, %v1422
      %v1424 = vtanh.pop %v1423
      %v1425 = vmul.f32 %v1420, %v1424
      %v1426 = vsel %vm543, %v1425, %v531
      %v1427 = vsel %vm543, %v1423, %v533
      %v1428 = vsel %vm543, %v1425, 0.0
      %v1429 = vpack.c.bf16 %v1428, %v1428
      %s1430 = smul.addr %s534, 4
      %s1431 = scalar_lea.vmem [#allocation12], %s1430
      %1432 = vst [vmem:[%s1431] sm:$0xf] %v1429
      %s1433 = sadd.s32 %s534, 1
      %s1434 = sadd.s32 %s535, %s1433
      %v1435 = vstv %s1434
      %vm1436 = vcmp.lt.s32.totalorder %v1435, %v506
      %v1437 = vsel %vm1436, 1, 0
      %1438 = vset.pattern.permute.xlu0 0
      %1439 = vperm.xlu0 %1438, %v1437
      %v1440 = vpop.permute.xlu0 %1439
      %vm1441 = vcmp.eq.s32.totalorder %v1440, 1
      %s1442 = smul.u32 %s1433, 8
      %s1443 = sshra.s32 %s1442, 3
      %s1444 = sand.u32 %s1442, 7
      %s1445 = smul.u32 %s1443, 4
      %s1446 = smul.addr %s1445, 8
      %s1447 = scalar_lea.vmem [#allocation2], %s1446
      %v1448 = vld [vmem:[%s1447] sm:$0xff]
      %v1449 = vld [vmem:[%s1447 + $0x8] sm:$0xff]
      %v1450 = vld [vmem:[%s1447 + $0x10] sm:$0xff]
      %v1451 = vld [vmem:[%s1447 + $0x18] sm:$0xff]
      %v1452 = vld [vmem:[#allocation11] sm:$0xff]
      %v1453 = vld [vmem:[#allocation11 + $0x8] sm:$0xff]
      %v1454 = vld [vmem:[#allocation11 + $0x10] sm:$0xff]
      %v1455 = vld [vmem:[#allocation11 + $0x18] sm:$0xff]
      %v1456 = vld [vmem:[#allocation11 + $0x20] sm:$0xff]
      %v1457 = vld [vmem:[#allocation11 + $0x28] sm:$0xff]
      %v1458 = vld [vmem:[#allocation11 + $0x30] sm:$0xff]
      %v1459 = vld [vmem:[#allocation11 + $0x38] sm:$0xff]
      %v1460 = vld [vmem:[#allocation11 + $0x40] sm:$0xff]
      %v1461 = vld [vmem:[#allocation11 + $0x48] sm:$0xff]
      %v1462 = vld [vmem:[#allocation11 + $0x50] sm:$0xff]
      %v1463 = vld [vmem:[#allocation11 + $0x58] sm:$0xff]
      %v1464 = vld [vmem:[#allocation11 + $0x60] sm:$0xff]
      %v1465 = vld [vmem:[#allocation11 + $0x68] sm:$0xff]
      %v1466 = vld [vmem:[#allocation11 + $0x70] sm:$0xff]
      %v1467 = vld [vmem:[#allocation11 + $0x78] sm:$0xff]
      %v1468 = vld [vmem:[#allocation11 + $0x80] sm:$0xff]
      %v1469 = vld [vmem:[#allocation11 + $0x88] sm:$0xff]
      %v1470 = vld [vmem:[#allocation11 + $0x90] sm:$0xff]
      %v1471 = vld [vmem:[#allocation11 + $0x98] sm:$0xff]
      %v1472 = vld [vmem:[#allocation11 + $0xa0] sm:$0xff]
      %v1473 = vld [vmem:[#allocation11 + $0xa8] sm:$0xff]
      %v1474 = vld [vmem:[#allocation11 + $0xb0] sm:$0xff]
      %v1475 = vld [vmem:[#allocation11 + $0xb8] sm:$0xff]
      %v1476 = vld [vmem:[#allocation11 + $0xc0] sm:$0xff]
      %v1477 = vld [vmem:[#allocation11 + $0xc8] sm:$0xff]
      %v1478 = vld [vmem:[#allocation11 + $0xd0] sm:$0xff]
      %v1479 = vld [vmem:[#allocation11 + $0xd8] sm:$0xff]
      %v1480 = vld [vmem:[#allocation11 + $0xe0] sm:$0xff]
      %v1481 = vld [vmem:[#allocation11 + $0xe8] sm:$0xff]
      %v1482 = vld [vmem:[#allocation11 + $0xf0] sm:$0xff]
      %v1483 = vld [vmem:[#allocation11 + $0xf8] sm:$0xff]
      %v1516 = vunpack.c.l.b16 %v1452
      %v1517 = vunpack.c.h.b16 %v1452
      %v1518 = vunpack.c.l.b16 %v1453
      %v1519 = vunpack.c.h.b16 %v1453
      %v1520 = vunpack.c.l.b16 %v1454
      %v1521 = vunpack.c.h.b16 %v1454
      %v1522 = vunpack.c.l.b16 %v1455
      %v1523 = vunpack.c.h.b16 %v1455
      %v1524 = vunpack.c.l.b16 %v1456
      %v1525 = vunpack.c.h.b16 %v1456
      %v1526 = vunpack.c.l.b16 %v1457
      %v1527 = vunpack.c.h.b16 %v1457
      %v1528 = vunpack.c.l.b16 %v1458
      %v1529 = vunpack.c.h.b16 %v1458
      %v1530 = vunpack.c.l.b16 %v1459
      %v1531 = vunpack.c.h.b16 %v1459
      %v1532 = vunpack.c.l.b16 %v1460
      %v1533 = vunpack.c.h.b16 %v1460
      %v1534 = vunpack.c.l.b16 %v1461
      %v1535 = vunpack.c.h.b16 %v1461
      %v1536 = vunpack.c.l.b16 %v1462
      %v1537 = vunpack.c.h.b16 %v1462
      %v1538 = vunpack.c.l.b16 %v1463
      %v1539 = vunpack.c.h.b16 %v1463
      %v1540 = vunpack.c.l.b16 %v1464
      %v1541 = vunpack.c.h.b16 %v1464
      %v1542 = vunpack.c.l.b16 %v1465
      %v1543 = vunpack.c.h.b16 %v1465
      %v1544 = vunpack.c.l.b16 %v1466
      %v1545 = vunpack.c.h.b16 %v1466
      %v1546 = vunpack.c.l.b16 %v1467
      %v1547 = vunpack.c.h.b16 %v1467
      %v1548 = vunpack.c.l.b16 %v1468
      %v1549 = vunpack.c.h.b16 %v1468
      %v1550 = vunpack.c.l.b16 %v1469
      %v1551 = vunpack.c.h.b16 %v1469
      %v1552 = vunpack.c.l.b16 %v1470
      %v1553 = vunpack.c.h.b16 %v1470
      %v1554 = vunpack.c.l.b16 %v1471
      %v1555 = vunpack.c.h.b16 %v1471
      %v1556 = vunpack.c.l.b16 %v1472
      %v1557 = vunpack.c.h.b16 %v1472
      %v1558 = vunpack.c.l.b16 %v1473
      %v1559 = vunpack.c.h.b16 %v1473
      %v1560 = vunpack.c.l.b16 %v1474
      %v1561 = vunpack.c.h.b16 %v1474
      %v1562 = vunpack.c.l.b16 %v1475
      %v1563 = vunpack.c.h.b16 %v1475
      %v1564 = vunpack.c.l.b16 %v1476
      %v1565 = vunpack.c.h.b16 %v1476
      %v1566 = vunpack.c.l.b16 %v1477
      %v1567 = vunpack.c.h.b16 %v1477
      %v1568 = vunpack.c.l.b16 %v1478
      %v1569 = vunpack.c.h.b16 %v1478
      %v1570 = vunpack.c.l.b16 %v1479
      %v1571 = vunpack.c.h.b16 %v1479
      %v1572 = vunpack.c.l.b16 %v1480
      %v1573 = vunpack.c.h.b16 %v1480
      %v1574 = vunpack.c.l.b16 %v1481
      %v1575 = vunpack.c.h.b16 %v1481
      %v1576 = vunpack.c.l.b16 %v1482
      %v1577 = vunpack.c.h.b16 %v1482
      %v1578 = vunpack.c.l.b16 %v1483
      %v1579 = vunpack.c.h.b16 %v1483
      %v1580 = vpack.c.b16 %v1520, %v1516
      %v1581 = vpack.c.b16 %v1521, %v1517
      %v1582 = vpack.c.b16 %v1522, %v1518
      %v1583 = vpack.c.b16 %v1523, %v1519
      %v1584 = vpack.c.b16 %v1528, %v1524
      %v1585 = vpack.c.b16 %v1529, %v1525
      %v1586 = vpack.c.b16 %v1530, %v1526
      %v1587 = vpack.c.b16 %v1531, %v1527
      %v1588 = vpack.c.b16 %v1536, %v1532
      %v1589 = vpack.c.b16 %v1537, %v1533
      %v1590 = vpack.c.b16 %v1538, %v1534
      %v1591 = vpack.c.b16 %v1539, %v1535
      %v1592 = vpack.c.b16 %v1544, %v1540
      %v1593 = vpack.c.b16 %v1545, %v1541
      %v1594 = vpack.c.b16 %v1546, %v1542
      %v1595 = vpack.c.b16 %v1547, %v1543
      %v1596 = vpack.c.b16 %v1552, %v1548
      %v1597 = vpack.c.b16 %v1553, %v1549
      %v1598 = vpack.c.b16 %v1554, %v1550
      %v1599 = vpack.c.b16 %v1555, %v1551
      %v1600 = vpack.c.b16 %v1560, %v1556
      %v1601 = vpack.c.b16 %v1561, %v1557
      %v1602 = vpack.c.b16 %v1562, %v1558
      %v1603 = vpack.c.b16 %v1563, %v1559
      %v1604 = vpack.c.b16 %v1568, %v1564
      %v1605 = vpack.c.b16 %v1569, %v1565
      %v1606 = vpack.c.b16 %v1570, %v1566
      %v1607 = vpack.c.b16 %v1571, %v1567
      %v1608 = vpack.c.b16 %v1576, %v1572
      %v1609 = vpack.c.b16 %v1577, %v1573
      %v1610 = vpack.c.b16 %v1578, %v1574
      %v1611 = vpack.c.b16 %v1579, %v1575
      %1644 = vmatpush.bf16.msra.mxu0 %v1608
      %1645 = vmatpush.bf16.msra.mxu0 %v1604
      %1646 = vmatpush.bf16.msra.mxu0 %v1600
      %1647 = vmatpush.bf16.msra.mxu0 %v1596
      %1648 = vmatpush.bf16.msra.mxu0 %v1592
      %1649 = vmatpush.bf16.msra.mxu0 %v1588
      %1650 = vmatpush.bf16.msra.mxu0 %v1584
      %1651 = vmatpush.bf16.msra.mxu0 %v1580
      %1652 = vmatmul.bf16.gmra.mxu0 %v868
      %v1653 = vpop.f32.mrf.mxu0
      %v1654 = vadd.f32 0.0, %v1653
      %v1655 = vpop.f32.mrf.mxu0
      %1656 = vdwg.mxu0
      %1657 = vmatpush.bf16.msra.mxu0 %v1609
      %1658 = vmatpush.bf16.msra.mxu0 %v1605
      %1659 = vmatpush.bf16.msra.mxu0 %v1601
      %1660 = vmatpush.bf16.msra.mxu0 %v1597
      %1661 = vmatpush.bf16.msra.mxu0 %v1593
      %1662 = vmatpush.bf16.msra.mxu0 %v1589
      %1663 = vmatpush.bf16.msra.mxu0 %v1585
      %1664 = vmatpush.bf16.msra.mxu0 %v1581
      %1665 = vmatmul.bf16.gmra.mxu0 %v868
      %v1666 = vpop.f32.mrf.mxu0
      %v1667 = vadd.f32 0.0, %v1666
      %v1668 = vpop.f32.mrf.mxu0
      %1669 = vdwg.mxu0
      %1670 = vmatpush.bf16.msra.mxu0 %v1610
      %1671 = vmatpush.bf16.msra.mxu0 %v1606
      %1672 = vmatpush.bf16.msra.mxu0 %v1602
      %1673 = vmatpush.bf16.msra.mxu0 %v1598
      %1674 = vmatpush.bf16.msra.mxu0 %v1594
      %1675 = vmatpush.bf16.msra.mxu0 %v1590
      %1676 = vmatpush.bf16.msra.mxu0 %v1586
      %1677 = vmatpush.bf16.msra.mxu0 %v1582
      %1678 = vmatmul.bf16.gmra.mxu0 %v868
      %v1679 = vpop.f32.mrf.mxu0
      %v1680 = vadd.f32 0.0, %v1679
      %v1681 = vpop.f32.mrf.mxu0
      %1682 = vdwg.mxu0
      %1683 = vmatpush.bf16.msra.mxu0 %v1611
      %1684 = vmatpush.bf16.msra.mxu0 %v1607
      %1685 = vmatpush.bf16.msra.mxu0 %v1603
      %1686 = vmatpush.bf16.msra.mxu0 %v1599
      %1687 = vmatpush.bf16.msra.mxu0 %v1595
      %1688 = vmatpush.bf16.msra.mxu0 %v1591
      %1689 = vmatpush.bf16.msra.mxu0 %v1587
      %1690 = vmatpush.bf16.msra.mxu0 %v1583
      %1691 = vmatmul.bf16.gmra.mxu0 %v868
      %v1692 = vpop.f32.mrf.mxu0
      %v1693 = vadd.f32 0.0, %v1692
      %v1694 = vpop.f32.mrf.mxu0
      %1695 = vdwg.mxu0
      %v1696 = vadd.f32 %v1448, %v1654
      %v1697 = vadd.f32 %v1449, %v1667
      %v1698 = vadd.f32 %v1450, %v1680
      %v1699 = vadd.f32 %v1451, %v1693
      %v1700 = vxor.u32 %v1696, 2147483648
      %v1701 = vmul.f32 %v1700, 1.442695
      %v1702 = vpow.pop %v1701
      %v1703 = vadd.f32 %v1702, 1.0
      %v1704 = vrcp.pop %v1703
      %v1705 = vmul.f32 %v1703, %v1704
      %v1706 = vsub.f32 1.0, %v1705
      %v1707 = vmul.f32 %v1704, %v1706
      %v1708 = vadd.f32 %v1704, %v1707
      %vm1709 = vweird.f32 %v1703
      %vm1710 = vweird.f32 %v1704
      %vm1711 = vmor %vm1709, %vm1710
      %v1712 = vsel %vm1711, %v1704, %v1708
      %v1713 = vand.u32 2147483647, %v1703
      %vm1714 = vcmp.eq.f32.partialorder %v1713, 8.507059e+37
      %v1715 = vand.u32 %v1703, 2147483648
      %v1716 = vor.u32 1.1754944e-38, %v1715
      %v1717 = vsel %vm1714, %v1716, %v1712
      %v1718 = vmul.f32 1.0, %v1717
      %v1719 = vxor.u32 %v1697, 2147483648
      %v1720 = vmul.f32 %v1719, 1.442695
      %v1721 = vpow.pop %v1720
      %v1722 = vadd.f32 %v1721, 1.0
      %v1723 = vrcp.pop %v1722
      %v1724 = vmul.f32 %v1722, %v1723
      %v1725 = vsub.f32 1.0, %v1724
      %v1726 = vmul.f32 %v1723, %v1725
      %v1727 = vadd.f32 %v1723, %v1726
      %vm1728 = vweird.f32 %v1722
      %vm1729 = vweird.f32 %v1723
      %vm1730 = vmor %vm1728, %vm1729
      %v1731 = vsel %vm1730, %v1723, %v1727
      %v1732 = vand.u32 2147483647, %v1722
      %vm1733 = vcmp.eq.f32.partialorder %v1732, 8.507059e+37
      %v1734 = vand.u32 %v1722, 2147483648
      %v1735 = vor.u32 1.1754944e-38, %v1734
      %v1736 = vsel %vm1733, %v1735, %v1731
      %v1737 = vmul.f32 1.0, %v1736
      %v1738 = vtanh.pop %v1698
      %v1739 = vxor.u32 %v1699, 2147483648
      %v1740 = vmul.f32 %v1739, 1.442695
      %v1741 = vpow.pop %v1740
      %v1742 = vadd.f32 %v1741, 1.0
      %v1743 = vrcp.pop %v1742
      %v1744 = vmul.f32 %v1742, %v1743
      %v1745 = vsub.f32 1.0, %v1744
      %v1746 = vmul.f32 %v1743, %v1745
      %v1747 = vadd.f32 %v1743, %v1746
      %vm1748 = vweird.f32 %v1742
      %vm1749 = vweird.f32 %v1743
      %vm1750 = vmor %vm1748, %vm1749
      %v1751 = vsel %vm1750, %v1743, %v1747
      %v1752 = vand.u32 2147483647, %v1742
      %vm1753 = vcmp.eq.f32.partialorder %v1752, 8.507059e+37
      %v1754 = vand.u32 %v1742, 2147483648
      %v1755 = vor.u32 1.1754944e-38, %v1754
      %v1756 = vsel %vm1753, %v1755, %v1751
      %v1757 = vmul.f32 1.0, %v1756
      %v1758 = vmul.f32 %v1737, %v867
      %v1759 = vmul.f32 %v1718, %v1738
      %v1760 = vadd.f32 %v1758, %v1759
      %v1761 = vtanh.pop %v1760
      %v1762 = vmul.f32 %v1757, %v1761
      %v1763 = vsel %vm1441, %v1762, %v866
      %v1764 = vsel %vm1441, %v1760, %v867
      %v1765 = vpack.c.bf16 %v1763, %v1763
      %v1766 = vpack.c.bf16 %v1426, %v1426
      %v1767 = vld [vmem:[#allocation9] sm:$0xff]
      %v1768 = vld [vmem:[#allocation9 + $0x8] sm:$0xff]
      %v1769 = vld [vmem:[#allocation9 + $0x10] sm:$0xff]
      %v1770 = vld [vmem:[#allocation9 + $0x18] sm:$0xff]
      %v1771 = vld [vmem:[#allocation9 + $0x20] sm:$0xff]
      %v1772 = vld [vmem:[#allocation9 + $0x28] sm:$0xff]
      %v1773 = vld [vmem:[#allocation9 + $0x30] sm:$0xff]
      %v1774 = vld [vmem:[#allocation9 + $0x38] sm:$0xff]
      %v1775 = vld [vmem:[#allocation9 + $0x40] sm:$0xff]
      %v1776 = vld [vmem:[#allocation9 + $0x48] sm:$0xff]
      %v1777 = vld [vmem:[#allocation9 + $0x50] sm:$0xff]
      %v1778 = vld [vmem:[#allocation9 + $0x58] sm:$0xff]
      %v1779 = vld [vmem:[#allocation9 + $0x60] sm:$0xff]
      %v1780 = vld [vmem:[#allocation9 + $0x68] sm:$0xff]
      %v1781 = vld [vmem:[#allocation9 + $0x70] sm:$0xff]
      %v1782 = vld [vmem:[#allocation9 + $0x78] sm:$0xff]
      %v1783 = vld [vmem:[#allocation9 + $0x80] sm:$0xff]
      %v1784 = vld [vmem:[#allocation9 + $0x88] sm:$0xff]
      %v1785 = vld [vmem:[#allocation9 + $0x90] sm:$0xff]
      %v1786 = vld [vmem:[#allocation9 + $0x98] sm:$0xff]
      %v1787 = vld [vmem:[#allocation9 + $0xa0] sm:$0xff]
      %v1788 = vld [vmem:[#allocation9 + $0xa8] sm:$0xff]
      %v1789 = vld [vmem:[#allocation9 + $0xb0] sm:$0xff]
      %v1790 = vld [vmem:[#allocation9 + $0xb8] sm:$0xff]
      %v1791 = vld [vmem:[#allocation9 + $0xc0] sm:$0xff]
      %v1792 = vld [vmem:[#allocation9 + $0xc8] sm:$0xff]
      %v1793 = vld [vmem:[#allocation9 + $0xd0] sm:$0xff]
      %v1794 = vld [vmem:[#allocation9 + $0xd8] sm:$0xff]
      %v1795 = vld [vmem:[#allocation9 + $0xe0] sm:$0xff]
      %v1796 = vld [vmem:[#allocation9 + $0xe8] sm:$0xff]
      %v1797 = vld [vmem:[#allocation9 + $0xf0] sm:$0xff]
      %v1798 = vld [vmem:[#allocation9 + $0xf8] sm:$0xff]
      %v1799 = vld [vmem:[%s902] sm:$0xff]
      %v1800 = vld [vmem:[%s902 + $0x8] sm:$0xff]
      %v1801 = vld [vmem:[%s902 + $0x10] sm:$0xff]
      %v1802 = vld [vmem:[%s902 + $0x18] sm:$0xff]
      %v1803 = vld [vmem:[%s902 + $0x20] sm:$0xff]
      %v1804 = vld [vmem:[%s902 + $0x28] sm:$0xff]
      %v1805 = vld [vmem:[%s902 + $0x30] sm:$0xff]
      %v1806 = vld [vmem:[%s902 + $0x38] sm:$0xff]
      %v1807 = vld [vmem:[%s902 + $0x40] sm:$0xff]
      %v1808 = vld [vmem:[%s902 + $0x48] sm:$0xff]
      %v1809 = vld [vmem:[%s902 + $0x50] sm:$0xff]
      %v1810 = vld [vmem:[%s902 + $0x58] sm:$0xff]
      %v1811 = vld [vmem:[%s902 + $0x60] sm:$0xff]
      %v1812 = vld [vmem:[%s902 + $0x68] sm:$0xff]
      %v1813 = vld [vmem:[%s902 + $0x70] sm:$0xff]
      %v1814 = vld [vmem:[%s902 + $0x78] sm:$0xff]
      %v1815 = vld [vmem:[%s902 + $0x80] sm:$0xff]
      %v1816 = vld [vmem:[%s902 + $0x88] sm:$0xff]
      %v1817 = vld [vmem:[%s902 + $0x90] sm:$0xff]
      %v1818 = vld [vmem:[%s902 + $0x98] sm:$0xff]
      %v1819 = vld [vmem:[%s902 + $0xa0] sm:$0xff]
      %v1820 = vld [vmem:[%s902 + $0xa8] sm:$0xff]
      %v1821 = vld [vmem:[%s902 + $0xb0] sm:$0xff]
      %v1822 = vld [vmem:[%s902 + $0xb8] sm:$0xff]
      %v1823 = vld [vmem:[%s902 + $0xc0] sm:$0xff]
      %v1824 = vld [vmem:[%s902 + $0xc8] sm:$0xff]
      %v1825 = vld [vmem:[%s902 + $0xd0] sm:$0xff]
      %v1826 = vld [vmem:[%s902 + $0xd8] sm:$0xff]
      %v1827 = vld [vmem:[%s902 + $0xe0] sm:$0xff]
      %v1828 = vld [vmem:[%s902 + $0xe8] sm:$0xff]
      %v1829 = vld [vmem:[%s902 + $0xf0] sm:$0xff]
      %v1830 = vld [vmem:[%s902 + $0xf8] sm:$0xff]
      %v1863 = vunpack.c.l.b16 %v1799
      %v1864 = vunpack.c.h.b16 %v1799
      %v1865 = vunpack.c.l.b16 %v1800
      %v1866 = vunpack.c.h.b16 %v1800
      %v1867 = vunpack.c.l.b16 %v1801
      %v1868 = vunpack.c.h.b16 %v1801
      %v1869 = vunpack.c.l.b16 %v1802
      %v1870 = vunpack.c.h.b16 %v1802
      %v1871 = vunpack.c.l.b16 %v1803
      %v1872 = vunpack.c.h.b16 %v1803
      %v1873 = vunpack.c.l.b16 %v1804
      %v1874 = vunpack.c.h.b16 %v1804
      %v1875 = vunpack.c.l.b16 %v1805
      %v1876 = vunpack.c.h.b16 %v1805
      %v1877 = vunpack.c.l.b16 %v1806
      %v1878 = vunpack.c.h.b16 %v1806
      %v1879 = vunpack.c.l.b16 %v1807
      %v1880 = vunpack.c.h.b16 %v1807
      %v1881 = vunpack.c.l.b16 %v1808
      %v1882 = vunpack.c.h.b16 %v1808
      %v1883 = vunpack.c.l.b16 %v1809
      %v1884 = vunpack.c.h.b16 %v1809
      %v1885 = vunpack.c.l.b16 %v1810
      %v1886 = vunpack.c.h.b16 %v1810
      %v1887 = vunpack.c.l.b16 %v1811
      %v1888 = vunpack.c.h.b16 %v1811
      %v1889 = vunpack.c.l.b16 %v1812
      %v1890 = vunpack.c.h.b16 %v1812
      %v1891 = vunpack.c.l.b16 %v1813
      %v1892 = vunpack.c.h.b16 %v1813
      %v1893 = vunpack.c.l.b16 %v1814
      %v1894 = vunpack.c.h.b16 %v1814
      %v1895 = vunpack.c.l.b16 %v1815
      %v1896 = vunpack.c.h.b16 %v1815
      %v1897 = vunpack.c.l.b16 %v1816
      %v1898 = vunpack.c.h.b16 %v1816
      %v1899 = vunpack.c.l.b16 %v1817
      %v1900 = vunpack.c.h.b16 %v1817
      %v1901 = vunpack.c.l.b16 %v1818
      %v1902 = vunpack.c.h.b16 %v1818
      %v1903 = vunpack.c.l.b16 %v1819
      %v1904 = vunpack.c.h.b16 %v1819
      %v1905 = vunpack.c.l.b16 %v1820
      %v1906 = vunpack.c.h.b16 %v1820
      %v1907 = vunpack.c.l.b16 %v1821
      %v1908 = vunpack.c.h.b16 %v1821
      %v1909 = vunpack.c.l.b16 %v1822
      %v1910 = vunpack.c.h.b16 %v1822
      %v1911 = vunpack.c.l.b16 %v1823
      %v1912 = vunpack.c.h.b16 %v1823
      %v1913 = vunpack.c.l.b16 %v1824
      %v1914 = vunpack.c.h.b16 %v1824
      %v1915 = vunpack.c.l.b16 %v1825
      %v1916 = vunpack.c.h.b16 %v1825
      %v1917 = vunpack.c.l.b16 %v1826
      %v1918 = vunpack.c.h.b16 %v1826
      %v1919 = vunpack.c.l.b16 %v1827
      %v1920 = vunpack.c.h.b16 %v1827
      %v1921 = vunpack.c.l.b16 %v1828
      %v1922 = vunpack.c.h.b16 %v1828
      %v1923 = vunpack.c.l.b16 %v1829
      %v1924 = vunpack.c.h.b16 %v1829
      %v1925 = vunpack.c.l.b16 %v1830
      %v1926 = vunpack.c.h.b16 %v1830
      %v1927 = vpack.c.b16 %v1867, %v1863
      %v1928 = vpack.c.b16 %v1868, %v1864
      %v1929 = vpack.c.b16 %v1869, %v1865
      %v1930 = vpack.c.b16 %v1870, %v1866
      %v1931 = vpack.c.b16 %v1875, %v1871
      %v1932 = vpack.c.b16 %v1876, %v1872
      %v1933 = vpack.c.b16 %v1877, %v1873
      %v1934 = vpack.c.b16 %v1878, %v1874
      %v1935 = vpack.c.b16 %v1883, %v1879
      %v1936 = vpack.c.b16 %v1884, %v1880
      %v1937 = vpack.c.b16 %v1885, %v1881
      %v1938 = vpack.c.b16 %v1886, %v1882
      %v1939 = vpack.c.b16 %v1891, %v1887
      %v1940 = vpack.c.b16 %v1892, %v1888
      %v1941 = vpack.c.b16 %v1893, %v1889
      %v1942 = vpack.c.b16 %v1894, %v1890
      %v1943 = vpack.c.b16 %v1899, %v1895
      %v1944 = vpack.c.b16 %v1900, %v1896
      %v1945 = vpack.c.b16 %v1901, %v1897
      %v1946 = vpack.c.b16 %v1902, %v1898
      %v1947 = vpack.c.b16 %v1907, %v1903
      %v1948 = vpack.c.b16 %v1908, %v1904
      %v1949 = vpack.c.b16 %v1909, %v1905
      %v1950 = vpack.c.b16 %v1910, %v1906
      %v1951 = vpack.c.b16 %v1915, %v1911
      %v1952 = vpack.c.b16 %v1916, %v1912
      %v1953 = vpack.c.b16 %v1917, %v1913
      %v1954 = vpack.c.b16 %v1918, %v1914
      %v1955 = vpack.c.b16 %v1923, %v1919
      %v1956 = vpack.c.b16 %v1924, %v1920
      %v1957 = vpack.c.b16 %v1925, %v1921
      %v1958 = vpack.c.b16 %v1926, %v1922
      %1991 = vmatpush.bf16.msra.mxu0 %v1955
      %1992 = vmatpush.bf16.msra.mxu0 %v1951
      %1993 = vmatpush.bf16.msra.mxu0 %v1947
      %1994 = vmatpush.bf16.msra.mxu0 %v1943
      %1995 = vmatpush.bf16.msra.mxu0 %v1939
      %1996 = vmatpush.bf16.msra.mxu0 %v1935
      %1997 = vmatpush.bf16.msra.mxu0 %v1931
      %1998 = vmatpush.bf16.msra.mxu0 %v1927
      %1999 = vmatmul.bf16.gmra.mxu0 %v1766
      %v2000 = vpop.f32.mrf.mxu0
      %v2001 = vadd.f32 0.0, %v2000
      %v2002 = vpop.f32.mrf.mxu0
      %2003 = vdwg.mxu0
      %2004 = vmatpush.bf16.msra.mxu0 %v1956
      %2005 = vmatpush.bf16.msra.mxu0 %v1952
      %2006 = vmatpush.bf16.msra.mxu0 %v1948
      %2007 = vmatpush.bf16.msra.mxu0 %v1944
      %2008 = vmatpush.bf16.msra.mxu0 %v1940
      %2009 = vmatpush.bf16.msra.mxu0 %v1936
      %2010 = vmatpush.bf16.msra.mxu0 %v1932
      %2011 = vmatpush.bf16.msra.mxu0 %v1928
      %2012 = vmatmul.bf16.gmra.mxu0 %v1766
      %v2013 = vpop.f32.mrf.mxu0
      %v2014 = vadd.f32 0.0, %v2013
      %v2015 = vpop.f32.mrf.mxu0
      %2016 = vdwg.mxu0
      %2017 = vmatpush.bf16.msra.mxu0 %v1957
      %2018 = vmatpush.bf16.msra.mxu0 %v1953
      %2019 = vmatpush.bf16.msra.mxu0 %v1949
      %2020 = vmatpush.bf16.msra.mxu0 %v1945
      %2021 = vmatpush.bf16.msra.mxu0 %v1941
      %2022 = vmatpush.bf16.msra.mxu0 %v1937
      %2023 = vmatpush.bf16.msra.mxu0 %v1933
      %2024 = vmatpush.bf16.msra.mxu0 %v1929
      %2025 = vmatmul.bf16.gmra.mxu0 %v1766
      %v2026 = vpop.f32.mrf.mxu0
      %v2027 = vadd.f32 0.0, %v2026
      %v2028 = vpop.f32.mrf.mxu0
      %2029 = vdwg.mxu0
      %2030 = vmatpush.bf16.msra.mxu0 %v1958
      %2031 = vmatpush.bf16.msra.mxu0 %v1954
      %2032 = vmatpush.bf16.msra.mxu0 %v1950
      %2033 = vmatpush.bf16.msra.mxu0 %v1946
      %2034 = vmatpush.bf16.msra.mxu0 %v1942
      %2035 = vmatpush.bf16.msra.mxu0 %v1938
      %2036 = vmatpush.bf16.msra.mxu0 %v1934
      %2037 = vmatpush.bf16.msra.mxu0 %v1930
      %2038 = vmatmul.bf16.gmra.mxu0 %v1766
      %v2039 = vpop.f32.mrf.mxu0
      %v2040 = vadd.f32 0.0, %v2039
      %v2041 = vpop.f32.mrf.mxu0
      %2042 = vdwg.mxu0
      %v2075 = vunpack.c.l.b16 %v1767
      %v2076 = vunpack.c.h.b16 %v1767
      %v2077 = vunpack.c.l.b16 %v1768
      %v2078 = vunpack.c.h.b16 %v1768
      %v2079 = vunpack.c.l.b16 %v1769
      %v2080 = vunpack.c.h.b16 %v1769
      %v2081 = vunpack.c.l.b16 %v1770
      %v2082 = vunpack.c.h.b16 %v1770
      %v2083 = vunpack.c.l.b16 %v1771
      %v2084 = vunpack.c.h.b16 %v1771
      %v2085 = vunpack.c.l.b16 %v1772
      %v2086 = vunpack.c.h.b16 %v1772
      %v2087 = vunpack.c.l.b16 %v1773
      %v2088 = vunpack.c.h.b16 %v1773
      %v2089 = vunpack.c.l.b16 %v1774
      %v2090 = vunpack.c.h.b16 %v1774
      %v2091 = vunpack.c.l.b16 %v1775
      %v2092 = vunpack.c.h.b16 %v1775
      %v2093 = vunpack.c.l.b16 %v1776
      %v2094 = vunpack.c.h.b16 %v1776
      %v2095 = vunpack.c.l.b16 %v1777
      %v2096 = vunpack.c.h.b16 %v1777
      %v2097 = vunpack.c.l.b16 %v1778
      %v2098 = vunpack.c.h.b16 %v1778
      %v2099 = vunpack.c.l.b16 %v1779
      %v2100 = vunpack.c.h.b16 %v1779
      %v2101 = vunpack.c.l.b16 %v1780
      %v2102 = vunpack.c.h.b16 %v1780
      %v2103 = vunpack.c.l.b16 %v1781
      %v2104 = vunpack.c.h.b16 %v1781
      %v2105 = vunpack.c.l.b16 %v1782
      %v2106 = vunpack.c.h.b16 %v1782
      %v2107 = vunpack.c.l.b16 %v1783
      %v2108 = vunpack.c.h.b16 %v1783
      %v2109 = vunpack.c.l.b16 %v1784
      %v2110 = vunpack.c.h.b16 %v1784
      %v2111 = vunpack.c.l.b16 %v1785
      %v2112 = vunpack.c.h.b16 %v1785
      %v2113 = vunpack.c.l.b16 %v1786
      %v2114 = vunpack.c.h.b16 %v1786
      %v2115 = vunpack.c.l.b16 %v1787
      %v2116 = vunpack.c.h.b16 %v1787
      %v2117 = vunpack.c.l.b16 %v1788
      %v2118 = vunpack.c.h.b16 %v1788
      %v2119 = vunpack.c.l.b16 %v1789
      %v2120 = vunpack.c.h.b16 %v1789
      %v2121 = vunpack.c.l.b16 %v1790
      %v2122 = vunpack.c.h.b16 %v1790
      %v2123 = vunpack.c.l.b16 %v1791
      %v2124 = vunpack.c.h.b16 %v1791
      %v2125 = vunpack.c.l.b16 %v1792
      %v2126 = vunpack.c.h.b16 %v1792
      %v2127 = vunpack.c.l.b16 %v1793
      %v2128 = vunpack.c.h.b16 %v1793
      %v2129 = vunpack.c.l.b16 %v1794
      %v2130 = vunpack.c.h.b16 %v1794
      %v2131 = vunpack.c.l.b16 %v1795
      %v2132 = vunpack.c.h.b16 %v1795
      %v2133 = vunpack.c.l.b16 %v1796
      %v2134 = vunpack.c.h.b16 %v1796
      %v2135 = vunpack.c.l.b16 %v1797
      %v2136 = vunpack.c.h.b16 %v1797
      %v2137 = vunpack.c.l.b16 %v1798
      %v2138 = vunpack.c.h.b16 %v1798
      %v2139 = vpack.c.b16 %v2079, %v2075
      %v2140 = vpack.c.b16 %v2080, %v2076
      %v2141 = vpack.c.b16 %v2081, %v2077
      %v2142 = vpack.c.b16 %v2082, %v2078
      %v2143 = vpack.c.b16 %v2087, %v2083
      %v2144 = vpack.c.b16 %v2088, %v2084
      %v2145 = vpack.c.b16 %v2089, %v2085
      %v2146 = vpack.c.b16 %v2090, %v2086
      %v2147 = vpack.c.b16 %v2095, %v2091
      %v2148 = vpack.c.b16 %v2096, %v2092
      %v2149 = vpack.c.b16 %v2097, %v2093
      %v2150 = vpack.c.b16 %v2098, %v2094
      %v2151 = vpack.c.b16 %v2103, %v2099
      %v2152 = vpack.c.b16 %v2104, %v2100
      %v2153 = vpack.c.b16 %v2105, %v2101
      %v2154 = vpack.c.b16 %v2106, %v2102
      %v2155 = vpack.c.b16 %v2111, %v2107
      %v2156 = vpack.c.b16 %v2112, %v2108
      %v2157 = vpack.c.b16 %v2113, %v2109
      %v2158 = vpack.c.b16 %v2114, %v2110
      %v2159 = vpack.c.b16 %v2119, %v2115
      %v2160 = vpack.c.b16 %v2120, %v2116
      %v2161 = vpack.c.b16 %v2121, %v2117
      %v2162 = vpack.c.b16 %v2122, %v2118
      %v2163 = vpack.c.b16 %v2127, %v2123
      %v2164 = vpack.c.b16 %v2128, %v2124
      %v2165 = vpack.c.b16 %v2129, %v2125
      %v2166 = vpack.c.b16 %v2130, %v2126
      %v2167 = vpack.c.b16 %v2135, %v2131
      %v2168 = vpack.c.b16 %v2136, %v2132
      %v2169 = vpack.c.b16 %v2137, %v2133
      %v2170 = vpack.c.b16 %v2138, %v2134
      %2203 = vmatpush.bf16.msra.mxu0 %v2167
      %2204 = vmatpush.bf16.msra.mxu0 %v2163
      %2205 = vmatpush.bf16.msra.mxu0 %v2159
      %2206 = vmatpush.bf16.msra.mxu0 %v2155
      %2207 = vmatpush.bf16.msra.mxu0 %v2151
      %2208 = vmatpush.bf16.msra.mxu0 %v2147
      %2209 = vmatpush.bf16.msra.mxu0 %v2143
      %2210 = vmatpush.bf16.msra.mxu0 %v2139
      %2211 = vmatmul.bf16.gmra.mxu0 %v1765
      %v2212 = vpop.f32.mrf.mxu0
      %v2213 = vadd.f32 %v2001, %v2212
      %v2214 = vpop.f32.mrf.mxu0
      %2215 = vdwg.mxu0
      %2216 = vmatpush.bf16.msra.mxu0 %v2168
      %2217 = vmatpush.bf16.msra.mxu0 %v2164
      %2218 = vmatpush.bf16.msra.mxu0 %v2160
      %2219 = vmatpush.bf16.msra.mxu0 %v2156
      %2220 = vmatpush.bf16.msra.mxu0 %v2152
      %2221 = vmatpush.bf16.msra.mxu0 %v2148
      %2222 = vmatpush.bf16.msra.mxu0 %v2144
      %2223 = vmatpush.bf16.msra.mxu0 %v2140
      %2224 = vmatmul.bf16.gmra.mxu0 %v1765
      %v2225 = vpop.f32.mrf.mxu0
      %v2226 = vadd.f32 %v2014, %v2225
      %v2227 = vpop.f32.mrf.mxu0
      %2228 = vdwg.mxu0
      %2229 = vmatpush.bf16.msra.mxu0 %v2169
      %2230 = vmatpush.bf16.msra.mxu0 %v2165
      %2231 = vmatpush.bf16.msra.mxu0 %v2161
      %2232 = vmatpush.bf16.msra.mxu0 %v2157
      %2233 = vmatpush.bf16.msra.mxu0 %v2153
      %2234 = vmatpush.bf16.msra.mxu0 %v2149
      %2235 = vmatpush.bf16.msra.mxu0 %v2145
      %2236 = vmatpush.bf16.msra.mxu0 %v2141
      %2237 = vmatmul.bf16.gmra.mxu0 %v1765
      %v2238 = vpop.f32.mrf.mxu0
      %v2239 = vadd.f32 %v2027, %v2238
      %v2240 = vpop.f32.mrf.mxu0
      %2241 = vdwg.mxu0
      %2242 = vmatpush.bf16.msra.mxu0 %v2170
      %2243 = vmatpush.bf16.msra.mxu0 %v2166
      %2244 = vmatpush.bf16.msra.mxu0 %v2162
      %2245 = vmatpush.bf16.msra.mxu0 %v2158
      %2246 = vmatpush.bf16.msra.mxu0 %v2154
      %2247 = vmatpush.bf16.msra.mxu0 %v2150
      %2248 = vmatpush.bf16.msra.mxu0 %v2146
      %2249 = vmatpush.bf16.msra.mxu0 %v2142
      %2250 = vmatmul.bf16.gmra.mxu0 %v1765
      %v2251 = vpop.f32.mrf.mxu0
      %v2252 = vadd.f32 %v2040, %v2251
      %v2253 = vpop.f32.mrf.mxu0
      %2254 = vdwg.mxu0
      %v2255 = vadd.f32 %v2213, %v510
      %v2256 = vadd.f32 %v2226, %v511
      %v2257 = vadd.f32 %v2239, %v512
      %v2258 = vadd.f32 %v2252, %v513
      %v2259 = vxor.u32 %v2255, 2147483648
      %v2260 = vmul.f32 %v2259, 1.442695
      %v2261 = vpow.pop %v2260
      %v2262 = vadd.f32 %v2261, 1.0
      %v2263 = vrcp.pop %v2262
      %v2264 = vmul.f32 %v2262, %v2263
      %v2265 = vsub.f32 1.0, %v2264
      %v2266 = vmul.f32 %v2263, %v2265
      %v2267 = vadd.f32 %v2263, %v2266
      %vm2268 = vweird.f32 %v2262
      %vm2269 = vweird.f32 %v2263
      %vm2270 = vmor %vm2268, %vm2269
      %v2271 = vsel %vm2270, %v2263, %v2267
      %v2272 = vand.u32 2147483647, %v2262
      %vm2273 = vcmp.eq.f32.partialorder %v2272, 8.507059e+37
      %v2274 = vand.u32 %v2262, 2147483648
      %v2275 = vor.u32 1.1754944e-38, %v2274
      %v2276 = vsel %vm2273, %v2275, %v2271
      %v2277 = vmul.f32 1.0, %v2276
      %v2278 = vxor.u32 %v2256, 2147483648
      %v2279 = vmul.f32 %v2278, 1.442695
      %v2280 = vpow.pop %v2279
      %v2281 = vadd.f32 %v2280, 1.0
      %v2282 = vrcp.pop %v2281
      %v2283 = vmul.f32 %v2281, %v2282
      %v2284 = vsub.f32 1.0, %v2283
      %v2285 = vmul.f32 %v2282, %v2284
      %v2286 = vadd.f32 %v2282, %v2285
      %vm2287 = vweird.f32 %v2281
      %vm2288 = vweird.f32 %v2282
      %vm2289 = vmor %vm2287, %vm2288
      %v2290 = vsel %vm2289, %v2282, %v2286
      %v2291 = vand.u32 2147483647, %v2281
      %vm2292 = vcmp.eq.f32.partialorder %v2291, 8.507059e+37
      %v2293 = vand.u32 %v2281, 2147483648
      %v2294 = vor.u32 1.1754944e-38, %v2293
      %v2295 = vsel %vm2292, %v2294, %v2290
      %v2296 = vmul.f32 1.0, %v2295
      %v2297 = vtanh.pop %v2257
      %v2298 = vxor.u32 %v2258, 2147483648
      %v2299 = vmul.f32 %v2298, 1.442695
      %v2300 = vpow.pop %v2299
      %v2301 = vadd.f32 %v2300, 1.0
      %v2302 = vrcp.pop %v2301
      %v2303 = vmul.f32 %v2301, %v2302
      %v2304 = vsub.f32 1.0, %v2303
      %v2305 = vmul.f32 %v2302, %v2304
      %v2306 = vadd.f32 %v2302, %v2305
      %vm2307 = vweird.f32 %v2301
      %vm2308 = vweird.f32 %v2302
      %vm2309 = vmor %vm2307, %vm2308
      %v2310 = vsel %vm2309, %v2302, %v2306
      %v2311 = vand.u32 2147483647, %v2301
      %vm2312 = vcmp.eq.f32.partialorder %v2311, 8.507059e+37
      %v2313 = vand.u32 %v2301, 2147483648
      %v2314 = vor.u32 1.1754944e-38, %v2313
      %v2315 = vsel %vm2312, %v2314, %v2310
      %v2316 = vmul.f32 1.0, %v2315
      %v2317 = vmul.f32 %v2296, %v1427
      %v2318 = vmul.f32 %v2277, %v2297
      %v2319 = vadd.f32 %v2317, %v2318
      %v2320 = vtanh.pop %v2319
      %v2321 = vmul.f32 %v2316, %v2320
      %v2322 = vsel %vm1441, %v2321, %v1426
      %v2323 = vsel %vm1441, %v2319, %v1427
      %v2324 = vsel %vm1441, %v2321, 0.0
      %v2325 = vpack.c.bf16 %v2324, %v2324
      %s2326 = smul.addr %s1433, 4
      %s2327 = scalar_lea.vmem [#allocation12], %s2326
      %2328 = vst [vmem:[%s2327] sm:$0xf] %v2325
      %s2329 = sadd.s32 %s534, 2
      %s2330 = sadd.s32 %s535, %s2329
      %v2331 = vstv %s2330
      %vm2332 = vcmp.lt.s32.totalorder %v2331, %v506
      %v2333 = vsel %vm2332, 1, 0
      %2334 = vset.pattern.permute.xlu0 0
      %2335 = vperm.xlu0 %2334, %v2333
      %v2336 = vpop.permute.xlu0 %2335
      %vm2337 = vcmp.eq.s32.totalorder %v2336, 1
      %s2338 = smul.u32 %s2329, 8
      %s2339 = sshra.s32 %s2338, 3
      %s2340 = sand.u32 %s2338, 7
      %s2341 = smul.u32 %s2339, 4
      %s2342 = smul.addr %s2341, 8
      %s2343 = scalar_lea.vmem [#allocation2], %s2342
      %v2344 = vld [vmem:[%s2343] sm:$0xff]
      %v2345 = vld [vmem:[%s2343 + $0x8] sm:$0xff]
      %v2346 = vld [vmem:[%s2343 + $0x10] sm:$0xff]
      %v2347 = vld [vmem:[%s2343 + $0x18] sm:$0xff]
      %v2348 = vld [vmem:[#allocation11] sm:$0xff]
      %v2349 = vld [vmem:[#allocation11 + $0x8] sm:$0xff]
      %v2350 = vld [vmem:[#allocation11 + $0x10] sm:$0xff]
      %v2351 = vld [vmem:[#allocation11 + $0x18] sm:$0xff]
      %v2352 = vld [vmem:[#allocation11 + $0x20] sm:$0xff]
      %v2353 = vld [vmem:[#allocation11 + $0x28] sm:$0xff]
      %v2354 = vld [vmem:[#allocation11 + $0x30] sm:$0xff]
      %v2355 = vld [vmem:[#allocation11 + $0x38] sm:$0xff]
      %v2356 = vld [vmem:[#allocation11 + $0x40] sm:$0xff]
      %v2357 = vld [vmem:[#allocation11 + $0x48] sm:$0xff]
      %v2358 = vld [vmem:[#allocation11 + $0x50] sm:$0xff]
      %v2359 = vld [vmem:[#allocation11 + $0x58] sm:$0xff]
      %v2360 = vld [vmem:[#allocation11 + $0x60] sm:$0xff]
      %v2361 = vld [vmem:[#allocation11 + $0x68] sm:$0xff]
      %v2362 = vld [vmem:[#allocation11 + $0x70] sm:$0xff]
      %v2363 = vld [vmem:[#allocation11 + $0x78] sm:$0xff]
      %v2364 = vld [vmem:[#allocation11 + $0x80] sm:$0xff]
      %v2365 = vld [vmem:[#allocation11 + $0x88] sm:$0xff]
      %v2366 = vld [vmem:[#allocation11 + $0x90] sm:$0xff]
      %v2367 = vld [vmem:[#allocation11 + $0x98] sm:$0xff]
      %v2368 = vld [vmem:[#allocation11 + $0xa0] sm:$0xff]
      %v2369 = vld [vmem:[#allocation11 + $0xa8] sm:$0xff]
      %v2370 = vld [vmem:[#allocation11 + $0xb0] sm:$0xff]
      %v2371 = vld [vmem:[#allocation11 + $0xb8] sm:$0xff]
      %v2372 = vld [vmem:[#allocation11 + $0xc0] sm:$0xff]
      %v2373 = vld [vmem:[#allocation11 + $0xc8] sm:$0xff]
      %v2374 = vld [vmem:[#allocation11 + $0xd0] sm:$0xff]
      %v2375 = vld [vmem:[#allocation11 + $0xd8] sm:$0xff]
      %v2376 = vld [vmem:[#allocation11 + $0xe0] sm:$0xff]
      %v2377 = vld [vmem:[#allocation11 + $0xe8] sm:$0xff]
      %v2378 = vld [vmem:[#allocation11 + $0xf0] sm:$0xff]
      %v2379 = vld [vmem:[#allocation11 + $0xf8] sm:$0xff]
      %v2412 = vunpack.c.l.b16 %v2348
      %v2413 = vunpack.c.h.b16 %v2348
      %v2414 = vunpack.c.l.b16 %v2349
      %v2415 = vunpack.c.h.b16 %v2349
      %v2416 = vunpack.c.l.b16 %v2350
      %v2417 = vunpack.c.h.b16 %v2350
      %v2418 = vunpack.c.l.b16 %v2351
      %v2419 = vunpack.c.h.b16 %v2351
      %v2420 = vunpack.c.l.b16 %v2352
      %v2421 = vunpack.c.h.b16 %v2352
      %v2422 = vunpack.c.l.b16 %v2353
      %v2423 = vunpack.c.h.b16 %v2353
      %v2424 = vunpack.c.l.b16 %v2354
      %v2425 = vunpack.c.h.b16 %v2354
      %v2426 = vunpack.c.l.b16 %v2355
      %v2427 = vunpack.c.h.b16 %v2355
      %v2428 = vunpack.c.l.b16 %v2356
      %v2429 = vunpack.c.h.b16 %v2356
      %v2430 = vunpack.c.l.b16 %v2357
      %v2431 = vunpack.c.h.b16 %v2357
      %v2432 = vunpack.c.l.b16 %v2358
      %v2433 = vunpack.c.h.b16 %v2358
      %v2434 = vunpack.c.l.b16 %v2359
      %v2435 = vunpack.c.h.b16 %v2359
      %v2436 = vunpack.c.l.b16 %v2360
      %v2437 = vunpack.c.h.b16 %v2360
      %v2438 = vunpack.c.l.b16 %v2361
      %v2439 = vunpack.c.h.b16 %v2361
      %v2440 = vunpack.c.l.b16 %v2362
      %v2441 = vunpack.c.h.b16 %v2362
      %v2442 = vunpack.c.l.b16 %v2363
      %v2443 = vunpack.c.h.b16 %v2363
      %v2444 = vunpack.c.l.b16 %v2364
      %v2445 = vunpack.c.h.b16 %v2364
      %v2446 = vunpack.c.l.b16 %v2365
      %v2447 = vunpack.c.h.b16 %v2365
      %v2448 = vunpack.c.l.b16 %v2366
      %v2449 = vunpack.c.h.b16 %v2366
      %v2450 = vunpack.c.l.b16 %v2367
      %v2451 = vunpack.c.h.b16 %v2367
      %v2452 = vunpack.c.l.b16 %v2368
      %v2453 = vunpack.c.h.b16 %v2368
      %v2454 = vunpack.c.l.b16 %v2369
      %v2455 = vunpack.c.h.b16 %v2369
      %v2456 = vunpack.c.l.b16 %v2370
      %v2457 = vunpack.c.h.b16 %v2370
      %v2458 = vunpack.c.l.b16 %v2371
      %v2459 = vunpack.c.h.b16 %v2371
      %v2460 = vunpack.c.l.b16 %v2372
      %v2461 = vunpack.c.h.b16 %v2372
      %v2462 = vunpack.c.l.b16 %v2373
      %v2463 = vunpack.c.h.b16 %v2373
      %v2464 = vunpack.c.l.b16 %v2374
      %v2465 = vunpack.c.h.b16 %v2374
      %v2466 = vunpack.c.l.b16 %v2375
      %v2467 = vunpack.c.h.b16 %v2375
      %v2468 = vunpack.c.l.b16 %v2376
      %v2469 = vunpack.c.h.b16 %v2376
      %v2470 = vunpack.c.l.b16 %v2377
      %v2471 = vunpack.c.h.b16 %v2377
      %v2472 = vunpack.c.l.b16 %v2378
      %v2473 = vunpack.c.h.b16 %v2378
      %v2474 = vunpack.c.l.b16 %v2379
      %v2475 = vunpack.c.h.b16 %v2379
      %v2476 = vpack.c.b16 %v2416, %v2412
      %v2477 = vpack.c.b16 %v2417, %v2413
      %v2478 = vpack.c.b16 %v2418, %v2414
      %v2479 = vpack.c.b16 %v2419, %v2415
      %v2480 = vpack.c.b16 %v2424, %v2420
      %v2481 = vpack.c.b16 %v2425, %v2421
      %v2482 = vpack.c.b16 %v2426, %v2422
      %v2483 = vpack.c.b16 %v2427, %v2423
      %v2484 = vpack.c.b16 %v2432, %v2428
      %v2485 = vpack.c.b16 %v2433, %v2429
      %v2486 = vpack.c.b16 %v2434, %v2430
      %v2487 = vpack.c.b16 %v2435, %v2431
      %v2488 = vpack.c.b16 %v2440, %v2436
      %v2489 = vpack.c.b16 %v2441, %v2437
      %v2490 = vpack.c.b16 %v2442, %v2438
      %v2491 = vpack.c.b16 %v2443, %v2439
      %v2492 = vpack.c.b16 %v2448, %v2444
      %v2493 = vpack.c.b16 %v2449, %v2445
      %v2494 = vpack.c.b16 %v2450, %v2446
      %v2495 = vpack.c.b16 %v2451, %v2447
      %v2496 = vpack.c.b16 %v2456, %v2452
      %v2497 = vpack.c.b16 %v2457, %v2453
      %v2498 = vpack.c.b16 %v2458, %v2454
      %v2499 = vpack.c.b16 %v2459, %v2455
      %v2500 = vpack.c.b16 %v2464, %v2460
      %v2501 = vpack.c.b16 %v2465, %v2461
      %v2502 = vpack.c.b16 %v2466, %v2462
      %v2503 = vpack.c.b16 %v2467, %v2463
      %v2504 = vpack.c.b16 %v2472, %v2468
      %v2505 = vpack.c.b16 %v2473, %v2469
      %v2506 = vpack.c.b16 %v2474, %v2470
      %v2507 = vpack.c.b16 %v2475, %v2471
      %2540 = vmatpush.bf16.msra.mxu0 %v2504
      %2541 = vmatpush.bf16.msra.mxu0 %v2500
      %2542 = vmatpush.bf16.msra.mxu0 %v2496
      %2543 = vmatpush.bf16.msra.mxu0 %v2492
      %2544 = vmatpush.bf16.msra.mxu0 %v2488
      %2545 = vmatpush.bf16.msra.mxu0 %v2484
      %2546 = vmatpush.bf16.msra.mxu0 %v2480
      %2547 = vmatpush.bf16.msra.mxu0 %v2476
      %2548 = vmatmul.bf16.gmra.mxu0 %v1765
      %v2549 = vpop.f32.mrf.mxu0
      %v2550 = vadd.f32 0.0, %v2549
      %v2551 = vpop.f32.mrf.mxu0
      %2552 = vdwg.mxu0
      %2553 = vmatpush.bf16.msra.mxu0 %v2505
      %2554 = vmatpush.bf16.msra.mxu0 %v2501
      %2555 = vmatpush.bf16.msra.mxu0 %v2497
      %2556 = vmatpush.bf16.msra.mxu0 %v2493
      %2557 = vmatpush.bf16.msra.mxu0 %v2489
      %2558 = vmatpush.bf16.msra.mxu0 %v2485
      %2559 = vmatpush.bf16.msra.mxu0 %v2481
      %2560 = vmatpush.bf16.msra.mxu0 %v2477
      %2561 = vmatmul.bf16.gmra.mxu0 %v1765
      %v2562 = vpop.f32.mrf.mxu0
      %v2563 = vadd.f32 0.0, %v2562
      %v2564 = vpop.f32.mrf.mxu0
      %2565 = vdwg.mxu0
      %2566 = vmatpush.bf16.msra.mxu0 %v2506
      %2567 = vmatpush.bf16.msra.mxu0 %v2502
      %2568 = vmatpush.bf16.msra.mxu0 %v2498
      %2569 = vmatpush.bf16.msra.mxu0 %v2494
      %2570 = vmatpush.bf16.msra.mxu0 %v2490
      %2571 = vmatpush.bf16.msra.mxu0 %v2486
      %2572 = vmatpush.bf16.msra.mxu0 %v2482
      %2573 = vmatpush.bf16.msra.mxu0 %v2478
      %2574 = vmatmul.bf16.gmra.mxu0 %v1765
      %v2575 = vpop.f32.mrf.mxu0
      %v2576 = vadd.f32 0.0, %v2575
      %v2577 = vpop.f32.mrf.mxu0
      %2578 = vdwg.mxu0
      %2579 = vmatpush.bf16.msra.mxu0 %v2507
      %2580 = vmatpush.bf16.msra.mxu0 %v2503
      %2581 = vmatpush.bf16.msra.mxu0 %v2499
      %2582 = vmatpush.bf16.msra.mxu0 %v2495
      %2583 = vmatpush.bf16.msra.mxu0 %v2491
      %2584 = vmatpush.bf16.msra.mxu0 %v2487
      %2585 = vmatpush.bf16.msra.mxu0 %v2483
      %2586 = vmatpush.bf16.msra.mxu0 %v2479
      %2587 = vmatmul.bf16.gmra.mxu0 %v1765
      %v2588 = vpop.f32.mrf.mxu0
      %v2589 = vadd.f32 0.0, %v2588
      %v2590 = vpop.f32.mrf.mxu0
      %2591 = vdwg.mxu0
      %v2592 = vadd.f32 %v2344, %v2550
      %v2593 = vadd.f32 %v2345, %v2563
      %v2594 = vadd.f32 %v2346, %v2576
      %v2595 = vadd.f32 %v2347, %v2589
      %v2596 = vxor.u32 %v2592, 2147483648
      %v2597 = vmul.f32 %v2596, 1.442695
      %v2598 = vpow.pop %v2597
      %v2599 = vadd.f32 %v2598, 1.0
      %v2600 = vrcp.pop %v2599
      %v2601 = vmul.f32 %v2599, %v2600
      %v2602 = vsub.f32 1.0, %v2601
      %v2603 = vmul.f32 %v2600, %v2602
      %v2604 = vadd.f32 %v2600, %v2603
      %vm2605 = vweird.f32 %v2599
      %vm2606 = vweird.f32 %v2600
      %vm2607 = vmor %vm2605, %vm2606
      %v2608 = vsel %vm2607, %v2600, %v2604
      %v2609 = vand.u32 2147483647, %v2599
      %vm2610 = vcmp.eq.f32.partialorder %v2609, 8.507059e+37
      %v2611 = vand.u32 %v2599, 2147483648
      %v2612 = vor.u32 1.1754944e-38, %v2611
      %v2613 = vsel %vm2610, %v2612, %v2608
      %v2614 = vmul.f32 1.0, %v2613
      %v2615 = vxor.u32 %v2593, 2147483648
      %v2616 = vmul.f32 %v2615, 1.442695
      %v2617 = vpow.pop %v2616
      %v2618 = vadd.f32 %v2617, 1.0
      %v2619 = vrcp.pop %v2618
      %v2620 = vmul.f32 %v2618, %v2619
      %v2621 = vsub.f32 1.0, %v2620
      %v2622 = vmul.f32 %v2619, %v2621
      %v2623 = vadd.f32 %v2619, %v2622
      %vm2624 = vweird.f32 %v2618
      %vm2625 = vweird.f32 %v2619
      %vm2626 = vmor %vm2624, %vm2625
      %v2627 = vsel %vm2626, %v2619, %v2623
      %v2628 = vand.u32 2147483647, %v2618
      %vm2629 = vcmp.eq.f32.partialorder %v2628, 8.507059e+37
      %v2630 = vand.u32 %v2618, 2147483648
      %v2631 = vor.u32 1.1754944e-38, %v2630
      %v2632 = vsel %vm2629, %v2631, %v2627
      %v2633 = vmul.f32 1.0, %v2632
      %v2634 = vtanh.pop %v2594
      %v2635 = vxor.u32 %v2595, 2147483648
      %v2636 = vmul.f32 %v2635, 1.442695
      %v2637 = vpow.pop %v2636
      %v2638 = vadd.f32 %v2637, 1.0
      %v2639 = vrcp.pop %v2638
      %v2640 = vmul.f32 %v2638, %v2639
      %v2641 = vsub.f32 1.0, %v2640
      %v2642 = vmul.f32 %v2639, %v2641
      %v2643 = vadd.f32 %v2639, %v2642
      %vm2644 = vweird.f32 %v2638
      %vm2645 = vweird.f32 %v2639
      %vm2646 = vmor %vm2644, %vm2645
      %v2647 = vsel %vm2646, %v2639, %v2643
      %v2648 = vand.u32 2147483647, %v2638
      %vm2649 = vcmp.eq.f32.partialorder %v2648, 8.507059e+37
      %v2650 = vand.u32 %v2638, 2147483648
      %v2651 = vor.u32 1.1754944e-38, %v2650
      %v2652 = vsel %vm2649, %v2651, %v2647
      %v2653 = vmul.f32 1.0, %v2652
      %v2654 = vmul.f32 %v2633, %v1764
      %v2655 = vmul.f32 %v2614, %v2634
      %v2656 = vadd.f32 %v2654, %v2655
      %v2657 = vtanh.pop %v2656
      %v2658 = vmul.f32 %v2653, %v2657
      %v2659 = vsel %vm2337, %v2658, %v1763
      %v2660 = vsel %vm2337, %v2656, %v1764
      %v2661 = vpack.c.bf16 %v2659, %v2659
      %v2662 = vpack.c.bf16 %v2322, %v2322
      %v2663 = vld [vmem:[#allocation9] sm:$0xff]
      %v2664 = vld [vmem:[#allocation9 + $0x8] sm:$0xff]
      %v2665 = vld [vmem:[#allocation9 + $0x10] sm:$0xff]
      %v2666 = vld [vmem:[#allocation9 + $0x18] sm:$0xff]
      %v2667 = vld [vmem:[#allocation9 + $0x20] sm:$0xff]
      %v2668 = vld [vmem:[#allocation9 + $0x28] sm:$0xff]
      %v2669 = vld [vmem:[#allocation9 + $0x30] sm:$0xff]
      %v2670 = vld [vmem:[#allocation9 + $0x38] sm:$0xff]
      %v2671 = vld [vmem:[#allocation9 + $0x40] sm:$0xff]
      %v2672 = vld [vmem:[#allocation9 + $0x48] sm:$0xff]
      %v2673 = vld [vmem:[#allocation9 + $0x50] sm:$0xff]
      %v2674 = vld [vmem:[#allocation9 + $0x58] sm:$0xff]
      %v2675 = vld [vmem:[#allocation9 + $0x60] sm:$0xff]
      %v2676 = vld [vmem:[#allocation9 + $0x68] sm:$0xff]
      %v2677 = vld [vmem:[#allocation9 + $0x70] sm:$0xff]
      %v2678 = vld [vmem:[#allocation9 + $0x78] sm:$0xff]
      %v2679 = vld [vmem:[#allocation9 + $0x80] sm:$0xff]
      %v2680 = vld [vmem:[#allocation9 + $0x88] sm:$0xff]
      %v2681 = vld [vmem:[#allocation9 + $0x90] sm:$0xff]
      %v2682 = vld [vmem:[#allocation9 + $0x98] sm:$0xff]
      %v2683 = vld [vmem:[#allocation9 + $0xa0] sm:$0xff]
      %v2684 = vld [vmem:[#allocation9 + $0xa8] sm:$0xff]
      %v2685 = vld [vmem:[#allocation9 + $0xb0] sm:$0xff]
      %v2686 = vld [vmem:[#allocation9 + $0xb8] sm:$0xff]
      %v2687 = vld [vmem:[#allocation9 + $0xc0] sm:$0xff]
      %v2688 = vld [vmem:[#allocation9 + $0xc8] sm:$0xff]
      %v2689 = vld [vmem:[#allocation9 + $0xd0] sm:$0xff]
      %v2690 = vld [vmem:[#allocation9 + $0xd8] sm:$0xff]
      %v2691 = vld [vmem:[#allocation9 + $0xe0] sm:$0xff]
      %v2692 = vld [vmem:[#allocation9 + $0xe8] sm:$0xff]
      %v2693 = vld [vmem:[#allocation9 + $0xf0] sm:$0xff]
      %v2694 = vld [vmem:[#allocation9 + $0xf8] sm:$0xff]
      %v2695 = vld [vmem:[%s902] sm:$0xff]
      %v2696 = vld [vmem:[%s902 + $0x8] sm:$0xff]
      %v2697 = vld [vmem:[%s902 + $0x10] sm:$0xff]
      %v2698 = vld [vmem:[%s902 + $0x18] sm:$0xff]
      %v2699 = vld [vmem:[%s902 + $0x20] sm:$0xff]
      %v2700 = vld [vmem:[%s902 + $0x28] sm:$0xff]
      %v2701 = vld [vmem:[%s902 + $0x30] sm:$0xff]
      %v2702 = vld [vmem:[%s902 + $0x38] sm:$0xff]
      %v2703 = vld [vmem:[%s902 + $0x40] sm:$0xff]
      %v2704 = vld [vmem:[%s902 + $0x48] sm:$0xff]
      %v2705 = vld [vmem:[%s902 + $0x50] sm:$0xff]
      %v2706 = vld [vmem:[%s902 + $0x58] sm:$0xff]
      %v2707 = vld [vmem:[%s902 + $0x60] sm:$0xff]
      %v2708 = vld [vmem:[%s902 + $0x68] sm:$0xff]
      %v2709 = vld [vmem:[%s902 + $0x70] sm:$0xff]
      %v2710 = vld [vmem:[%s902 + $0x78] sm:$0xff]
      %v2711 = vld [vmem:[%s902 + $0x80] sm:$0xff]
      %v2712 = vld [vmem:[%s902 + $0x88] sm:$0xff]
      %v2713 = vld [vmem:[%s902 + $0x90] sm:$0xff]
      %v2714 = vld [vmem:[%s902 + $0x98] sm:$0xff]
      %v2715 = vld [vmem:[%s902 + $0xa0] sm:$0xff]
      %v2716 = vld [vmem:[%s902 + $0xa8] sm:$0xff]
      %v2717 = vld [vmem:[%s902 + $0xb0] sm:$0xff]
      %v2718 = vld [vmem:[%s902 + $0xb8] sm:$0xff]
      %v2719 = vld [vmem:[%s902 + $0xc0] sm:$0xff]
      %v2720 = vld [vmem:[%s902 + $0xc8] sm:$0xff]
      %v2721 = vld [vmem:[%s902 + $0xd0] sm:$0xff]
      %v2722 = vld [vmem:[%s902 + $0xd8] sm:$0xff]
      %v2723 = vld [vmem:[%s902 + $0xe0] sm:$0xff]
      %v2724 = vld [vmem:[%s902 + $0xe8] sm:$0xff]
      %v2725 = vld [vmem:[%s902 + $0xf0] sm:$0xff]
      %v2726 = vld [vmem:[%s902 + $0xf8] sm:$0xff]
      %v2759 = vunpack.c.l.b16 %v2695
      %v2760 = vunpack.c.h.b16 %v2695
      %v2761 = vunpack.c.l.b16 %v2696
      %v2762 = vunpack.c.h.b16 %v2696
      %v2763 = vunpack.c.l.b16 %v2697
      %v2764 = vunpack.c.h.b16 %v2697
      %v2765 = vunpack.c.l.b16 %v2698
      %v2766 = vunpack.c.h.b16 %v2698
      %v2767 = vunpack.c.l.b16 %v2699
      %v2768 = vunpack.c.h.b16 %v2699
      %v2769 = vunpack.c.l.b16 %v2700
      %v2770 = vunpack.c.h.b16 %v2700
      %v2771 = vunpack.c.l.b16 %v2701
      %v2772 = vunpack.c.h.b16 %v2701
      %v2773 = vunpack.c.l.b16 %v2702
      %v2774 = vunpack.c.h.b16 %v2702
      %v2775 = vunpack.c.l.b16 %v2703
      %v2776 = vunpack.c.h.b16 %v2703
      %v2777 = vunpack.c.l.b16 %v2704
      %v2778 = vunpack.c.h.b16 %v2704
      %v2779 = vunpack.c.l.b16 %v2705
      %v2780 = vunpack.c.h.b16 %v2705
      %v2781 = vunpack.c.l.b16 %v2706
      %v2782 = vunpack.c.h.b16 %v2706
      %v2783 = vunpack.c.l.b16 %v2707
      %v2784 = vunpack.c.h.b16 %v2707
      %v2785 = vunpack.c.l.b16 %v2708
      %v2786 = vunpack.c.h.b16 %v2708
      %v2787 = vunpack.c.l.b16 %v2709
      %v2788 = vunpack.c.h.b16 %v2709
      %v2789 = vunpack.c.l.b16 %v2710
      %v2790 = vunpack.c.h.b16 %v2710
      %v2791 = vunpack.c.l.b16 %v2711
      %v2792 = vunpack.c.h.b16 %v2711
      %v2793 = vunpack.c.l.b16 %v2712
      %v2794 = vunpack.c.h.b16 %v2712
      %v2795 = vunpack.c.l.b16 %v2713
      %v2796 = vunpack.c.h.b16 %v2713
      %v2797 = vunpack.c.l.b16 %v2714
      %v2798 = vunpack.c.h.b16 %v2714
      %v2799 = vunpack.c.l.b16 %v2715
      %v2800 = vunpack.c.h.b16 %v2715
      %v2801 = vunpack.c.l.b16 %v2716
      %v2802 = vunpack.c.h.b16 %v2716
      %v2803 = vunpack.c.l.b16 %v2717
      %v2804 = vunpack.c.h.b16 %v2717
      %v2805 = vunpack.c.l.b16 %v2718
      %v2806 = vunpack.c.h.b16 %v2718
      %v2807 = vunpack.c.l.b16 %v2719
      %v2808 = vunpack.c.h.b16 %v2719
      %v2809 = vunpack.c.l.b16 %v2720
      %v2810 = vunpack.c.h.b16 %v2720
      %v2811 = vunpack.c.l.b16 %v2721
      %v2812 = vunpack.c.h.b16 %v2721
      %v2813 = vunpack.c.l.b16 %v2722
      %v2814 = vunpack.c.h.b16 %v2722
      %v2815 = vunpack.c.l.b16 %v2723
      %v2816 = vunpack.c.h.b16 %v2723
      %v2817 = vunpack.c.l.b16 %v2724
      %v2818 = vunpack.c.h.b16 %v2724
      %v2819 = vunpack.c.l.b16 %v2725
      %v2820 = vunpack.c.h.b16 %v2725
      %v2821 = vunpack.c.l.b16 %v2726
      %v2822 = vunpack.c.h.b16 %v2726
      %v2823 = vpack.c.b16 %v2763, %v2759
      %v2824 = vpack.c.b16 %v2764, %v2760
      %v2825 = vpack.c.b16 %v2765, %v2761
      %v2826 = vpack.c.b16 %v2766, %v2762
      %v2827 = vpack.c.b16 %v2771, %v2767
      %v2828 = vpack.c.b16 %v2772, %v2768
      %v2829 = vpack.c.b16 %v2773, %v2769
      %v2830 = vpack.c.b16 %v2774, %v2770
      %v2831 = vpack.c.b16 %v2779, %v2775
      %v2832 = vpack.c.b16 %v2780, %v2776
      %v2833 = vpack.c.b16 %v2781, %v2777
      %v2834 = vpack.c.b16 %v2782, %v2778
      %v2835 = vpack.c.b16 %v2787, %v2783
      %v2836 = vpack.c.b16 %v2788, %v2784
      %v2837 = vpack.c.b16 %v2789, %v2785
      %v2838 = vpack.c.b16 %v2790, %v2786
      %v2839 = vpack.c.b16 %v2795, %v2791
      %v2840 = vpack.c.b16 %v2796, %v2792
      %v2841 = vpack.c.b16 %v2797, %v2793
      %v2842 = vpack.c.b16 %v2798, %v2794
      %v2843 = vpack.c.b16 %v2803, %v2799
      %v2844 = vpack.c.b16 %v2804, %v2800
      %v2845 = vpack.c.b16 %v2805, %v2801
      %v2846 = vpack.c.b16 %v2806, %v2802
      %v2847 = vpack.c.b16 %v2811, %v2807
      %v2848 = vpack.c.b16 %v2812, %v2808
      %v2849 = vpack.c.b16 %v2813, %v2809
      %v2850 = vpack.c.b16 %v2814, %v2810
      %v2851 = vpack.c.b16 %v2819, %v2815
      %v2852 = vpack.c.b16 %v2820, %v2816
      %v2853 = vpack.c.b16 %v2821, %v2817
      %v2854 = vpack.c.b16 %v2822, %v2818
      %2887 = vmatpush.bf16.msra.mxu0 %v2851
      %2888 = vmatpush.bf16.msra.mxu0 %v2847
      %2889 = vmatpush.bf16.msra.mxu0 %v2843
      %2890 = vmatpush.bf16.msra.mxu0 %v2839
      %2891 = vmatpush.bf16.msra.mxu0 %v2835
      %2892 = vmatpush.bf16.msra.mxu0 %v2831
      %2893 = vmatpush.bf16.msra.mxu0 %v2827
      %2894 = vmatpush.bf16.msra.mxu0 %v2823
      %2895 = vmatmul.bf16.gmra.mxu0 %v2662
      %v2896 = vpop.f32.mrf.mxu0
      %v2897 = vadd.f32 0.0, %v2896
      %v2898 = vpop.f32.mrf.mxu0
      %2899 = vdwg.mxu0
      %2900 = vmatpush.bf16.msra.mxu0 %v2852
      %2901 = vmatpush.bf16.msra.mxu0 %v2848
      %2902 = vmatpush.bf16.msra.mxu0 %v2844
      %2903 = vmatpush.bf16.msra.mxu0 %v2840
      %2904 = vmatpush.bf16.msra.mxu0 %v2836
      %2905 = vmatpush.bf16.msra.mxu0 %v2832
      %2906 = vmatpush.bf16.msra.mxu0 %v2828
      %2907 = vmatpush.bf16.msra.mxu0 %v2824
      %2908 = vmatmul.bf16.gmra.mxu0 %v2662
      %v2909 = vpop.f32.mrf.mxu0
      %v2910 = vadd.f32 0.0, %v2909
      %v2911 = vpop.f32.mrf.mxu0
      %2912 = vdwg.mxu0
      %2913 = vmatpush.bf16.msra.mxu0 %v2853
      %2914 = vmatpush.bf16.msra.mxu0 %v2849
      %2915 = vmatpush.bf16.msra.mxu0 %v2845
      %2916 = vmatpush.bf16.msra.mxu0 %v2841
      %2917 = vmatpush.bf16.msra.mxu0 %v2837
      %2918 = vmatpush.bf16.msra.mxu0 %v2833
      %2919 = vmatpush.bf16.msra.mxu0 %v2829
      %2920 = vmatpush.bf16.msra.mxu0 %v2825
      %2921 = vmatmul.bf16.gmra.mxu0 %v2662
      %v2922 = vpop.f32.mrf.mxu0
      %v2923 = vadd.f32 0.0, %v2922
      %v2924 = vpop.f32.mrf.mxu0
      %2925 = vdwg.mxu0
      %2926 = vmatpush.bf16.msra.mxu0 %v2854
      %2927 = vmatpush.bf16.msra.mxu0 %v2850
      %2928 = vmatpush.bf16.msra.mxu0 %v2846
      %2929 = vmatpush.bf16.msra.mxu0 %v2842
      %2930 = vmatpush.bf16.msra.mxu0 %v2838
      %2931 = vmatpush.bf16.msra.mxu0 %v2834
      %2932 = vmatpush.bf16.msra.mxu0 %v2830
      %2933 = vmatpush.bf16.msra.mxu0 %v2826
      %2934 = vmatmul.bf16.gmra.mxu0 %v2662
      %v2935 = vpop.f32.mrf.mxu0
      %v2936 = vadd.f32 0.0, %v2935
      %v2937 = vpop.f32.mrf.mxu0
      %2938 = vdwg.mxu0
      %v2971 = vunpack.c.l.b16 %v2663
      %v2972 = vunpack.c.h.b16 %v2663
      %v2973 = vunpack.c.l.b16 %v2664
      %v2974 = vunpack.c.h.b16 %v2664
      %v2975 = vunpack.c.l.b16 %v2665
      %v2976 = vunpack.c.h.b16 %v2665
      %v2977 = vunpack.c.l.b16 %v2666
      %v2978 = vunpack.c.h.b16 %v2666
      %v2979 = vunpack.c.l.b16 %v2667
      %v2980 = vunpack.c.h.b16 %v2667
      %v2981 = vunpack.c.l.b16 %v2668
      %v2982 = vunpack.c.h.b16 %v2668
      %v2983 = vunpack.c.l.b16 %v2669
      %v2984 = vunpack.c.h.b16 %v2669
      %v2985 = vunpack.c.l.b16 %v2670
      %v2986 = vunpack.c.h.b16 %v2670
      %v2987 = vunpack.c.l.b16 %v2671
      %v2988 = vunpack.c.h.b16 %v2671
      %v2989 = vunpack.c.l.b16 %v2672
      %v2990 = vunpack.c.h.b16 %v2672
      %v2991 = vunpack.c.l.b16 %v2673
      %v2992 = vunpack.c.h.b16 %v2673
      %v2993 = vunpack.c.l.b16 %v2674
      %v2994 = vunpack.c.h.b16 %v2674
      %v2995 = vunpack.c.l.b16 %v2675
      %v2996 = vunpack.c.h.b16 %v2675
      %v2997 = vunpack.c.l.b16 %v2676
      %v2998 = vunpack.c.h.b16 %v2676
      %v2999 = vunpack.c.l.b16 %v2677
      %v3000 = vunpack.c.h.b16 %v2677
      %v3001 = vunpack.c.l.b16 %v2678
      %v3002 = vunpack.c.h.b16 %v2678
      %v3003 = vunpack.c.l.b16 %v2679
      %v3004 = vunpack.c.h.b16 %v2679
      %v3005 = vunpack.c.l.b16 %v2680
      %v3006 = vunpack.c.h.b16 %v2680
      %v3007 = vunpack.c.l.b16 %v2681
      %v3008 = vunpack.c.h.b16 %v2681
      %v3009 = vunpack.c.l.b16 %v2682
      %v3010 = vunpack.c.h.b16 %v2682
      %v3011 = vunpack.c.l.b16 %v2683
      %v3012 = vunpack.c.h.b16 %v2683
      %v3013 = vunpack.c.l.b16 %v2684
      %v3014 = vunpack.c.h.b16 %v2684
      %v3015 = vunpack.c.l.b16 %v2685
      %v3016 = vunpack.c.h.b16 %v2685
      %v3017 = vunpack.c.l.b16 %v2686
      %v3018 = vunpack.c.h.b16 %v2686
      %v3019 = vunpack.c.l.b16 %v2687
      %v3020 = vunpack.c.h.b16 %v2687
      %v3021 = vunpack.c.l.b16 %v2688
      %v3022 = vunpack.c.h.b16 %v2688
      %v3023 = vunpack.c.l.b16 %v2689
      %v3024 = vunpack.c.h.b16 %v2689
      %v3025 = vunpack.c.l.b16 %v2690
      %v3026 = vunpack.c.h.b16 %v2690
      %v3027 = vunpack.c.l.b16 %v2691
      %v3028 = vunpack.c.h.b16 %v2691
      %v3029 = vunpack.c.l.b16 %v2692
      %v3030 = vunpack.c.h.b16 %v2692
      %v3031 = vunpack.c.l.b16 %v2693
      %v3032 = vunpack.c.h.b16 %v2693
      %v3033 = vunpack.c.l.b16 %v2694
      %v3034 = vunpack.c.h.b16 %v2694
      %v3035 = vpack.c.b16 %v2975, %v2971
      %v3036 = vpack.c.b16 %v2976, %v2972
      %v3037 = vpack.c.b16 %v2977, %v2973
      %v3038 = vpack.c.b16 %v2978, %v2974
      %v3039 = vpack.c.b16 %v2983, %v2979
      %v3040 = vpack.c.b16 %v2984, %v2980
      %v3041 = vpack.c.b16 %v2985, %v2981
      %v3042 = vpack.c.b16 %v2986, %v2982
      %v3043 = vpack.c.b16 %v2991, %v2987
      %v3044 = vpack.c.b16 %v2992, %v2988
      %v3045 = vpack.c.b16 %v2993, %v2989
      %v3046 = vpack.c.b16 %v2994, %v2990
      %v3047 = vpack.c.b16 %v2999, %v2995
      %v3048 = vpack.c.b16 %v3000, %v2996
      %v3049 = vpack.c.b16 %v3001, %v2997
      %v3050 = vpack.c.b16 %v3002, %v2998
      %v3051 = vpack.c.b16 %v3007, %v3003
      %v3052 = vpack.c.b16 %v3008, %v3004
      %v3053 = vpack.c.b16 %v3009, %v3005
      %v3054 = vpack.c.b16 %v3010, %v3006
      %v3055 = vpack.c.b16 %v3015, %v3011
      %v3056 = vpack.c.b16 %v3016, %v3012
      %v3057 = vpack.c.b16 %v3017, %v3013
      %v3058 = vpack.c.b16 %v3018, %v3014
      %v3059 = vpack.c.b16 %v3023, %v3019
      %v3060 = vpack.c.b16 %v3024, %v3020
      %v3061 = vpack.c.b16 %v3025, %v3021
      %v3062 = vpack.c.b16 %v3026, %v3022
      %v3063 = vpack.c.b16 %v3031, %v3027
      %v3064 = vpack.c.b16 %v3032, %v3028
      %v3065 = vpack.c.b16 %v3033, %v3029
      %v3066 = vpack.c.b16 %v3034, %v3030
      %3099 = vmatpush.bf16.msra.mxu0 %v3063
      %3100 = vmatpush.bf16.msra.mxu0 %v3059
      %3101 = vmatpush.bf16.msra.mxu0 %v3055
      %3102 = vmatpush.bf16.msra.mxu0 %v3051
      %3103 = vmatpush.bf16.msra.mxu0 %v3047
      %3104 = vmatpush.bf16.msra.mxu0 %v3043
      %3105 = vmatpush.bf16.msra.mxu0 %v3039
      %3106 = vmatpush.bf16.msra.mxu0 %v3035
      %3107 = vmatmul.bf16.gmra.mxu0 %v2661
      %v3108 = vpop.f32.mrf.mxu0
      %v3109 = vadd.f32 %v2897, %v3108
      %v3110 = vpop.f32.mrf.mxu0
      %3111 = vdwg.mxu0
      %3112 = vmatpush.bf16.msra.mxu0 %v3064
      %3113 = vmatpush.bf16.msra.mxu0 %v3060
      %3114 = vmatpush.bf16.msra.mxu0 %v3056
      %3115 = vmatpush.bf16.msra.mxu0 %v3052
      %3116 = vmatpush.bf16.msra.mxu0 %v3048
      %3117 = vmatpush.bf16.msra.mxu0 %v3044
      %3118 = vmatpush.bf16.msra.mxu0 %v3040
      %3119 = vmatpush.bf16.msra.mxu0 %v3036
      %3120 = vmatmul.bf16.gmra.mxu0 %v2661
      %v3121 = vpop.f32.mrf.mxu0
      %v3122 = vadd.f32 %v2910, %v3121
      %v3123 = vpop.f32.mrf.mxu0
      %3124 = vdwg.mxu0
      %3125 = vmatpush.bf16.msra.mxu0 %v3065
      %3126 = vmatpush.bf16.msra.mxu0 %v3061
      %3127 = vmatpush.bf16.msra.mxu0 %v3057
      %3128 = vmatpush.bf16.msra.mxu0 %v3053
      %3129 = vmatpush.bf16.msra.mxu0 %v3049
      %3130 = vmatpush.bf16.msra.mxu0 %v3045
      %3131 = vmatpush.bf16.msra.mxu0 %v3041
      %3132 = vmatpush.bf16.msra.mxu0 %v3037
      %3133 = vmatmul.bf16.gmra.mxu0 %v2661
      %v3134 = vpop.f32.mrf.mxu0
      %v3135 = vadd.f32 %v2923, %v3134
      %v3136 = vpop.f32.mrf.mxu0
      %3137 = vdwg.mxu0
      %3138 = vmatpush.bf16.msra.mxu0 %v3066
      %3139 = vmatpush.bf16.msra.mxu0 %v3062
      %3140 = vmatpush.bf16.msra.mxu0 %v3058
      %3141 = vmatpush.bf16.msra.mxu0 %v3054
      %3142 = vmatpush.bf16.msra.mxu0 %v3050
      %3143 = vmatpush.bf16.msra.mxu0 %v3046
      %3144 = vmatpush.bf16.msra.mxu0 %v3042
      %3145 = vmatpush.bf16.msra.mxu0 %v3038
      %3146 = vmatmul.bf16.gmra.mxu0 %v2661
      %v3147 = vpop.f32.mrf.mxu0
      %v3148 = vadd.f32 %v2936, %v3147
      %v3149 = vpop.f32.mrf.mxu0
      %3150 = vdwg.mxu0
      %v3151 = vadd.f32 %v3109, %v510
      %v3152 = vadd.f32 %v3122, %v511
      %v3153 = vadd.f32 %v3135, %v512
      %v3154 = vadd.f32 %v3148, %v513
      %v3155 = vxor.u32 %v3151, 2147483648
      %v3156 = vmul.f32 %v3155, 1.442695
      %v3157 = vpow.pop %v3156
      %v3158 = vadd.f32 %v3157, 1.0
      %v3159 = vrcp.pop %v3158
      %v3160 = vmul.f32 %v3158, %v3159
      %v3161 = vsub.f32 1.0, %v3160
      %v3162 = vmul.f32 %v3159, %v3161
      %v3163 = vadd.f32 %v3159, %v3162
      %vm3164 = vweird.f32 %v3158
      %vm3165 = vweird.f32 %v3159
      %vm3166 = vmor %vm3164, %vm3165
      %v3167 = vsel %vm3166, %v3159, %v3163
      %v3168 = vand.u32 2147483647, %v3158
      %vm3169 = vcmp.eq.f32.partialorder %v3168, 8.507059e+37
      %v3170 = vand.u32 %v3158, 2147483648
      %v3171 = vor.u32 1.1754944e-38, %v3170
      %v3172 = vsel %vm3169, %v3171, %v3167
      %v3173 = vmul.f32 1.0, %v3172
      %v3174 = vxor.u32 %v3152, 2147483648
      %v3175 = vmul.f32 %v3174, 1.442695
      %v3176 = vpow.pop %v3175
      %v3177 = vadd.f32 %v3176, 1.0
      %v3178 = vrcp.pop %v3177
      %v3179 = vmul.f32 %v3177, %v3178
      %v3180 = vsub.f32 1.0, %v3179
      %v3181 = vmul.f32 %v3178, %v3180
      %v3182 = vadd.f32 %v3178, %v3181
      %vm3183 = vweird.f32 %v3177
      %vm3184 = vweird.f32 %v3178
      %vm3185 = vmor %vm3183, %vm3184
      %v3186 = vsel %vm3185, %v3178, %v3182
      %v3187 = vand.u32 2147483647, %v3177
      %vm3188 = vcmp.eq.f32.partialorder %v3187, 8.507059e+37
      %v3189 = vand.u32 %v3177, 2147483648
      %v3190 = vor.u32 1.1754944e-38, %v3189
      %v3191 = vsel %vm3188, %v3190, %v3186
      %v3192 = vmul.f32 1.0, %v3191
      %v3193 = vtanh.pop %v3153
      %v3194 = vxor.u32 %v3154, 2147483648
      %v3195 = vmul.f32 %v3194, 1.442695
      %v3196 = vpow.pop %v3195
      %v3197 = vadd.f32 %v3196, 1.0
      %v3198 = vrcp.pop %v3197
      %v3199 = vmul.f32 %v3197, %v3198
      %v3200 = vsub.f32 1.0, %v3199
      %v3201 = vmul.f32 %v3198, %v3200
      %v3202 = vadd.f32 %v3198, %v3201
      %vm3203 = vweird.f32 %v3197
      %vm3204 = vweird.f32 %v3198
      %vm3205 = vmor %vm3203, %vm3204
      %v3206 = vsel %vm3205, %v3198, %v3202
      %v3207 = vand.u32 2147483647, %v3197
      %vm3208 = vcmp.eq.f32.partialorder %v3207, 8.507059e+37
      %v3209 = vand.u32 %v3197, 2147483648
      %v3210 = vor.u32 1.1754944e-38, %v3209
      %v3211 = vsel %vm3208, %v3210, %v3206
      %v3212 = vmul.f32 1.0, %v3211
      %v3213 = vmul.f32 %v3192, %v2323
      %v3214 = vmul.f32 %v3173, %v3193
      %v3215 = vadd.f32 %v3213, %v3214
      %v3216 = vtanh.pop %v3215
      %v3217 = vmul.f32 %v3212, %v3216
      %v3218 = vsel %vm2337, %v3217, %v2322
      %v3219 = vsel %vm2337, %v3215, %v2323
      %v3220 = vsel %vm2337, %v3217, 0.0
      %v3221 = vpack.c.bf16 %v3220, %v3220
      %s3222 = smul.addr %s2329, 4
      %s3223 = scalar_lea.vmem [#allocation12], %s3222
      %3224 = vst [vmem:[%s3223] sm:$0xf] %v3221
      %s3225 = sadd.s32 %s534, 3
      %s3226 = sadd.s32 %s535, %s3225
      %v3227 = vstv %s3226
      %vm3228 = vcmp.lt.s32.totalorder %v3227, %v506
      %v3229 = vsel %vm3228, 1, 0
      %3230 = vset.pattern.permute.xlu0 0
      %3231 = vperm.xlu0 %3230, %v3229
      %v3232 = vpop.permute.xlu0 %3231
      %vm3233 = vcmp.eq.s32.totalorder %v3232, 1
      %s3234 = smul.u32 %s3225, 8
      %s3235 = sshra.s32 %s3234, 3
      %s3236 = sand.u32 %s3234, 7
      %s3237 = smul.u32 %s3235, 4
      %s3238 = smul.addr %s3237, 8
      %s3239 = scalar_lea.vmem [#allocation2], %s3238
      %v3240 = vld [vmem:[%s3239] sm:$0xff]
      %v3241 = vld [vmem:[%s3239 + $0x8] sm:$0xff]
      %v3242 = vld [vmem:[%s3239 + $0x10] sm:$0xff]
      %v3243 = vld [vmem:[%s3239 + $0x18] sm:$0xff]
      %v3244 = vld [vmem:[#allocation11] sm:$0xff]
      %v3245 = vld [vmem:[#allocation11 + $0x8] sm:$0xff]
      %v3246 = vld [vmem:[#allocation11 + $0x10] sm:$0xff]
      %v3247 = vld [vmem:[#allocation11 + $0x18] sm:$0xff]
      %v3248 = vld [vmem:[#allocation11 + $0x20] sm:$0xff]
      %v3249 = vld [vmem:[#allocation11 + $0x28] sm:$0xff]
      %v3250 = vld [vmem:[#allocation11 + $0x30] sm:$0xff]
      %v3251 = vld [vmem:[#allocation11 + $0x38] sm:$0xff]
      %v3252 = vld [vmem:[#allocation11 + $0x40] sm:$0xff]
      %v3253 = vld [vmem:[#allocation11 + $0x48] sm:$0xff]
      %v3254 = vld [vmem:[#allocation11 + $0x50] sm:$0xff]
      %v3255 = vld [vmem:[#allocation11 + $0x58] sm:$0xff]
      %v3256 = vld [vmem:[#allocation11 + $0x60] sm:$0xff]
      %v3257 = vld [vmem:[#allocation11 + $0x68] sm:$0xff]
      %v3258 = vld [vmem:[#allocation11 + $0x70] sm:$0xff]
      %v3259 = vld [vmem:[#allocation11 + $0x78] sm:$0xff]
      %v3260 = vld [vmem:[#allocation11 + $0x80] sm:$0xff]
      %v3261 = vld [vmem:[#allocation11 + $0x88] sm:$0xff]
      %v3262 = vld [vmem:[#allocation11 + $0x90] sm:$0xff]
      %v3263 = vld [vmem:[#allocation11 + $0x98] sm:$0xff]
      %v3264 = vld [vmem:[#allocation11 + $0xa0] sm:$0xff]
      %v3265 = vld [vmem:[#allocation11 + $0xa8] sm:$0xff]
      %v3266 = vld [vmem:[#allocation11 + $0xb0] sm:$0xff]
      %v3267 = vld [vmem:[#allocation11 + $0xb8] sm:$0xff]
      %v3268 = vld [vmem:[#allocation11 + $0xc0] sm:$0xff]
      %v3269 = vld [vmem:[#allocation11 + $0xc8] sm:$0xff]
      %v3270 = vld [vmem:[#allocation11 + $0xd0] sm:$0xff]
      %v3271 = vld [vmem:[#allocation11 + $0xd8] sm:$0xff]
      %v3272 = vld [vmem:[#allocation11 + $0xe0] sm:$0xff]
      %v3273 = vld [vmem:[#allocation11 + $0xe8] sm:$0xff]
      %v3274 = vld [vmem:[#allocation11 + $0xf0] sm:$0xff]
      %v3275 = vld [vmem:[#allocation11 + $0xf8] sm:$0xff]
      %v3308 = vunpack.c.l.b16 %v3244
      %v3309 = vunpack.c.h.b16 %v3244
      %v3310 = vunpack.c.l.b16 %v3245
      %v3311 = vunpack.c.h.b16 %v3245
      %v3312 = vunpack.c.l.b16 %v3246
      %v3313 = vunpack.c.h.b16 %v3246
      %v3314 = vunpack.c.l.b16 %v3247
      %v3315 = vunpack.c.h.b16 %v3247
      %v3316 = vunpack.c.l.b16 %v3248
      %v3317 = vunpack.c.h.b16 %v3248
      %v3318 = vunpack.c.l.b16 %v3249
      %v3319 = vunpack.c.h.b16 %v3249
      %v3320 = vunpack.c.l.b16 %v3250
      %v3321 = vunpack.c.h.b16 %v3250
      %v3322 = vunpack.c.l.b16 %v3251
      %v3323 = vunpack.c.h.b16 %v3251
      %v3324 = vunpack.c.l.b16 %v3252
      %v3325 = vunpack.c.h.b16 %v3252
      %v3326 = vunpack.c.l.b16 %v3253
      %v3327 = vunpack.c.h.b16 %v3253
      %v3328 = vunpack.c.l.b16 %v3254
      %v3329 = vunpack.c.h.b16 %v3254
      %v3330 = vunpack.c.l.b16 %v3255
      %v3331 = vunpack.c.h.b16 %v3255
      %v3332 = vunpack.c.l.b16 %v3256
      %v3333 = vunpack.c.h.b16 %v3256
      %v3334 = vunpack.c.l.b16 %v3257
      %v3335 = vunpack.c.h.b16 %v3257
      %v3336 = vunpack.c.l.b16 %v3258
      %v3337 = vunpack.c.h.b16 %v3258
      %v3338 = vunpack.c.l.b16 %v3259
      %v3339 = vunpack.c.h.b16 %v3259
      %v3340 = vunpack.c.l.b16 %v3260
      %v3341 = vunpack.c.h.b16 %v3260
      %v3342 = vunpack.c.l.b16 %v3261
      %v3343 = vunpack.c.h.b16 %v3261
      %v3344 = vunpack.c.l.b16 %v3262
      %v3345 = vunpack.c.h.b16 %v3262
      %v3346 = vunpack.c.l.b16 %v3263
      %v3347 = vunpack.c.h.b16 %v3263
      %v3348 = vunpack.c.l.b16 %v3264
      %v3349 = vunpack.c.h.b16 %v3264
      %v3350 = vunpack.c.l.b16 %v3265
      %v3351 = vunpack.c.h.b16 %v3265
      %v3352 = vunpack.c.l.b16 %v3266
      %v3353 = vunpack.c.h.b16 %v3266
      %v3354 = vunpack.c.l.b16 %v3267
      %v3355 = vunpack.c.h.b16 %v3267
      %v3356 = vunpack.c.l.b16 %v3268
      %v3357 = vunpack.c.h.b16 %v3268
      %v3358 = vunpack.c.l.b16 %v3269
      %v3359 = vunpack.c.h.b16 %v3269
      %v3360 = vunpack.c.l.b16 %v3270
      %v3361 = vunpack.c.h.b16 %v3270
      %v3362 = vunpack.c.l.b16 %v3271
      %v3363 = vunpack.c.h.b16 %v3271
      %v3364 = vunpack.c.l.b16 %v3272
      %v3365 = vunpack.c.h.b16 %v3272
      %v3366 = vunpack.c.l.b16 %v3273
      %v3367 = vunpack.c.h.b16 %v3273
      %v3368 = vunpack.c.l.b16 %v3274
      %v3369 = vunpack.c.h.b16 %v3274
      %v3370 = vunpack.c.l.b16 %v3275
      %v3371 = vunpack.c.h.b16 %v3275
      %v3372 = vpack.c.b16 %v3312, %v3308
      %v3373 = vpack.c.b16 %v3313, %v3309
      %v3374 = vpack.c.b16 %v3314, %v3310
      %v3375 = vpack.c.b16 %v3315, %v3311
      %v3376 = vpack.c.b16 %v3320, %v3316
      %v3377 = vpack.c.b16 %v3321, %v3317
      %v3378 = vpack.c.b16 %v3322, %v3318
      %v3379 = vpack.c.b16 %v3323, %v3319
      %v3380 = vpack.c.b16 %v3328, %v3324
      %v3381 = vpack.c.b16 %v3329, %v3325
      %v3382 = vpack.c.b16 %v3330, %v3326
      %v3383 = vpack.c.b16 %v3331, %v3327
      %v3384 = vpack.c.b16 %v3336, %v3332
      %v3385 = vpack.c.b16 %v3337, %v3333
      %v3386 = vpack.c.b16 %v3338, %v3334
      %v3387 = vpack.c.b16 %v3339, %v3335
      %v3388 = vpack.c.b16 %v3344, %v3340
      %v3389 = vpack.c.b16 %v3345, %v3341
      %v3390 = vpack.c.b16 %v3346, %v3342
      %v3391 = vpack.c.b16 %v3347, %v3343
      %v3392 = vpack.c.b16 %v3352, %v3348
      %v3393 = vpack.c.b16 %v3353, %v3349
      %v3394 = vpack.c.b16 %v3354, %v3350
      %v3395 = vpack.c.b16 %v3355, %v3351
      %v3396 = vpack.c.b16 %v3360, %v3356
      %v3397 = vpack.c.b16 %v3361, %v3357
      %v3398 = vpack.c.b16 %v3362, %v3358
      %v3399 = vpack.c.b16 %v3363, %v3359
      %v3400 = vpack.c.b16 %v3368, %v3364
      %v3401 = vpack.c.b16 %v3369, %v3365
      %v3402 = vpack.c.b16 %v3370, %v3366
      %v3403 = vpack.c.b16 %v3371, %v3367
      %3436 = vmatpush.bf16.msra.mxu0 %v3400
      %3437 = vmatpush.bf16.msra.mxu0 %v3396
      %3438 = vmatpush.bf16.msra.mxu0 %v3392
      %3439 = vmatpush.bf16.msra.mxu0 %v3388
      %3440 = vmatpush.bf16.msra.mxu0 %v3384
      %3441 = vmatpush.bf16.msra.mxu0 %v3380
      %3442 = vmatpush.bf16.msra.mxu0 %v3376
      %3443 = vmatpush.bf16.msra.mxu0 %v3372
      %3444 = vmatmul.bf16.gmra.mxu0 %v2661
      %v3445 = vpop.f32.mrf.mxu0
      %v3446 = vadd.f32 0.0, %v3445
      %v3447 = vpop.f32.mrf.mxu0
      %3448 = vdwg.mxu0
      %3449 = vmatpush.bf16.msra.mxu0 %v3401
      %3450 = vmatpush.bf16.msra.mxu0 %v3397
      %3451 = vmatpush.bf16.msra.mxu0 %v3393
      %3452 = vmatpush.bf16.msra.mxu0 %v3389
      %3453 = vmatpush.bf16.msra.mxu0 %v3385
      %3454 = vmatpush.bf16.msra.mxu0 %v3381
      %3455 = vmatpush.bf16.msra.mxu0 %v3377
      %3456 = vmatpush.bf16.msra.mxu0 %v3373
      %3457 = vmatmul.bf16.gmra.mxu0 %v2661
      %v3458 = vpop.f32.mrf.mxu0
      %v3459 = vadd.f32 0.0, %v3458
      %v3460 = vpop.f32.mrf.mxu0
      %3461 = vdwg.mxu0
      %3462 = vmatpush.bf16.msra.mxu0 %v3402
      %3463 = vmatpush.bf16.msra.mxu0 %v3398
      %3464 = vmatpush.bf16.msra.mxu0 %v3394
      %3465 = vmatpush.bf16.msra.mxu0 %v3390
      %3466 = vmatpush.bf16.msra.mxu0 %v3386
      %3467 = vmatpush.bf16.msra.mxu0 %v3382
      %3468 = vmatpush.bf16.msra.mxu0 %v3378
      %3469 = vmatpush.bf16.msra.mxu0 %v3374
      %3470 = vmatmul.bf16.gmra.mxu0 %v2661
      %v3471 = vpop.f32.mrf.mxu0
      %v3472 = vadd.f32 0.0, %v3471
      %v3473 = vpop.f32.mrf.mxu0
      %3474 = vdwg.mxu0
      %3475 = vmatpush.bf16.msra.mxu0 %v3403
      %3476 = vmatpush.bf16.msra.mxu0 %v3399
      %3477 = vmatpush.bf16.msra.mxu0 %v3395
      %3478 = vmatpush.bf16.msra.mxu0 %v3391
      %3479 = vmatpush.bf16.msra.mxu0 %v3387
      %3480 = vmatpush.bf16.msra.mxu0 %v3383
      %3481 = vmatpush.bf16.msra.mxu0 %v3379
      %3482 = vmatpush.bf16.msra.mxu0 %v3375
      %3483 = vmatmul.bf16.gmra.mxu0 %v2661
      %v3484 = vpop.f32.mrf.mxu0
      %v3485 = vadd.f32 0.0, %v3484
      %v3486 = vpop.f32.mrf.mxu0
      %3487 = vdwg.mxu0
      %v3488 = vadd.f32 %v3240, %v3446
      %v3489 = vadd.f32 %v3241, %v3459
      %v3490 = vadd.f32 %v3242, %v3472
      %v3491 = vadd.f32 %v3243, %v3485
      %v3492 = vxor.u32 %v3488, 2147483648
      %v3493 = vmul.f32 %v3492, 1.442695
      %v3494 = vpow.pop %v3493
      %v3495 = vadd.f32 %v3494, 1.0
      %v3496 = vrcp.pop %v3495
      %v3497 = vmul.f32 %v3495, %v3496
      %v3498 = vsub.f32 1.0, %v3497
      %v3499 = vmul.f32 %v3496, %v3498
      %v3500 = vadd.f32 %v3496, %v3499
      %vm3501 = vweird.f32 %v3495
      %vm3502 = vweird.f32 %v3496
      %vm3503 = vmor %vm3501, %vm3502
      %v3504 = vsel %vm3503, %v3496, %v3500
      %v3505 = vand.u32 2147483647, %v3495
      %vm3506 = vcmp.eq.f32.partialorder %v3505, 8.507059e+37
      %v3507 = vand.u32 %v3495, 2147483648
      %v3508 = vor.u32 1.1754944e-38, %v3507
      %v3509 = vsel %vm3506, %v3508, %v3504
      %v3510 = vmul.f32 1.0, %v3509
      %v3511 = vxor.u32 %v3489, 2147483648
      %v3512 = vmul.f32 %v3511, 1.442695
      %v3513 = vpow.pop %v3512
      %v3514 = vadd.f32 %v3513, 1.0
      %v3515 = vrcp.pop %v3514
      %v3516 = vmul.f32 %v3514, %v3515
      %v3517 = vsub.f32 1.0, %v3516
      %v3518 = vmul.f32 %v3515, %v3517
      %v3519 = vadd.f32 %v3515, %v3518
      %vm3520 = vweird.f32 %v3514
      %vm3521 = vweird.f32 %v3515
      %vm3522 = vmor %vm3520, %vm3521
      %v3523 = vsel %vm3522, %v3515, %v3519
      %v3524 = vand.u32 2147483647, %v3514
      %vm3525 = vcmp.eq.f32.partialorder %v3524, 8.507059e+37
      %v3526 = vand.u32 %v3514, 2147483648
      %v3527 = vor.u32 1.1754944e-38, %v3526
      %v3528 = vsel %vm3525, %v3527, %v3523
      %v3529 = vmul.f32 1.0, %v3528
      %v3530 = vtanh.pop %v3490
      %v3531 = vxor.u32 %v3491, 2147483648
      %v3532 = vmul.f32 %v3531, 1.442695
      %v3533 = vpow.pop %v3532
      %v3534 = vadd.f32 %v3533, 1.0
      %v3535 = vrcp.pop %v3534
      %v3536 = vmul.f32 %v3534, %v3535
      %v3537 = vsub.f32 1.0, %v3536
      %v3538 = vmul.f32 %v3535, %v3537
      %v3539 = vadd.f32 %v3535, %v3538
      %vm3540 = vweird.f32 %v3534
      %vm3541 = vweird.f32 %v3535
      %vm3542 = vmor %vm3540, %vm3541
      %v3543 = vsel %vm3542, %v3535, %v3539
      %v3544 = vand.u32 2147483647, %v3534
      %vm3545 = vcmp.eq.f32.partialorder %v3544, 8.507059e+37
      %v3546 = vand.u32 %v3534, 2147483648
      %v3547 = vor.u32 1.1754944e-38, %v3546
      %v3548 = vsel %vm3545, %v3547, %v3543
      %v3549 = vmul.f32 1.0, %v3548
      %v3550 = vmul.f32 %v3529, %v2660
      %v3551 = vmul.f32 %v3510, %v3530
      %v3552 = vadd.f32 %v3550, %v3551
      %v3553 = vtanh.pop %v3552
      %v3554 = vmul.f32 %v3549, %v3553
      %v3555 = vsel %vm3233, %v3554, %v2659
      %v3556 = vsel %vm3233, %v3552, %v2660
      %v3557 = vpack.c.bf16 %v3555, %v3555
      %v3558 = vpack.c.bf16 %v3218, %v3218
      %v3559 = vld [vmem:[#allocation9] sm:$0xff]
      %v3560 = vld [vmem:[#allocation9 + $0x8] sm:$0xff]
      %v3561 = vld [vmem:[#allocation9 + $0x10] sm:$0xff]
      %v3562 = vld [vmem:[#allocation9 + $0x18] sm:$0xff]
      %v3563 = vld [vmem:[#allocation9 + $0x20] sm:$0xff]
      %v3564 = vld [vmem:[#allocation9 + $0x28] sm:$0xff]
      %v3565 = vld [vmem:[#allocation9 + $0x30] sm:$0xff]
      %v3566 = vld [vmem:[#allocation9 + $0x38] sm:$0xff]
      %v3567 = vld [vmem:[#allocation9 + $0x40] sm:$0xff]
      %v3568 = vld [vmem:[#allocation9 + $0x48] sm:$0xff]
      %v3569 = vld [vmem:[#allocation9 + $0x50] sm:$0xff]
      %v3570 = vld [vmem:[#allocation9 + $0x58] sm:$0xff]
      %v3571 = vld [vmem:[#allocation9 + $0x60] sm:$0xff]
      %v3572 = vld [vmem:[#allocation9 + $0x68] sm:$0xff]
      %v3573 = vld [vmem:[#allocation9 + $0x70] sm:$0xff]
      %v3574 = vld [vmem:[#allocation9 + $0x78] sm:$0xff]
      %v3575 = vld [vmem:[#allocation9 + $0x80] sm:$0xff]
      %v3576 = vld [vmem:[#allocation9 + $0x88] sm:$0xff]
      %v3577 = vld [vmem:[#allocation9 + $0x90] sm:$0xff]
      %v3578 = vld [vmem:[#allocation9 + $0x98] sm:$0xff]
      %v3579 = vld [vmem:[#allocation9 + $0xa0] sm:$0xff]
      %v3580 = vld [vmem:[#allocation9 + $0xa8] sm:$0xff]
      %v3581 = vld [vmem:[#allocation9 + $0xb0] sm:$0xff]
      %v3582 = vld [vmem:[#allocation9 + $0xb8] sm:$0xff]
      %v3583 = vld [vmem:[#allocation9 + $0xc0] sm:$0xff]
      %v3584 = vld [vmem:[#allocation9 + $0xc8] sm:$0xff]
      %v3585 = vld [vmem:[#allocation9 + $0xd0] sm:$0xff]
      %v3586 = vld [vmem:[#allocation9 + $0xd8] sm:$0xff]
      %v3587 = vld [vmem:[#allocation9 + $0xe0] sm:$0xff]
      %v3588 = vld [vmem:[#allocation9 + $0xe8] sm:$0xff]
      %v3589 = vld [vmem:[#allocation9 + $0xf0] sm:$0xff]
      %v3590 = vld [vmem:[#allocation9 + $0xf8] sm:$0xff]
      %v3591 = vld [vmem:[%s902] sm:$0xff]
      %v3592 = vld [vmem:[%s902 + $0x8] sm:$0xff]
      %v3593 = vld [vmem:[%s902 + $0x10] sm:$0xff]
      %v3594 = vld [vmem:[%s902 + $0x18] sm:$0xff]
      %v3595 = vld [vmem:[%s902 + $0x20] sm:$0xff]
      %v3596 = vld [vmem:[%s902 + $0x28] sm:$0xff]
      %v3597 = vld [vmem:[%s902 + $0x30] sm:$0xff]
      %v3598 = vld [vmem:[%s902 + $0x38] sm:$0xff]
      %v3599 = vld [vmem:[%s902 + $0x40] sm:$0xff]
      %v3600 = vld [vmem:[%s902 + $0x48] sm:$0xff]
      %v3601 = vld [vmem:[%s902 + $0x50] sm:$0xff]
      %v3602 = vld [vmem:[%s902 + $0x58] sm:$0xff]
      %v3603 = vld [vmem:[%s902 + $0x60] sm:$0xff]
      %v3604 = vld [vmem:[%s902 + $0x68] sm:$0xff]
      %v3605 = vld [vmem:[%s902 + $0x70] sm:$0xff]
      %v3606 = vld [vmem:[%s902 + $0x78] sm:$0xff]
      %v3607 = vld [vmem:[%s902 + $0x80] sm:$0xff]
      %v3608 = vld [vmem:[%s902 + $0x88] sm:$0xff]
      %v3609 = vld [vmem:[%s902 + $0x90] sm:$0xff]
      %v3610 = vld [vmem:[%s902 + $0x98] sm:$0xff]
      %v3611 = vld [vmem:[%s902 + $0xa0] sm:$0xff]
      %v3612 = vld [vmem:[%s902 + $0xa8] sm:$0xff]
      %v3613 = vld [vmem:[%s902 + $0xb0] sm:$0xff]
      %v3614 = vld [vmem:[%s902 + $0xb8] sm:$0xff]
      %v3615 = vld [vmem:[%s902 + $0xc0] sm:$0xff]
      %v3616 = vld [vmem:[%s902 + $0xc8] sm:$0xff]
      %v3617 = vld [vmem:[%s902 + $0xd0] sm:$0xff]
      %v3618 = vld [vmem:[%s902 + $0xd8] sm:$0xff]
      %v3619 = vld [vmem:[%s902 + $0xe0] sm:$0xff]
      %v3620 = vld [vmem:[%s902 + $0xe8] sm:$0xff]
      %v3621 = vld [vmem:[%s902 + $0xf0] sm:$0xff]
      %v3622 = vld [vmem:[%s902 + $0xf8] sm:$0xff]
      %v3655 = vunpack.c.l.b16 %v3591
      %v3656 = vunpack.c.h.b16 %v3591
      %v3657 = vunpack.c.l.b16 %v3592
      %v3658 = vunpack.c.h.b16 %v3592
      %v3659 = vunpack.c.l.b16 %v3593
      %v3660 = vunpack.c.h.b16 %v3593
      %v3661 = vunpack.c.l.b16 %v3594
      %v3662 = vunpack.c.h.b16 %v3594
      %v3663 = vunpack.c.l.b16 %v3595
      %v3664 = vunpack.c.h.b16 %v3595
      %v3665 = vunpack.c.l.b16 %v3596
      %v3666 = vunpack.c.h.b16 %v3596
      %v3667 = vunpack.c.l.b16 %v3597
      %v3668 = vunpack.c.h.b16 %v3597
      %v3669 = vunpack.c.l.b16 %v3598
      %v3670 = vunpack.c.h.b16 %v3598
      %v3671 = vunpack.c.l.b16 %v3599
      %v3672 = vunpack.c.h.b16 %v3599
      %v3673 = vunpack.c.l.b16 %v3600
      %v3674 = vunpack.c.h.b16 %v3600
      %v3675 = vunpack.c.l.b16 %v3601
      %v3676 = vunpack.c.h.b16 %v3601
      %v3677 = vunpack.c.l.b16 %v3602
      %v3678 = vunpack.c.h.b16 %v3602
      %v3679 = vunpack.c.l.b16 %v3603
      %v3680 = vunpack.c.h.b16 %v3603
      %v3681 = vunpack.c.l.b16 %v3604
      %v3682 = vunpack.c.h.b16 %v3604
      %v3683 = vunpack.c.l.b16 %v3605
      %v3684 = vunpack.c.h.b16 %v3605
      %v3685 = vunpack.c.l.b16 %v3606
      %v3686 = vunpack.c.h.b16 %v3606
      %v3687 = vunpack.c.l.b16 %v3607
      %v3688 = vunpack.c.h.b16 %v3607
      %v3689 = vunpack.c.l.b16 %v3608
      %v3690 = vunpack.c.h.b16 %v3608
      %v3691 = vunpack.c.l.b16 %v3609
      %v3692 = vunpack.c.h.b16 %v3609
      %v3693 = vunpack.c.l.b16 %v3610
      %v3694 = vunpack.c.h.b16 %v3610
      %v3695 = vunpack.c.l.b16 %v3611
      %v3696 = vunpack.c.h.b16 %v3611
      %v3697 = vunpack.c.l.b16 %v3612
      %v3698 = vunpack.c.h.b16 %v3612
      %v3699 = vunpack.c.l.b16 %v3613
      %v3700 = vunpack.c.h.b16 %v3613
      %v3701 = vunpack.c.l.b16 %v3614
      %v3702 = vunpack.c.h.b16 %v3614
      %v3703 = vunpack.c.l.b16 %v3615
      %v3704 = vunpack.c.h.b16 %v3615
      %v3705 = vunpack.c.l.b16 %v3616
      %v3706 = vunpack.c.h.b16 %v3616
      %v3707 = vunpack.c.l.b16 %v3617
      %v3708 = vunpack.c.h.b16 %v3617
      %v3709 = vunpack.c.l.b16 %v3618
      %v3710 = vunpack.c.h.b16 %v3618
      %v3711 = vunpack.c.l.b16 %v3619
      %v3712 = vunpack.c.h.b16 %v3619
      %v3713 = vunpack.c.l.b16 %v3620
      %v3714 = vunpack.c.h.b16 %v3620
      %v3715 = vunpack.c.l.b16 %v3621
      %v3716 = vunpack.c.h.b16 %v3621
      %v3717 = vunpack.c.l.b16 %v3622
      %v3718 = vunpack.c.h.b16 %v3622
      %v3719 = vpack.c.b16 %v3659, %v3655
      %v3720 = vpack.c.b16 %v3660, %v3656
      %v3721 = vpack.c.b16 %v3661, %v3657
      %v3722 = vpack.c.b16 %v3662, %v3658
      %v3723 = vpack.c.b16 %v3667, %v3663
      %v3724 = vpack.c.b16 %v3668, %v3664
      %v3725 = vpack.c.b16 %v3669, %v3665
      %v3726 = vpack.c.b16 %v3670, %v3666
      %v3727 = vpack.c.b16 %v3675, %v3671
      %v3728 = vpack.c.b16 %v3676, %v3672
      %v3729 = vpack.c.b16 %v3677, %v3673
      %v3730 = vpack.c.b16 %v3678, %v3674
      %v3731 = vpack.c.b16 %v3683, %v3679
      %v3732 = vpack.c.b16 %v3684, %v3680
      %v3733 = vpack.c.b16 %v3685, %v3681
      %v3734 = vpack.c.b16 %v3686, %v3682
      %v3735 = vpack.c.b16 %v3691, %v3687
      %v3736 = vpack.c.b16 %v3692, %v3688
      %v3737 = vpack.c.b16 %v3693, %v3689
      %v3738 = vpack.c.b16 %v3694, %v3690
      %v3739 = vpack.c.b16 %v3699, %v3695
      %v3740 = vpack.c.b16 %v3700, %v3696
      %v3741 = vpack.c.b16 %v3701, %v3697
      %v3742 = vpack.c.b16 %v3702, %v3698
      %v3743 = vpack.c.b16 %v3707, %v3703
      %v3744 = vpack.c.b16 %v3708, %v3704
      %v3745 = vpack.c.b16 %v3709, %v3705
      %v3746 = vpack.c.b16 %v3710, %v3706
      %v3747 = vpack.c.b16 %v3715, %v3711
      %v3748 = vpack.c.b16 %v3716, %v3712
      %v3749 = vpack.c.b16 %v3717, %v3713
      %v3750 = vpack.c.b16 %v3718, %v3714
      %3783 = vmatpush.bf16.msra.mxu0 %v3747
      %3784 = vmatpush.bf16.msra.mxu0 %v3743
      %3785 = vmatpush.bf16.msra.mxu0 %v3739
      %3786 = vmatpush.bf16.msra.mxu0 %v3735
      %3787 = vmatpush.bf16.msra.mxu0 %v3731
      %3788 = vmatpush.bf16.msra.mxu0 %v3727
      %3789 = vmatpush.bf16.msra.mxu0 %v3723
      %3790 = vmatpush.bf16.msra.mxu0 %v3719
      %3791 = vmatmul.bf16.gmra.mxu0 %v3558
      %v3792 = vpop.f32.mrf.mxu0
      %v3793 = vadd.f32 0.0, %v3792
      %v3794 = vpop.f32.mrf.mxu0
      %3795 = vdwg.mxu0
      %3796 = vmatpush.bf16.msra.mxu0 %v3748
      %3797 = vmatpush.bf16.msra.mxu0 %v3744
      %3798 = vmatpush.bf16.msra.mxu0 %v3740
      %3799 = vmatpush.bf16.msra.mxu0 %v3736
      %3800 = vmatpush.bf16.msra.mxu0 %v3732
      %3801 = vmatpush.bf16.msra.mxu0 %v3728
      %3802 = vmatpush.bf16.msra.mxu0 %v3724
      %3803 = vmatpush.bf16.msra.mxu0 %v3720
      %3804 = vmatmul.bf16.gmra.mxu0 %v3558
      %v3805 = vpop.f32.mrf.mxu0
      %v3806 = vadd.f32 0.0, %v3805
      %v3807 = vpop.f32.mrf.mxu0
      %3808 = vdwg.mxu0
      %3809 = vmatpush.bf16.msra.mxu0 %v3749
      %3810 = vmatpush.bf16.msra.mxu0 %v3745
      %3811 = vmatpush.bf16.msra.mxu0 %v3741
      %3812 = vmatpush.bf16.msra.mxu0 %v3737
      %3813 = vmatpush.bf16.msra.mxu0 %v3733
      %3814 = vmatpush.bf16.msra.mxu0 %v3729
      %3815 = vmatpush.bf16.msra.mxu0 %v3725
      %3816 = vmatpush.bf16.msra.mxu0 %v3721
      %3817 = vmatmul.bf16.gmra.mxu0 %v3558
      %v3818 = vpop.f32.mrf.mxu0
      %v3819 = vadd.f32 0.0, %v3818
      %v3820 = vpop.f32.mrf.mxu0
      %3821 = vdwg.mxu0
      %3822 = vmatpush.bf16.msra.mxu0 %v3750
      %3823 = vmatpush.bf16.msra.mxu0 %v3746
      %3824 = vmatpush.bf16.msra.mxu0 %v3742
      %3825 = vmatpush.bf16.msra.mxu0 %v3738
      %3826 = vmatpush.bf16.msra.mxu0 %v3734
      %3827 = vmatpush.bf16.msra.mxu0 %v3730
      %3828 = vmatpush.bf16.msra.mxu0 %v3726
      %3829 = vmatpush.bf16.msra.mxu0 %v3722
      %3830 = vmatmul.bf16.gmra.mxu0 %v3558
      %v3831 = vpop.f32.mrf.mxu0
      %v3832 = vadd.f32 0.0, %v3831
      %v3833 = vpop.f32.mrf.mxu0
      %3834 = vdwg.mxu0
      %v3867 = vunpack.c.l.b16 %v3559
      %v3868 = vunpack.c.h.b16 %v3559
      %v3869 = vunpack.c.l.b16 %v3560
      %v3870 = vunpack.c.h.b16 %v3560
      %v3871 = vunpack.c.l.b16 %v3561
      %v3872 = vunpack.c.h.b16 %v3561
      %v3873 = vunpack.c.l.b16 %v3562
      %v3874 = vunpack.c.h.b16 %v3562
      %v3875 = vunpack.c.l.b16 %v3563
      %v3876 = vunpack.c.h.b16 %v3563
      %v3877 = vunpack.c.l.b16 %v3564
      %v3878 = vunpack.c.h.b16 %v3564
      %v3879 = vunpack.c.l.b16 %v3565
      %v3880 = vunpack.c.h.b16 %v3565
      %v3881 = vunpack.c.l.b16 %v3566
      %v3882 = vunpack.c.h.b16 %v3566
      %v3883 = vunpack.c.l.b16 %v3567
      %v3884 = vunpack.c.h.b16 %v3567
      %v3885 = vunpack.c.l.b16 %v3568
      %v3886 = vunpack.c.h.b16 %v3568
      %v3887 = vunpack.c.l.b16 %v3569
      %v3888 = vunpack.c.h.b16 %v3569
      %v3889 = vunpack.c.l.b16 %v3570
      %v3890 = vunpack.c.h.b16 %v3570
      %v3891 = vunpack.c.l.b16 %v3571
      %v3892 = vunpack.c.h.b16 %v3571
      %v3893 = vunpack.c.l.b16 %v3572
      %v3894 = vunpack.c.h.b16 %v3572
      %v3895 = vunpack.c.l.b16 %v3573
      %v3896 = vunpack.c.h.b16 %v3573
      %v3897 = vunpack.c.l.b16 %v3574
      %v3898 = vunpack.c.h.b16 %v3574
      %v3899 = vunpack.c.l.b16 %v3575
      %v3900 = vunpack.c.h.b16 %v3575
      %v3901 = vunpack.c.l.b16 %v3576
      %v3902 = vunpack.c.h.b16 %v3576
      %v3903 = vunpack.c.l.b16 %v3577
      %v3904 = vunpack.c.h.b16 %v3577
      %v3905 = vunpack.c.l.b16 %v3578
      %v3906 = vunpack.c.h.b16 %v3578
      %v3907 = vunpack.c.l.b16 %v3579
      %v3908 = vunpack.c.h.b16 %v3579
      %v3909 = vunpack.c.l.b16 %v3580
      %v3910 = vunpack.c.h.b16 %v3580
      %v3911 = vunpack.c.l.b16 %v3581
      %v3912 = vunpack.c.h.b16 %v3581
      %v3913 = vunpack.c.l.b16 %v3582
      %v3914 = vunpack.c.h.b16 %v3582
      %v3915 = vunpack.c.l.b16 %v3583
      %v3916 = vunpack.c.h.b16 %v3583
      %v3917 = vunpack.c.l.b16 %v3584
      %v3918 = vunpack.c.h.b16 %v3584
      %v3919 = vunpack.c.l.b16 %v3585
      %v3920 = vunpack.c.h.b16 %v3585
      %v3921 = vunpack.c.l.b16 %v3586
      %v3922 = vunpack.c.h.b16 %v3586
      %v3923 = vunpack.c.l.b16 %v3587
      %v3924 = vunpack.c.h.b16 %v3587
      %v3925 = vunpack.c.l.b16 %v3588
      %v3926 = vunpack.c.h.b16 %v3588
      %v3927 = vunpack.c.l.b16 %v3589
      %v3928 = vunpack.c.h.b16 %v3589
      %v3929 = vunpack.c.l.b16 %v3590
      %v3930 = vunpack.c.h.b16 %v3590
      %v3931 = vpack.c.b16 %v3871, %v3867
      %v3932 = vpack.c.b16 %v3872, %v3868
      %v3933 = vpack.c.b16 %v3873, %v3869
      %v3934 = vpack.c.b16 %v3874, %v3870
      %v3935 = vpack.c.b16 %v3879, %v3875
      %v3936 = vpack.c.b16 %v3880, %v3876
      %v3937 = vpack.c.b16 %v3881, %v3877
      %v3938 = vpack.c.b16 %v3882, %v3878
      %v3939 = vpack.c.b16 %v3887, %v3883
      %v3940 = vpack.c.b16 %v3888, %v3884
      %v3941 = vpack.c.b16 %v3889, %v3885
      %v3942 = vpack.c.b16 %v3890, %v3886
      %v3943 = vpack.c.b16 %v3895, %v3891
      %v3944 = vpack.c.b16 %v3896, %v3892
      %v3945 = vpack.c.b16 %v3897, %v3893
      %v3946 = vpack.c.b16 %v3898, %v3894
      %v3947 = vpack.c.b16 %v3903, %v3899
      %v3948 = vpack.c.b16 %v3904, %v3900
      %v3949 = vpack.c.b16 %v3905, %v3901
      %v3950 = vpack.c.b16 %v3906, %v3902
      %v3951 = vpack.c.b16 %v3911, %v3907
      %v3952 = vpack.c.b16 %v3912, %v3908
      %v3953 = vpack.c.b16 %v3913, %v3909
      %v3954 = vpack.c.b16 %v3914, %v3910
      %v3955 = vpack.c.b16 %v3919, %v3915
      %v3956 = vpack.c.b16 %v3920, %v3916
      %v3957 = vpack.c.b16 %v3921, %v3917
      %v3958 = vpack.c.b16 %v3922, %v3918
      %v3959 = vpack.c.b16 %v3927, %v3923
      %v3960 = vpack.c.b16 %v3928, %v3924
      %v3961 = vpack.c.b16 %v3929, %v3925
      %v3962 = vpack.c.b16 %v3930, %v3926
      %3995 = vmatpush.bf16.msra.mxu0 %v3959
      %3996 = vmatpush.bf16.msra.mxu0 %v3955
      %3997 = vmatpush.bf16.msra.mxu0 %v3951
      %3998 = vmatpush.bf16.msra.mxu0 %v3947
      %3999 = vmatpush.bf16.msra.mxu0 %v3943
      %4000 = vmatpush.bf16.msra.mxu0 %v3939
      %4001 = vmatpush.bf16.msra.mxu0 %v3935
      %4002 = vmatpush.bf16.msra.mxu0 %v3931
      %4003 = vmatmul.bf16.gmra.mxu0 %v3557
      %v4004 = vpop.f32.mrf.mxu0
      %v4005 = vadd.f32 %v3793, %v4004
      %v4006 = vpop.f32.mrf.mxu0
      %4007 = vdwg.mxu0
      %4008 = vmatpush.bf16.msra.mxu0 %v3960
      %4009 = vmatpush.bf16.msra.mxu0 %v3956
      %4010 = vmatpush.bf16.msra.mxu0 %v3952
      %4011 = vmatpush.bf16.msra.mxu0 %v3948
      %4012 = vmatpush.bf16.msra.mxu0 %v3944
      %4013 = vmatpush.bf16.msra.mxu0 %v3940
      %4014 = vmatpush.bf16.msra.mxu0 %v3936
      %4015 = vmatpush.bf16.msra.mxu0 %v3932
      %4016 = vmatmul.bf16.gmra.mxu0 %v3557
      %v4017 = vpop.f32.mrf.mxu0
      %v4018 = vadd.f32 %v3806, %v4017
      %v4019 = vpop.f32.mrf.mxu0
      %4020 = vdwg.mxu0
      %4021 = vmatpush.bf16.msra.mxu0 %v3961
      %4022 = vmatpush.bf16.msra.mxu0 %v3957
      %4023 = vmatpush.bf16.msra.mxu0 %v3953
      %4024 = vmatpush.bf16.msra.mxu0 %v3949
      %4025 = vmatpush.bf16.msra.mxu0 %v3945
      %4026 = vmatpush.bf16.msra.mxu0 %v3941
      %4027 = vmatpush.bf16.msra.mxu0 %v3937
      %4028 = vmatpush.bf16.msra.mxu0 %v3933
      %4029 = vmatmul.bf16.gmra.mxu0 %v3557
      %v4030 = vpop.f32.mrf.mxu0
      %v4031 = vadd.f32 %v3819, %v4030
      %v4032 = vpop.f32.mrf.mxu0
      %4033 = vdwg.mxu0
      %4034 = vmatpush.bf16.msra.mxu0 %v3962
      %4035 = vmatpush.bf16.msra.mxu0 %v3958
      %4036 = vmatpush.bf16.msra.mxu0 %v3954
      %4037 = vmatpush.bf16.msra.mxu0 %v3950
      %4038 = vmatpush.bf16.msra.mxu0 %v3946
      %4039 = vmatpush.bf16.msra.mxu0 %v3942
      %4040 = vmatpush.bf16.msra.mxu0 %v3938
      %4041 = vmatpush.bf16.msra.mxu0 %v3934
      %4042 = vmatmul.bf16.gmra.mxu0 %v3557
      %v4043 = vpop.f32.mrf.mxu0
      %v4044 = vadd.f32 %v3832, %v4043
      %v4045 = vpop.f32.mrf.mxu0
      %4046 = vdwg.mxu0
      %v4047 = vadd.f32 %v4005, %v510
      %v4048 = vadd.f32 %v4018, %v511
      %v4049 = vadd.f32 %v4031, %v512
      %v4050 = vadd.f32 %v4044, %v513
      %v4051 = vxor.u32 %v4047, 2147483648
      %v4052 = vmul.f32 %v4051, 1.442695
      %v4053 = vpow.pop %v4052
      %v4054 = vadd.f32 %v4053, 1.0
      %v4055 = vrcp.pop %v4054
      %v4056 = vmul.f32 %v4054, %v4055
      %v4057 = vsub.f32 1.0, %v4056
      %v4058 = vmul.f32 %v4055, %v4057
      %v4059 = vadd.f32 %v4055, %v4058
      %vm4060 = vweird.f32 %v4054
      %vm4061 = vweird.f32 %v4055
      %vm4062 = vmor %vm4060, %vm4061
      %v4063 = vsel %vm4062, %v4055, %v4059
      %v4064 = vand.u32 2147483647, %v4054
      %vm4065 = vcmp.eq.f32.partialorder %v4064, 8.507059e+37
      %v4066 = vand.u32 %v4054, 2147483648
      %v4067 = vor.u32 1.1754944e-38, %v4066
      %v4068 = vsel %vm4065, %v4067, %v4063
      %v4069 = vmul.f32 1.0, %v4068
      %v4070 = vxor.u32 %v4048, 2147483648
      %v4071 = vmul.f32 %v4070, 1.442695
      %v4072 = vpow.pop %v4071
      %v4073 = vadd.f32 %v4072, 1.0
      %v4074 = vrcp.pop %v4073
      %v4075 = vmul.f32 %v4073, %v4074
      %v4076 = vsub.f32 1.0, %v4075
      %v4077 = vmul.f32 %v4074, %v4076
      %v4078 = vadd.f32 %v4074, %v4077
      %vm4079 = vweird.f32 %v4073
      %vm4080 = vweird.f32 %v4074
      %vm4081 = vmor %vm4079, %vm4080
      %v4082 = vsel %vm4081, %v4074, %v4078
      %v4083 = vand.u32 2147483647, %v4073
      %vm4084 = vcmp.eq.f32.partialorder %v4083, 8.507059e+37
      %v4085 = vand.u32 %v4073, 2147483648
      %v4086 = vor.u32 1.1754944e-38, %v4085
      %v4087 = vsel %vm4084, %v4086, %v4082
      %v4088 = vmul.f32 1.0, %v4087
      %v4089 = vtanh.pop %v4049
      %v4090 = vxor.u32 %v4050, 2147483648
      %v4091 = vmul.f32 %v4090, 1.442695
      %v4092 = vpow.pop %v4091
      %v4093 = vadd.f32 %v4092, 1.0
      %v4094 = vrcp.pop %v4093
      %v4095 = vmul.f32 %v4093, %v4094
      %v4096 = vsub.f32 1.0, %v4095
      %v4097 = vmul.f32 %v4094, %v4096
      %v4098 = vadd.f32 %v4094, %v4097
      %vm4099 = vweird.f32 %v4093
      %vm4100 = vweird.f32 %v4094
      %vm4101 = vmor %vm4099, %vm4100
      %v4102 = vsel %vm4101, %v4094, %v4098
      %v4103 = vand.u32 2147483647, %v4093
      %vm4104 = vcmp.eq.f32.partialorder %v4103, 8.507059e+37
      %v4105 = vand.u32 %v4093, 2147483648
      %v4106 = vor.u32 1.1754944e-38, %v4105
      %v4107 = vsel %vm4104, %v4106, %v4102
      %v4108 = vmul.f32 1.0, %v4107
      %v4109 = vmul.f32 %v4088, %v3219
      %v4110 = vmul.f32 %v4069, %v4089
      %v4111 = vadd.f32 %v4109, %v4110
      %v4112 = vtanh.pop %v4111
      %v4113 = vmul.f32 %v4108, %v4112
      %v4114 = vsel %vm3233, %v4113, %v3218
      %v4115 = vsel %vm3233, %v4111, %v3219
      %v4116 = vsel %vm3233, %v4113, 0.0
      %v4117 = vpack.c.bf16 %v4116, %v4116
      %s4118 = smul.addr %s3225, 4
      %s4119 = scalar_lea.vmem [#allocation12], %s4118
      %4120 = vst [vmem:[%s4119] sm:$0xf] %v4117
    $region62: #{tpu_custom_call.1} parent=1 // loop_footer
      %s529 = sadd.s32 1, %s525
    $region63: #{tpu_custom_call.1} parent=1 // loop_footer_branch
      %524 = sbr.rel target = $region59
    $region64: #{tpu_custom_call.1} parent=1 // loop_exit
      _
    %4121 = vst [vmem:[#allocation13] sm:$0xff] %v530
    %4122 = vst [vmem:[#allocation15] sm:$0xff] %v532
    %4123 = vst [vmem:[%s519] sm:$0xff] %v531
    %4124 = vst [vmem:[%s522] sm:$0xff] %v533
    // Predicated region
    $region65: #{tpu_custom_call.1} parent=1 // pred_check
      _
    $region66: #{tpu_custom_call.1} parent=1 // pred_check_branch
      %4126 = sbr.rel (0) target = $region68
    $region67: #{tpu_custom_call.1} parent=1 // pred_region
      %4128 = vsyncadd [#allocation5], 0
      %s4129 = sshll.u32 [#allocation12], 4
      %s4130 = int_to_ptr.vmem [resolvable:$true] %s4129
      %s4131 = sshll.u32 %s8, 4
      %s4132 = int_to_ptr.hbm [resolvable:$true] %s4131
      %4137 = dma.vmem_to_hbm [thread:$0]  %s4130, 512, %s4132, [#allocation5], 64, 64, 4
    $region68: #{tpu_custom_call.1} parent=1 // pred_fallthru
      _
    // Predicated region
    $region69: #{tpu_custom_call.1} parent=1 // pred_check
      _
    $region70: #{tpu_custom_call.1} parent=1 // pred_check_branch
      %4139 = sbr.rel (0) target = $region72
    $region71: #{tpu_custom_call.1} parent=1 // pred_region
      %4141 = vsyncadd [#allocation14], 0
      %s4142 = sshll.u32 [#allocation13], 4
      %s4143 = int_to_ptr.vmem [resolvable:$true] %s4142
      %s4144 = sshll.u32 %s9, 4
      %s4145 = int_to_ptr.hbm [resolvable:$true] %s4144
      %4150 = dma.vmem_to_hbm [thread:$0]  %s4143, 256, %s4145, [#allocation14], 128, 128, 8
    $region72: #{tpu_custom_call.1} parent=1 // pred_fallthru
      _
    // Predicated region
    $region73: #{tpu_custom_call.1} parent=1 // pred_check
      _
    $region74: #{tpu_custom_call.1} parent=1 // pred_check_branch
      %4152 = sbr.rel (0) target = $region76
    $region75: #{tpu_custom_call.1} parent=1 // pred_region
      %4154 = vsyncadd [#allocation14], 0
      %s4155 = sshll.u32 [#allocation15], 4
      %s4156 = int_to_ptr.vmem [resolvable:$true] %s4155
      %s4157 = sshll.u32 %s10, 4
      %s4158 = int_to_ptr.hbm [resolvable:$true] %s4157
      %4163 = dma.vmem_to_hbm [thread:$0]  %s4156, 256, %s4158, [#allocation14], 128, 128, 8
    $region76: #{tpu_custom_call.1} parent=1 // pred_fallthru
      _
    // Predicated region
    $region77: #{tpu_custom_call.1} parent=1 // pred_check
      _
    $region78: #{tpu_custom_call.1} parent=1 // pred_check_branch
      %4165 = sbr.rel (0) target = $region80
    $region79: #{tpu_custom_call.1} parent=1 // pred_region
      %4167 = dma.done [#allocation5], 512
    $region80: #{tpu_custom_call.1} parent=1 // pred_fallthru
      _
    // Predicated region
    $region81: #{tpu_custom_call.1} parent=1 // pred_check
      _
    $region82: #{tpu_custom_call.1} parent=1 // pred_check_branch
      %4169 = sbr.rel (0) target = $region84
    $region83: #{tpu_custom_call.1} parent=1 // pred_region
      %4171 = dma.done [#allocation14], 256
    $region84: #{tpu_custom_call.1} parent=1 // pred_fallthru
      _
    // Predicated region
    $region85: #{tpu_custom_call.1} parent=1 // pred_check
      _
    $region86: #{tpu_custom_call.1} parent=1 // pred_check_branch
      %4173 = sbr.rel (0) target = $region88
    $region87: #{tpu_custom_call.1} parent=1 // pred_region
      %4175 = dma.done [#allocation14], 256
    $region88: #{tpu_custom_call.1} parent=1 // pred_fallthru
      _
    %4176 = vsyncpa [#allocation4], 1
    %4177 = vsyncpa [#allocation7], 1
    %4178 = vsyncpa [#allocation10], 1
    %4179 = vsyncpa [#allocation5], 1
    %4180 = vsyncpa [#allocation14], 1

</llo_original>
